<compile_context>
chip_gen: v6e
topology: v6e:2x2x1
jax: 0.10.0
libtpu: 0.0.40
codegen_flags: <defaults>
</compile_context>

<pallas_src>
import functools
import math

import jax
import jax.numpy as jnp
from jax.experimental import pallas as pl
from jax.experimental.pallas import tpu as pltpu

EPS = 1e-5


# ---------------------------------------------------------------------------
# Fused kernel: ConvBlock x2 -> MHA + residual + mean-pool -> FC head.
# ---------------------------------------------------------------------------
def _fused_forward_kernel(
    alphas_ref,                                   # SMEM (2 + n_fc - 1,)
    win1_ref,                                     # (B, L, k1*C_in)
    w1_ref, s1_ref, b1_ref,                       # (k1*C_in, C1), (1, C1), (1, C1)
    w2_ref, s2_ref, b2_ref,                       # (k2*C1, C2), (1, C2), (1, C2)
    wq_ref, wk_ref, wv_ref, wo_ref,               # (E, E) each, x @ W.T layout
    bq_ref, bk_ref, bv_ref, bo_ref,               # (1, E) each
    mh_ref, mht_ref,                              # (E, H) scaled, (H, E)
    fcw_ref, fcb_ref,                             # (n_fc, W, W), (n_fc, 1, W)
    o_ref,                                        # (B, out_dim)
    *, k2, pad2, n_fc, out_dim):
    bsz, length, _ = win1_ref.shape
    c1 = s1_ref.shape[1]
    inv_len = 1.0 / float(length)

    a1 = alphas_ref[0]
    a2 = alphas_ref[1]
    w1f = w1_ref[...]
    w2f = w2_ref[...]
    wq, wk, wv, wo = wq_ref[...], wk_ref[...], wv_ref[...], wo_ref[...]
    mh, mht = mh_ref[...], mht_ref[...]

    # --- ConvBlock x2 + Q/K/V projections, one torch-batch row at a time ---
    xs, qs, ks, vs = [], [], [], []
    for b in range(bsz):
        # Conv1: single flattened-tap matmul on the (L, k1*C_in) window slab.
        y1 = jnp.dot(win1_ref[b], w1f, preferred_element_type=jnp.float32)
        y1 = y1 * s1_ref[...] + b1_ref[...]                       # folded BN
        y1 = jnp.where(y1 >= 0.0, y1, y1 * a1)                    # PReLU, (L, C1)

        # Conv2: zero-pad along L in VMEM, build (L, k2*C1) slab, one matmul.
        zpad = jnp.zeros((pad2, c1), jnp.float32)
        y1p = jnp.concatenate([zpad, y1, zpad], axis=0)           # (L+2p, C1)
        slab2 = jnp.concatenate(
            [y1p[j:j + length, :] for j in range(k2)], axis=1)    # (L, k2*C1)
        y2 = jnp.dot(slab2, w2f, preferred_element_type=jnp.float32)
        y2 = y2 * s2_ref[...] + b2_ref[...]
        x_b = jnp.where(y2 >= 0.0, y2, y2 * a2)                   # (L, E)

        xs.append(x_b)
        qs.append(jnp.dot(x_b, wq, preferred_element_type=jnp.float32) + bq_ref[...])
        ks.append(jnp.dot(x_b, wk, preferred_element_type=jnp.float32) + bk_ref[...])
        vs.append(jnp.dot(x_b, wv, preferred_element_type=jnp.float32) + bv_ref[...])

    # --- Multi-head self-attention over the torch-batch axis (seq = B) -----
    # scores[i][j][l, h] = <q_i[l], k_j[l]>_head_h / sqrt(d): elementwise
    # product + head-indicator matmul (1/sqrt(d) is folded into mh).
    scores = [[jnp.dot(qs[i] * ks[j], mh, preferred_element_type=jnp.float32)
               for j in range(bsz)] for i in range(bsz)]

    pooled_rows = []
    for i in range(bsz):
        m = scores[i][0]
        for j in range(1, bsz):
            m = jnp.maximum(m, scores[i][j])
        exps = [jnp.exp(scores[i][j] - m) for j in range(bsz)]
        denom = exps[0]
        for j in range(1, bsz):
            denom = denom + exps[j]
        inv_denom = 1.0 / denom                                   # (L, H)

        attn_i = jnp.zeros_like(xs[i])                            # (L, E)
        for j in range(bsz):
            w_full = jnp.dot(exps[j] * inv_denom, mht,
                             preferred_element_type=jnp.float32)  # (L, E)
            attn_i = attn_i + w_full * vs[j]

        # Output projection + bias + residual, then mean over dim=1 (L).
        y_i = (jnp.dot(attn_i, wo, preferred_element_type=jnp.float32)
               + bo_ref[...] + xs[i])                             # (L, E)
        pooled_rows.append(jnp.sum(y_i, axis=0, keepdims=True) * inv_len)

    h = jnp.concatenate(pooled_rows, axis=0)                      # (B, E)

    # --- FC head: (Linear -> PReLU -> Dropout[id]) x6 + Linear(2, 1) -------
    for i in range(n_fc):
        h = jnp.dot(h, fcw_ref[i], preferred_element_type=jnp.float32) + fcb_ref[i]
        if i < n_fc - 1:
            h = jnp.where(h >= 0.0, h, h * alphas_ref[2 + i])
    o_ref[...] = h[:, :out_dim]


# ---------------------------------------------------------------------------
# Wrapper: host-side parameter folding / layout prep + single pallas_call.
# ---------------------------------------------------------------------------
def rna_seq_classifier_forward(x1, x2, x3, params, *, num_heads, dims):
    del x2, x3  # unused by the reference forward()
    bsz, c_in, length = x1.shape
    w1 = params["conv1_w"]
    c1, _, k1 = w1.shape
    w2 = params["conv2_w"]
    c2, _, k2 = w2.shape
    pad1, pad2 = k1 // 2, k2 // 2
    e_dim = c2
    d_head = e_dim // num_heads
    n_fc = len(dims)
    out_dim = dims[-1][1]
    width = max(max(p) for p in dims)
    f32 = jnp.float32

    # Conv1 window slab (tiny, C_in channels only): column index = j*C_in + c.
    x_t = jnp.transpose(x1.astype(f32), (0, 2, 1))                 # (B, L, C_in)
    x_tp = jnp.pad(x_t, ((0, 0), (pad1, pad1), (0, 0)))
    win1 = jnp.concatenate([x_tp[:, j:j + length, :] for j in range(k1)], axis=2)

    # Flattened conv weights in x @ W form: row index = j*C_in + c.
    w1f = jnp.transpose(w1, (2, 1, 0)).reshape(k1 * c_in, c1).astype(f32)
    w2f = jnp.transpose(w2, (2, 1, 0)).reshape(k2 * c1, c2).astype(f32)

    # Fold BatchNorm (running stats) + conv bias into per-channel scale/bias.
    s1 = params["bn1_gamma"] / jnp.sqrt(params["bn1_var"] + EPS)
    b1 = params["bn1_beta"] + s1 * (params["conv1_b"] - params["bn1_mean"])
    s2 = params["bn2_gamma"] / jnp.sqrt(params["bn2_var"] + EPS)
    b2 = params["bn2_beta"] + s2 * (params["conv2_b"] - params["bn2_mean"])
    scale1, bias1 = s1.reshape(1, c1).astype(f32), b1.reshape(1, c1).astype(f32)
    scale2, bias2 = s2.reshape(1, c2).astype(f32), b2.reshape(1, c2).astype(f32)

    # Attention weights in x @ W.T form.
    wq_t, wk_t = params["wq"].T.astype(f32), params["wk"].T.astype(f32)
    wv_t, wo_t = params["wv"].T.astype(f32), params["wo"].T.astype(f32)
    bq = params["bq"].reshape(1, e_dim).astype(f32)
    bk = params["bk"].reshape(1, e_dim).astype(f32)
    bv = params["bv"].reshape(1, e_dim).astype(f32)
    bo = params["bo"].reshape(1, e_dim).astype(f32)

    # Head-indicator matrices; mhead folds the 1/sqrt(d) score scaling.
    head_of = jnp.arange(e_dim, dtype=jnp.int32) // d_head
    heads = jnp.arange(num_heads, dtype=jnp.int32)
    mhead = ((head_of[:, None] == heads[None, :]).astype(f32)
             * (1.0 / math.sqrt(float(d_head))))                  # (E, H)
    mhead_t = (heads[:, None] == head_of[None, :]).astype(f32)    # (H, E)

    # FC stack, zero-padded to a uniform (n_fc, width, width).
    w_stack = jnp.zeros((n_fc, width, width), f32)
    b_stack = jnp.zeros((n_fc, 1, width), f32)
    for i, (din, dout) in enumerate(dims):
        w_stack = w_stack.at[i, :din, :dout].set(params[f"fc{i}_w"].T.astype(f32))
        b_stack = b_stack.at[i, 0, :dout].set(params[f"fc{i}_b"].astype(f32))

    # All scalar PReLU slopes in one SMEM vector: [conv1, conv2, fc0..fc(n-2)].
    alphas = jnp.stack(
        [params["prelu1"], params["prelu2"]]
        + [params[f"fc{i}_prelu"] for i in range(n_fc - 1)]).astype(f32)

    kernel = functools.partial(_fused_forward_kernel, k2=k2, pad2=pad2,
                               n_fc=n_fc, out_dim=out_dim)
    vmem = pl.BlockSpec(memory_space=pltpu.MemorySpace.VMEM)
    smem = pl.BlockSpec(memory_space=pltpu.MemorySpace.SMEM)
    return pl.pallas_call(
        kernel,
        out_shape=jax.ShapeDtypeStruct((bsz, out_dim), f32),
        in_specs=[smem] + [vmem] * 19,
        out_specs=vmem,
    )(alphas, win1, w1f, scale1, bias1, w2f, scale2, bias2,
      wq_t, wk_t, wv_t, wo_t, bq, bk, bv, bo, mhead, mhead_t, w_stack, b_stack)


# ---------------------------------------------------------------------------
# Pure-JAX reference (independent implementation) for correctness checking.
# ---------------------------------------------------------------------------
def reference_forward(x1, params, *, num_heads, dims):
    hp = jax.lax.Precision.HIGHEST
    h = x1
    for i in (1, 2):
        w = params[f"conv{i}_w"]
        pad = w.shape[-1] // 2
        y = jax.lax.conv_general_dilated(
            h, w, window_strides=(1,), padding=[(pad, pad)],
            dimension_numbers=("NCH", "OIH", "NCH"), precision=hp)
        y = y + params[f"conv{i}_b"][None, :, None]
        scale = params[f"bn{i}_gamma"] / jnp.sqrt(params[f"bn{i}_var"] + EPS)
        y = ((y - params[f"bn{i}_mean"][None, :, None]) * scale[None, :, None]
             + params[f"bn{i}_beta"][None, :, None])
        a = params[f"prelu{i}"]
        h = jnp.where(y >= 0, y, a * y)

    x = jnp.transpose(h, (0, 2, 1))          # (B, L, E); MHA sees (seq=B, batch=L, E)
    s_len, n_len, e_dim = x.shape
    d = e_dim // num_heads
    q = jnp.einsum("sne,fe->snf", x, params["wq"], precision=hp) + params["bq"]
    k = jnp.einsum("sne,fe->snf", x, params["wk"], precision=hp) + params["bk"]
    v = jnp.einsum("sne,fe->snf", x, params["wv"], precision=hp) + params["bv"]
    q = q.reshape(s_len, n_len, num_heads, d)
    k = k.reshape(s_len, n_len, num_heads, d)
    v = v.reshape(s_len, n_len, num_heads, d)
    scores = jnp.einsum("snhd,tnhd->nhst", q, k, precision=hp) / jnp.sqrt(float(d))
    probs = jax.nn.softmax(scores, axis=-1)
    attn = jnp.einsum("nhst,tnhd->snhd", probs, v, precision=hp)
    attn = attn.reshape(s_len, n_len, e_dim)
    attn = jnp.einsum("sne,fe->snf", attn, params["wo"], precision=hp) + params["bo"]
    y = attn + x
    pooled = jnp.mean(y, axis=1)             # torch.mean(x1, dim=1)

    out = pooled
    for i in range(len(dims)):
        out = out @ params[f"fc{i}_w"].T + params[f"fc{i}_b"]
        if i < len(dims) - 1:
            a = params[f"fc{i}_prelu"]
            out = jnp.where(out >= 0, out, a * out)
    return out


if __name__ == "__main__":
    B, L = 2, 16
    in_channels1, in_channels2 = 4, 3
    num_layers, num_heads = 2, 4
    base = num_heads * 8
    conv_channels = [base * 2 ** i for i in range(num_layers)]   # [32, 64]
    kernel_sizes = [3 + 2 * i for i in range(num_layers)]        # [3, 5]
    fc_sizes = [64, 32, 16, 8, 4, 2]

    keys = iter(jax.random.split(jax.random.PRNGKey(0), 64))

    def nrm(shape, s=0.2):
        return jax.random.normal(next(keys), shape, jnp.float32) * s

    def uni(shape, lo, hi):
        return jax.random.uniform(next(keys), shape, jnp.float32, lo, hi)

    params = {}
    cin = in_channels1
    for i, (cout, ksz) in enumerate(zip(conv_channels, kernel_sizes), start=1):
        params[f"conv{i}_w"] = nrm((cout, cin, ksz))
        params[f"conv{i}_b"] = nrm((cout,), 0.1)
        params[f"bn{i}_gamma"] = uni((cout,), 0.8, 1.2)
        params[f"bn{i}_beta"] = nrm((cout,), 0.1)
        params[f"bn{i}_mean"] = nrm((cout,), 0.1)
        params[f"bn{i}_var"] = uni((cout,), 0.5, 1.5)
        params[f"prelu{i}"] = uni((), 0.1, 0.4)
        cin = cout

    E = conv_channels[-1]
    for name in ("wq", "wk", "wv", "wo"):
        params[name] = nrm((E, E), 0.1)
    for name in ("bq", "bk", "bv", "bo"):
        params[name] = nrm((E,), 0.05)

    dims = []
    fin = E
    for i, fout in enumerate(fc_sizes + [1]):
        params[f"fc{i}_w"] = nrm((fout, fin), 0.15)
        params[f"fc{i}_b"] = nrm((fout,), 0.05)
        if i < len(fc_sizes):
            params[f"fc{i}_prelu"] = uni((), 0.1, 0.4)
        dims.append((fin, fout))
        fin = fout
    dims = tuple(dims)

    x1 = jax.random.normal(next(keys), (B, in_channels1, L), jnp.float32)
    x2 = jax.random.normal(next(keys), (B, in_channels2, L), jnp.float32)  # unused
    x3 = jax.random.normal(next(keys), (B, L), jnp.float32)                # unused

    out = rna_seq_classifier_forward(x1, x2, x3, params,
                                     num_heads=num_heads, dims=dims)
    out = jax.block_until_ready(out)

    ref = reference_forward(x1, params, num_heads=num_heads, dims=dims)
    assert out.shape == (B, 1), out.shape
    assert jnp.allclose(out, ref, atol=1e-3, rtol=1e-3), (out, ref)

    print("KERNEL_OK")
</pallas_src>

<mosaic_0001>
module attributes {stable_mosaic.version = 11 : i64} {
  func.func @_fused_forward_kernel(%arg0: memref<8xf32, #tpu.memory_space<smem>>, %arg1: memref<2x16x12xf32, #tpu.memory_space<vmem>>, %arg2: memref<12x32xf32, #tpu.memory_space<vmem>>, %arg3: memref<1x32xf32, #tpu.memory_space<vmem>>, %arg4: memref<1x32xf32, #tpu.memory_space<vmem>>, %arg5: memref<160x64xf32, #tpu.memory_space<vmem>>, %arg6: memref<1x64xf32, #tpu.memory_space<vmem>>, %arg7: memref<1x64xf32, #tpu.memory_space<vmem>>, %arg8: memref<64x64xf32, #tpu.memory_space<vmem>>, %arg9: memref<64x64xf32, #tpu.memory_space<vmem>>, %arg10: memref<64x64xf32, #tpu.memory_space<vmem>>, %arg11: memref<64x64xf32, #tpu.memory_space<vmem>>, %arg12: memref<1x64xf32, #tpu.memory_space<vmem>>, %arg13: memref<1x64xf32, #tpu.memory_space<vmem>>, %arg14: memref<1x64xf32, #tpu.memory_space<vmem>>, %arg15: memref<1x64xf32, #tpu.memory_space<vmem>>, %arg16: memref<64x4xf32, #tpu.memory_space<vmem>>, %arg17: memref<4x64xf32, #tpu.memory_space<vmem>>, %arg18: memref<7x64x64xf32, #tpu.memory_space<vmem>>, %arg19: memref<7x1x64xf32, #tpu.memory_space<vmem>>, %arg20: memref<2x1xf32, #tpu.memory_space<vmem>>) attributes {dimension_semantics = [], scalar_prefetch = 0 : i64, scratch_operands = 0 : i64, tpu.core_type = #tpu.core_type<tc>} {
    %c0 = arith.constant 0 : index
    %0 = memref.load %arg0[%c0] : memref<8xf32, #tpu.memory_space<smem>>
    %c1 = arith.constant 1 : index
    %1 = memref.load %arg0[%c1] : memref<8xf32, #tpu.memory_space<smem>>
    %c0_0 = arith.constant 0 : index
    %c0_1 = arith.constant 0 : index
    %2 = vector.load %arg2[%c0_0, %c0_1] : memref<12x32xf32, #tpu.memory_space<vmem>>, vector<12x32xf32>
    %c0_2 = arith.constant 0 : index
    %c0_3 = arith.constant 0 : index
    %3 = vector.load %arg5[%c0_2, %c0_3] : memref<160x64xf32, #tpu.memory_space<vmem>>, vector<160x64xf32>
    %c0_4 = arith.constant 0 : index
    %c0_5 = arith.constant 0 : index
    %4 = vector.load %arg8[%c0_4, %c0_5] : memref<64x64xf32, #tpu.memory_space<vmem>>, vector<64x64xf32>
    %c0_6 = arith.constant 0 : index
    %c0_7 = arith.constant 0 : index
    %5 = vector.load %arg9[%c0_6, %c0_7] : memref<64x64xf32, #tpu.memory_space<vmem>>, vector<64x64xf32>
    %c0_8 = arith.constant 0 : index
    %c0_9 = arith.constant 0 : index
    %6 = vector.load %arg10[%c0_8, %c0_9] : memref<64x64xf32, #tpu.memory_space<vmem>>, vector<64x64xf32>
    %c0_10 = arith.constant 0 : index
    %c0_11 = arith.constant 0 : index
    %7 = vector.load %arg11[%c0_10, %c0_11] : memref<64x64xf32, #tpu.memory_space<vmem>>, vector<64x64xf32>
    %c0_12 = arith.constant 0 : index
    %c0_13 = arith.constant 0 : index
    %8 = vector.load %arg16[%c0_12, %c0_13] : memref<64x4xf32, #tpu.memory_space<vmem>>, vector<64x4xf32>
    %c0_14 = arith.constant 0 : index
    %c0_15 = arith.constant 0 : index
    %9 = vector.load %arg17[%c0_14, %c0_15] : memref<4x64xf32, #tpu.memory_space<vmem>>, vector<4x64xf32>
    %c0_16 = arith.constant 0 : index
    %c0_17 = arith.constant 0 : index
    %c0_18 = arith.constant 0 : index
    %10 = vector.load %arg1[%c0_16, %c0_17, %c0_18] : memref<2x16x12xf32, #tpu.memory_space<vmem>>, vector<1x16x12xf32>
    %11 = vector.shape_cast %10 : vector<1x16x12xf32> to vector<16x12xf32>
    %cst = arith.constant dense<0.000000e+00> : vector<16x32xf32>
    %12 = tpu.matmul %11, %2, %cst {dimension_numbers = #tpu.dot_dimension_numbers<[1], [0], [0], [1], [0, 0, 1, 1], [], []>} : vector<16x12xf32>, vector<12x32xf32>, vector<16x32xf32> -> vector<16x32xf32>
    %c0_19 = arith.constant 0 : index
    %c0_20 = arith.constant 0 : index
    %13 = vector.load %arg3[%c0_19, %c0_20] : memref<1x32xf32, #tpu.memory_space<vmem>>, vector<1x32xf32>
    %14 = vector.broadcast %13 : vector<1x32xf32> to vector<16x32xf32>
    %15 = arith.mulf %12, %14 : vector<16x32xf32>
    %c0_21 = arith.constant 0 : index
    %c0_22 = arith.constant 0 : index
    %16 = vector.load %arg4[%c0_21, %c0_22] : memref<1x32xf32, #tpu.memory_space<vmem>>, vector<1x32xf32>
    %17 = vector.broadcast %16 : vector<1x32xf32> to vector<16x32xf32>
    %18 = arith.addf %15, %17 : vector<16x32xf32>
    %cst_23 = arith.constant 0.000000e+00 : f32
    %19 = vector.broadcast %cst_23 : f32 to vector<16x32xf32>
    %20 = arith.cmpf oge, %18, %19 : vector<16x32xf32>
    %21 = vector.broadcast %0 : f32 to vector<16x32xf32>
    %22 = arith.mulf %18, %21 : vector<16x32xf32>
    %23 = arith.select %20, %18, %22 : vector<16x32xi1>, vector<16x32xf32>
    %cst_24 = arith.constant 0.000000e+00 : f32
    %24 = vector.broadcast %cst_24 : f32 to vector<2x32xf32>
    %25 = tpu.concatenate %24, %23, %24 in 0 : vector<2x32xf32>, vector<16x32xf32>, vector<2x32xf32> -> vector<20x32xf32>
    %26 = vector.extract_strided_slice %25 {offsets = [0, 0], sizes = [16, 32], strides = [1, 1]} : vector<20x32xf32> to vector<16x32xf32>
    %27 = vector.extract_strided_slice %25 {offsets = [1, 0], sizes = [16, 32], strides = [1, 1]} : vector<20x32xf32> to vector<16x32xf32>
    %28 = vector.extract_strided_slice %25 {offsets = [2, 0], sizes = [16, 32], strides = [1, 1]} : vector<20x32xf32> to vector<16x32xf32>
    %29 = vector.extract_strided_slice %25 {offsets = [3, 0], sizes = [16, 32], strides = [1, 1]} : vector<20x32xf32> to vector<16x32xf32>
    %30 = vector.extract_strided_slice %25 {offsets = [4, 0], sizes = [16, 32], strides = [1, 1]} : vector<20x32xf32> to vector<16x32xf32>
    %31 = tpu.concatenate %26, %27, %28, %29, %30 in 1 : vector<16x32xf32>, vector<16x32xf32>, vector<16x32xf32>, vector<16x32xf32>, vector<16x32xf32> -> vector<16x160xf32>
    %cst_25 = arith.constant dense<0.000000e+00> : vector<16x64xf32>
    %32 = tpu.matmul %31, %3, %cst_25 {dimension_numbers = #tpu.dot_dimension_numbers<[1], [0], [0], [1], [0, 0, 1, 1], [], []>} : vector<16x160xf32>, vector<160x64xf32>, vector<16x64xf32> -> vector<16x64xf32>
    %c0_26 = arith.constant 0 : index
    %c0_27 = arith.constant 0 : index
    %33 = vector.load %arg6[%c0_26, %c0_27] : memref<1x64xf32, #tpu.memory_space<vmem>>, vector<1x64xf32>
    %34 = vector.broadcast %33 : vector<1x64xf32> to vector<16x64xf32>
    %35 = arith.mulf %32, %34 : vector<16x64xf32>
    %c0_28 = arith.constant 0 : index
    %c0_29 = arith.constant 0 : index
    %36 = vector.load %arg7[%c0_28, %c0_29] : memref<1x64xf32, #tpu.memory_space<vmem>>, vector<1x64xf32>
    %37 = vector.broadcast %36 : vector<1x64xf32> to vector<16x64xf32>
    %38 = arith.addf %35, %37 : vector<16x64xf32>
    %cst_30 = arith.constant 0.000000e+00 : f32
    %39 = vector.broadcast %cst_30 : f32 to vector<16x64xf32>
    %40 = arith.cmpf oge, %38, %39 : vector<16x64xf32>
    %41 = vector.broadcast %1 : f32 to vector<16x64xf32>
    %42 = arith.mulf %38, %41 : vector<16x64xf32>
    %43 = arith.select %40, %38, %42 : vector<16x64xi1>, vector<16x64xf32>
    %cst_31 = arith.constant dense<0.000000e+00> : vector<16x64xf32>
    %44 = tpu.matmul %43, %4, %cst_31 {dimension_numbers = #tpu.dot_dimension_numbers<[1], [0], [0], [1], [0, 0, 1, 1], [], []>} : vector<16x64xf32>, vector<64x64xf32>, vector<16x64xf32> -> vector<16x64xf32>
    %c0_32 = arith.constant 0 : index
    %c0_33 = arith.constant 0 : index
    %45 = vector.load %arg12[%c0_32, %c0_33] : memref<1x64xf32, #tpu.memory_space<vmem>>, vector<1x64xf32>
    %46 = vector.broadcast %45 : vector<1x64xf32> to vector<16x64xf32>
    %47 = arith.addf %44, %46 : vector<16x64xf32>
    %cst_34 = arith.constant dense<0.000000e+00> : vector<16x64xf32>
    %48 = tpu.matmul %43, %5, %cst_34 {dimension_numbers = #tpu.dot_dimension_numbers<[1], [0], [0], [1], [0, 0, 1, 1], [], []>} : vector<16x64xf32>, vector<64x64xf32>, vector<16x64xf32> -> vector<16x64xf32>
    %c0_35 = arith.constant 0 : index
    %c0_36 = arith.constant 0 : index
    %49 = vector.load %arg13[%c0_35, %c0_36] : memref<1x64xf32, #tpu.memory_space<vmem>>, vector<1x64xf32>
    %50 = vector.broadcast %49 : vector<1x64xf32> to vector<16x64xf32>
    %51 = arith.addf %48, %50 : vector<16x64xf32>
    %cst_37 = arith.constant dense<0.000000e+00> : vector<16x64xf32>
    %52 = tpu.matmul %43, %6, %cst_37 {dimension_numbers = #tpu.dot_dimension_numbers<[1], [0], [0], [1], [0, 0, 1, 1], [], []>} : vector<16x64xf32>, vector<64x64xf32>, vector<16x64xf32> -> vector<16x64xf32>
    %c0_38 = arith.constant 0 : index
    %c0_39 = arith.constant 0 : index
    %53 = vector.load %arg14[%c0_38, %c0_39] : memref<1x64xf32, #tpu.memory_space<vmem>>, vector<1x64xf32>
    %54 = vector.broadcast %53 : vector<1x64xf32> to vector<16x64xf32>
    %55 = arith.addf %52, %54 : vector<16x64xf32>
    %c1_40 = arith.constant 1 : index
    %c0_41 = arith.constant 0 : index
    %c0_42 = arith.constant 0 : index
    %56 = vector.load %arg1[%c1_40, %c0_41, %c0_42] : memref<2x16x12xf32, #tpu.memory_space<vmem>>, vector<1x16x12xf32>
    %57 = vector.shape_cast %56 : vector<1x16x12xf32> to vector<16x12xf32>
    %cst_43 = arith.constant dense<0.000000e+00> : vector<16x32xf32>
    %58 = tpu.matmul %57, %2, %cst_43 {dimension_numbers = #tpu.dot_dimension_numbers<[1], [0], [0], [1], [0, 0, 1, 1], [], []>} : vector<16x12xf32>, vector<12x32xf32>, vector<16x32xf32> -> vector<16x32xf32>
    %c0_44 = arith.constant 0 : index
    %c0_45 = arith.constant 0 : index
    %59 = vector.load %arg3[%c0_44, %c0_45] : memref<1x32xf32, #tpu.memory_space<vmem>>, vector<1x32xf32>
    %60 = vector.broadcast %59 : vector<1x32xf32> to vector<16x32xf32>
    %61 = arith.mulf %58, %60 : vector<16x32xf32>
    %c0_46 = arith.constant 0 : index
    %c0_47 = arith.constant 0 : index
    %62 = vector.load %arg4[%c0_46, %c0_47] : memref<1x32xf32, #tpu.memory_space<vmem>>, vector<1x32xf32>
    %63 = vector.broadcast %62 : vector<1x32xf32> to vector<16x32xf32>
    %64 = arith.addf %61, %63 : vector<16x32xf32>
    %cst_48 = arith.constant 0.000000e+00 : f32
    %65 = vector.broadcast %cst_48 : f32 to vector<16x32xf32>
    %66 = arith.cmpf oge, %64, %65 : vector<16x32xf32>
    %67 = vector.broadcast %0 : f32 to vector<16x32xf32>
    %68 = arith.mulf %64, %67 : vector<16x32xf32>
    %69 = arith.select %66, %64, %68 : vector<16x32xi1>, vector<16x32xf32>
    %cst_49 = arith.constant 0.000000e+00 : f32
    %70 = vector.broadcast %cst_49 : f32 to vector<2x32xf32>
    %71 = tpu.concatenate %70, %69, %70 in 0 : vector<2x32xf32>, vector<16x32xf32>, vector<2x32xf32> -> vector<20x32xf32>
    %72 = vector.extract_strided_slice %71 {offsets = [0, 0], sizes = [16, 32], strides = [1, 1]} : vector<20x32xf32> to vector<16x32xf32>
    %73 = vector.extract_strided_slice %71 {offsets = [1, 0], sizes = [16, 32], strides = [1, 1]} : vector<20x32xf32> to vector<16x32xf32>
    %74 = vector.extract_strided_slice %71 {offsets = [2, 0], sizes = [16, 32], strides = [1, 1]} : vector<20x32xf32> to vector<16x32xf32>
    %75 = vector.extract_strided_slice %71 {offsets = [3, 0], sizes = [16, 32], strides = [1, 1]} : vector<20x32xf32> to vector<16x32xf32>
    %76 = vector.extract_strided_slice %71 {offsets = [4, 0], sizes = [16, 32], strides = [1, 1]} : vector<20x32xf32> to vector<16x32xf32>
    %77 = tpu.concatenate %72, %73, %74, %75, %76 in 1 : vector<16x32xf32>, vector<16x32xf32>, vector<16x32xf32>, vector<16x32xf32>, vector<16x32xf32> -> vector<16x160xf32>
    %cst_50 = arith.constant dense<0.000000e+00> : vector<16x64xf32>
    %78 = tpu.matmul %77, %3, %cst_50 {dimension_numbers = #tpu.dot_dimension_numbers<[1], [0], [0], [1], [0, 0, 1, 1], [], []>} : vector<16x160xf32>, vector<160x64xf32>, vector<16x64xf32> -> vector<16x64xf32>
    %c0_51 = arith.constant 0 : index
    %c0_52 = arith.constant 0 : index
    %79 = vector.load %arg6[%c0_51, %c0_52] : memref<1x64xf32, #tpu.memory_space<vmem>>, vector<1x64xf32>
    %80 = vector.broadcast %79 : vector<1x64xf32> to vector<16x64xf32>
    %81 = arith.mulf %78, %80 : vector<16x64xf32>
    %c0_53 = arith.constant 0 : index
    %c0_54 = arith.constant 0 : index
    %82 = vector.load %arg7[%c0_53, %c0_54] : memref<1x64xf32, #tpu.memory_space<vmem>>, vector<1x64xf32>
    %83 = vector.broadcast %82 : vector<1x64xf32> to vector<16x64xf32>
    %84 = arith.addf %81, %83 : vector<16x64xf32>
    %cst_55 = arith.constant 0.000000e+00 : f32
    %85 = vector.broadcast %cst_55 : f32 to vector<16x64xf32>
    %86 = arith.cmpf oge, %84, %85 : vector<16x64xf32>
    %87 = vector.broadcast %1 : f32 to vector<16x64xf32>
    %88 = arith.mulf %84, %87 : vector<16x64xf32>
    %89 = arith.select %86, %84, %88 : vector<16x64xi1>, vector<16x64xf32>
    %cst_56 = arith.constant dense<0.000000e+00> : vector<16x64xf32>
    %90 = tpu.matmul %89, %4, %cst_56 {dimension_numbers = #tpu.dot_dimension_numbers<[1], [0], [0], [1], [0, 0, 1, 1], [], []>} : vector<16x64xf32>, vector<64x64xf32>, vector<16x64xf32> -> vector<16x64xf32>
    %c0_57 = arith.constant 0 : index
    %c0_58 = arith.constant 0 : index
    %91 = vector.load %arg12[%c0_57, %c0_58] : memref<1x64xf32, #tpu.memory_space<vmem>>, vector<1x64xf32>
    %92 = vector.broadcast %91 : vector<1x64xf32> to vector<16x64xf32>
    %93 = arith.addf %90, %92 : vector<16x64xf32>
    %cst_59 = arith.constant dense<0.000000e+00> : vector<16x64xf32>
    %94 = tpu.matmul %89, %5, %cst_59 {dimension_numbers = #tpu.dot_dimension_numbers<[1], [0], [0], [1], [0, 0, 1, 1], [], []>} : vector<16x64xf32>, vector<64x64xf32>, vector<16x64xf32> -> vector<16x64xf32>
    %c0_60 = arith.constant 0 : index
    %c0_61 = arith.constant 0 : index
    %95 = vector.load %arg13[%c0_60, %c0_61] : memref<1x64xf32, #tpu.memory_space<vmem>>, vector<1x64xf32>
    %96 = vector.broadcast %95 : vector<1x64xf32> to vector<16x64xf32>
    %97 = arith.addf %94, %96 : vector<16x64xf32>
    %cst_62 = arith.constant dense<0.000000e+00> : vector<16x64xf32>
    %98 = tpu.matmul %89, %6, %cst_62 {dimension_numbers = #tpu.dot_dimension_numbers<[1], [0], [0], [1], [0, 0, 1, 1], [], []>} : vector<16x64xf32>, vector<64x64xf32>, vector<16x64xf32> -> vector<16x64xf32>
    %c0_63 = arith.constant 0 : index
    %c0_64 = arith.constant 0 : index
    %99 = vector.load %arg14[%c0_63, %c0_64] : memref<1x64xf32, #tpu.memory_space<vmem>>, vector<1x64xf32>
    %100 = vector.broadcast %99 : vector<1x64xf32> to vector<16x64xf32>
    %101 = arith.addf %98, %100 : vector<16x64xf32>
    %102 = arith.mulf %47, %51 : vector<16x64xf32>
    %cst_65 = arith.constant dense<0.000000e+00> : vector<16x4xf32>
    %103 = tpu.matmul %102, %8, %cst_65 {dimension_numbers = #tpu.dot_dimension_numbers<[1], [0], [0], [1], [0, 0, 1, 1], [], []>} : vector<16x64xf32>, vector<64x4xf32>, vector<16x4xf32> -> vector<16x4xf32>
    %104 = arith.mulf %47, %97 : vector<16x64xf32>
    %cst_66 = arith.constant dense<0.000000e+00> : vector<16x4xf32>
    %105 = tpu.matmul %104, %8, %cst_66 {dimension_numbers = #tpu.dot_dimension_numbers<[1], [0], [0], [1], [0, 0, 1, 1], [], []>} : vector<16x64xf32>, vector<64x4xf32>, vector<16x4xf32> -> vector<16x4xf32>
    %106 = arith.mulf %93, %51 : vector<16x64xf32>
    %cst_67 = arith.constant dense<0.000000e+00> : vector<16x4xf32>
    %107 = tpu.matmul %106, %8, %cst_67 {dimension_numbers = #tpu.dot_dimension_numbers<[1], [0], [0], [1], [0, 0, 1, 1], [], []>} : vector<16x64xf32>, vector<64x4xf32>, vector<16x4xf32> -> vector<16x4xf32>
    %108 = arith.mulf %93, %97 : vector<16x64xf32>
    %cst_68 = arith.constant dense<0.000000e+00> : vector<16x4xf32>
    %109 = tpu.matmul %108, %8, %cst_68 {dimension_numbers = #tpu.dot_dimension_numbers<[1], [0], [0], [1], [0, 0, 1, 1], [], []>} : vector<16x64xf32>, vector<64x4xf32>, vector<16x4xf32> -> vector<16x4xf32>
    %110 = arith.maximumf %103, %105 : vector<16x4xf32>
    %111 = arith.subf %103, %110 : vector<16x4xf32>
    %112 = math.exp %111 : vector<16x4xf32>
    %113 = arith.subf %105, %110 : vector<16x4xf32>
    %114 = math.exp %113 : vector<16x4xf32>
    %115 = arith.addf %112, %114 : vector<16x4xf32>
    %cst_69 = arith.constant 1.000000e+00 : f32
    %116 = vector.broadcast %cst_69 : f32 to vector<16x4xf32>
    %117 = arith.divf %116, %115 : vector<16x4xf32>
    %cst_70 = arith.constant 0.000000e+00 : f32
    %118 = vector.broadcast %cst_70 : f32 to vector<16x64xf32>
    %119 = arith.mulf %112, %117 : vector<16x4xf32>
    %cst_71 = arith.constant dense<0.000000e+00> : vector<16x64xf32>
    %120 = tpu.matmul %119, %9, %cst_71 {dimension_numbers = #tpu.dot_dimension_numbers<[1], [0], [0], [1], [0, 0, 1, 1], [], []>} : vector<16x4xf32>, vector<4x64xf32>, vector<16x64xf32> -> vector<16x64xf32>
    %121 = arith.mulf %120, %55 : vector<16x64xf32>
    %122 = arith.addf %118, %121 : vector<16x64xf32>
    %123 = arith.mulf %114, %117 : vector<16x4xf32>
    %cst_72 = arith.constant dense<0.000000e+00> : vector<16x64xf32>
    %124 = tpu.matmul %123, %9, %cst_72 {dimension_numbers = #tpu.dot_dimension_numbers<[1], [0], [0], [1], [0, 0, 1, 1], [], []>} : vector<16x4xf32>, vector<4x64xf32>, vector<16x64xf32> -> vector<16x64xf32>
    %125 = arith.mulf %124, %101 : vector<16x64xf32>
    %126 = arith.addf %122, %125 : vector<16x64xf32>
    %cst_73 = arith.constant dense<0.000000e+00> : vector<16x64xf32>
    %127 = tpu.matmul %126, %7, %cst_73 {dimension_numbers = #tpu.dot_dimension_numbers<[1], [0], [0], [1], [0, 0, 1, 1], [], []>} : vector<16x64xf32>, vector<64x64xf32>, vector<16x64xf32> -> vector<16x64xf32>
    %c0_74 = arith.constant 0 : index
    %c0_75 = arith.constant 0 : index
    %128 = vector.load %arg15[%c0_74, %c0_75] : memref<1x64xf32, #tpu.memory_space<vmem>>, vector<1x64xf32>
    %129 = vector.broadcast %128 : vector<1x64xf32> to vector<16x64xf32>
    %130 = arith.addf %127, %129 : vector<16x64xf32>
    %131 = arith.addf %130, %43 : vector<16x64xf32>
    %cst_76 = arith.constant dense<0.000000e+00> : vector<64xf32>
    %132 = vector.multi_reduction <add>, %131, %cst_76 [0] : vector<16x64xf32> to vector<64xf32>
    %133 = vector.shape_cast %132 : vector<64xf32> to vector<1x64xf32>
    %cst_77 = arith.constant 6.250000e-02 : f32
    %134 = vector.broadcast %cst_77 : f32 to vector<1x64xf32>
    %135 = arith.mulf %133, %134 : vector<1x64xf32>
    %136 = arith.maximumf %107, %109 : vector<16x4xf32>
    %137 = arith.subf %107, %136 : vector<16x4xf32>
    %138 = math.exp %137 : vector<16x4xf32>
    %139 = arith.subf %109, %136 : vector<16x4xf32>
    %140 = math.exp %139 : vector<16x4xf32>
    %141 = arith.addf %138, %140 : vector<16x4xf32>
    %cst_78 = arith.constant 1.000000e+00 : f32
    %142 = vector.broadcast %cst_78 : f32 to vector<16x4xf32>
    %143 = arith.divf %142, %141 : vector<16x4xf32>
    %cst_79 = arith.constant 0.000000e+00 : f32
    %144 = vector.broadcast %cst_79 : f32 to vector<16x64xf32>
    %145 = arith.mulf %138, %143 : vector<16x4xf32>
    %cst_80 = arith.constant dense<0.000000e+00> : vector<16x64xf32>
    %146 = tpu.matmul %145, %9, %cst_80 {dimension_numbers = #tpu.dot_dimension_numbers<[1], [0], [0], [1], [0, 0, 1, 1], [], []>} : vector<16x4xf32>, vector<4x64xf32>, vector<16x64xf32> -> vector<16x64xf32>
    %147 = arith.mulf %146, %55 : vector<16x64xf32>
    %148 = arith.addf %144, %147 : vector<16x64xf32>
    %149 = arith.mulf %140, %143 : vector<16x4xf32>
    %cst_81 = arith.constant dense<0.000000e+00> : vector<16x64xf32>
    %150 = tpu.matmul %149, %9, %cst_81 {dimension_numbers = #tpu.dot_dimension_numbers<[1], [0], [0], [1], [0, 0, 1, 1], [], []>} : vector<16x4xf32>, vector<4x64xf32>, vector<16x64xf32> -> vector<16x64xf32>
    %151 = arith.mulf %150, %101 : vector<16x64xf32>
    %152 = arith.addf %148, %151 : vector<16x64xf32>
    %cst_82 = arith.constant dense<0.000000e+00> : vector<16x64xf32>
    %153 = tpu.matmul %152, %7, %cst_82 {dimension_numbers = #tpu.dot_dimension_numbers<[1], [0], [0], [1], [0, 0, 1, 1], [], []>} : vector<16x64xf32>, vector<64x64xf32>, vector<16x64xf32> -> vector<16x64xf32>
    %c0_83 = arith.constant 0 : index
    %c0_84 = arith.constant 0 : index
    %154 = vector.load %arg15[%c0_83, %c0_84] : memref<1x64xf32, #tpu.memory_space<vmem>>, vector<1x64xf32>
    %155 = vector.broadcast %154 : vector<1x64xf32> to vector<16x64xf32>
    %156 = arith.addf %153, %155 : vector<16x64xf32>
    %157 = arith.addf %156, %89 : vector<16x64xf32>
    %cst_85 = arith.constant dense<0.000000e+00> : vector<64xf32>
    %158 = vector.multi_reduction <add>, %157, %cst_85 [0] : vector<16x64xf32> to vector<64xf32>
    %159 = vector.shape_cast %158 : vector<64xf32> to vector<1x64xf32>
    %cst_86 = arith.constant 6.250000e-02 : f32
    %160 = vector.broadcast %cst_86 : f32 to vector<1x64xf32>
    %161 = arith.mulf %159, %160 : vector<1x64xf32>
    %162 = tpu.concatenate %135, %161 in 0 : vector<1x64xf32>, vector<1x64xf32> -> vector<2x64xf32>
    %c0_87 = arith.constant 0 : index
    %c0_88 = arith.constant 0 : index
    %c0_89 = arith.constant 0 : index
    %163 = vector.load %arg18[%c0_87, %c0_88, %c0_89] : memref<7x64x64xf32, #tpu.memory_space<vmem>>, vector<1x64x64xf32>
    %164 = vector.shape_cast %163 : vector<1x64x64xf32> to vector<64x64xf32>
    %cst_90 = arith.constant dense<0.000000e+00> : vector<2x64xf32>
    %165 = tpu.matmul %162, %164, %cst_90 {dimension_numbers = #tpu.dot_dimension_numbers<[1], [0], [0], [1], [0, 0, 1, 1], [], []>} : vector<2x64xf32>, vector<64x64xf32>, vector<2x64xf32> -> vector<2x64xf32>
    %c0_91 = arith.constant 0 : index
    %c0_92 = arith.constant 0 : index
    %c0_93 = arith.constant 0 : index
    %166 = vector.load %arg19[%c0_91, %c0_92, %c0_93] : memref<7x1x64xf32, #tpu.memory_space<vmem>>, vector<1x1x64xf32>
    %167 = vector.shape_cast %166 : vector<1x1x64xf32> to vector<1x64xf32>
    %168 = vector.broadcast %167 : vector<1x64xf32> to vector<2x64xf32>
    %169 = arith.addf %165, %168 : vector<2x64xf32>
    %cst_94 = arith.constant 0.000000e+00 : f32
    %170 = vector.broadcast %cst_94 : f32 to vector<2x64xf32>
    %171 = arith.cmpf oge, %169, %170 : vector<2x64xf32>
    %c2 = arith.constant 2 : index
    %172 = memref.load %arg0[%c2] : memref<8xf32, #tpu.memory_space<smem>>
    %173 = vector.broadcast %172 : f32 to vector<2x64xf32>
    %174 = arith.mulf %169, %173 : vector<2x64xf32>
    %175 = arith.select %171, %169, %174 : vector<2x64xi1>, vector<2x64xf32>
    %c1_95 = arith.constant 1 : index
    %c0_96 = arith.constant 0 : index
    %c0_97 = arith.constant 0 : index
    %176 = vector.load %arg18[%c1_95, %c0_96, %c0_97] : memref<7x64x64xf32, #tpu.memory_space<vmem>>, vector<1x64x64xf32>
    %177 = vector.shape_cast %176 : vector<1x64x64xf32> to vector<64x64xf32>
    %cst_98 = arith.constant dense<0.000000e+00> : vector<2x64xf32>
    %178 = tpu.matmul %175, %177, %cst_98 {dimension_numbers = #tpu.dot_dimension_numbers<[1], [0], [0], [1], [0, 0, 1, 1], [], []>} : vector<2x64xf32>, vector<64x64xf32>, vector<2x64xf32> -> vector<2x64xf32>
    %c1_99 = arith.constant 1 : index
    %c0_100 = arith.constant 0 : index
    %c0_101 = arith.constant 0 : index
    %179 = vector.load %arg19[%c1_99, %c0_100, %c0_101] : memref<7x1x64xf32, #tpu.memory_space<vmem>>, vector<1x1x64xf32>
    %180 = vector.shape_cast %179 : vector<1x1x64xf32> to vector<1x64xf32>
    %181 = vector.broadcast %180 : vector<1x64xf32> to vector<2x64xf32>
    %182 = arith.addf %178, %181 : vector<2x64xf32>
    %cst_102 = arith.constant 0.000000e+00 : f32
    %183 = vector.broadcast %cst_102 : f32 to vector<2x64xf32>
    %184 = arith.cmpf oge, %182, %183 : vector<2x64xf32>
    %c3 = arith.constant 3 : index
    %185 = memref.load %arg0[%c3] : memref<8xf32, #tpu.memory_space<smem>>
    %186 = vector.broadcast %185 : f32 to vector<2x64xf32>
    %187 = arith.mulf %182, %186 : vector<2x64xf32>
    %188 = arith.select %184, %182, %187 : vector<2x64xi1>, vector<2x64xf32>
    %c2_103 = arith.constant 2 : index
    %c0_104 = arith.constant 0 : index
    %c0_105 = arith.constant 0 : index
    %189 = vector.load %arg18[%c2_103, %c0_104, %c0_105] : memref<7x64x64xf32, #tpu.memory_space<vmem>>, vector<1x64x64xf32>
    %190 = vector.shape_cast %189 : vector<1x64x64xf32> to vector<64x64xf32>
    %cst_106 = arith.constant dense<0.000000e+00> : vector<2x64xf32>
    %191 = tpu.matmul %188, %190, %cst_106 {dimension_numbers = #tpu.dot_dimension_numbers<[1], [0], [0], [1], [0, 0, 1, 1], [], []>} : vector<2x64xf32>, vector<64x64xf32>, vector<2x64xf32> -> vector<2x64xf32>
    %c2_107 = arith.constant 2 : index
    %c0_108 = arith.constant 0 : index
    %c0_109 = arith.constant 0 : index
    %192 = vector.load %arg19[%c2_107, %c0_108, %c0_109] : memref<7x1x64xf32, #tpu.memory_space<vmem>>, vector<1x1x64xf32>
    %193 = vector.shape_cast %192 : vector<1x1x64xf32> to vector<1x64xf32>
    %194 = vector.broadcast %193 : vector<1x64xf32> to vector<2x64xf32>
    %195 = arith.addf %191, %194 : vector<2x64xf32>
    %cst_110 = arith.constant 0.000000e+00 : f32
    %196 = vector.broadcast %cst_110 : f32 to vector<2x64xf32>
    %197 = arith.cmpf oge, %195, %196 : vector<2x64xf32>
    %c4 = arith.constant 4 : index
    %198 = memref.load %arg0[%c4] : memref<8xf32, #tpu.memory_space<smem>>
    %199 = vector.broadcast %198 : f32 to vector<2x64xf32>
    %200 = arith.mulf %195, %199 : vector<2x64xf32>
    %201 = arith.select %197, %195, %200 : vector<2x64xi1>, vector<2x64xf32>
    %c3_111 = arith.constant 3 : index
    %c0_112 = arith.constant 0 : index
    %c0_113 = arith.constant 0 : index
    %202 = vector.load %arg18[%c3_111, %c0_112, %c0_113] : memref<7x64x64xf32, #tpu.memory_space<vmem>>, vector<1x64x64xf32>
    %203 = vector.shape_cast %202 : vector<1x64x64xf32> to vector<64x64xf32>
    %cst_114 = arith.constant dense<0.000000e+00> : vector<2x64xf32>
    %204 = tpu.matmul %201, %203, %cst_114 {dimension_numbers = #tpu.dot_dimension_numbers<[1], [0], [0], [1], [0, 0, 1, 1], [], []>} : vector<2x64xf32>, vector<64x64xf32>, vector<2x64xf32> -> vector<2x64xf32>
    %c3_115 = arith.constant 3 : index
    %c0_116 = arith.constant 0 : index
    %c0_117 = arith.constant 0 : index
    %205 = vector.load %arg19[%c3_115, %c0_116, %c0_117] : memref<7x1x64xf32, #tpu.memory_space<vmem>>, vector<1x1x64xf32>
    %206 = vector.shape_cast %205 : vector<1x1x64xf32> to vector<1x64xf32>
    %207 = vector.broadcast %206 : vector<1x64xf32> to vector<2x64xf32>
    %208 = arith.addf %204, %207 : vector<2x64xf32>
    %cst_118 = arith.constant 0.000000e+00 : f32
    %209 = vector.broadcast %cst_118 : f32 to vector<2x64xf32>
    %210 = arith.cmpf oge, %208, %209 : vector<2x64xf32>
    %c5 = arith.constant 5 : index
    %211 = memref.load %arg0[%c5] : memref<8xf32, #tpu.memory_space<smem>>
    %212 = vector.broadcast %211 : f32 to vector<2x64xf32>
    %213 = arith.mulf %208, %212 : vector<2x64xf32>
    %214 = arith.select %210, %208, %213 : vector<2x64xi1>, vector<2x64xf32>
    %c4_119 = arith.constant 4 : index
    %c0_120 = arith.constant 0 : index
    %c0_121 = arith.constant 0 : index
    %215 = vector.load %arg18[%c4_119, %c0_120, %c0_121] : memref<7x64x64xf32, #tpu.memory_space<vmem>>, vector<1x64x64xf32>
    %216 = vector.shape_cast %215 : vector<1x64x64xf32> to vector<64x64xf32>
    %cst_122 = arith.constant dense<0.000000e+00> : vector<2x64xf32>
    %217 = tpu.matmul %214, %216, %cst_122 {dimension_numbers = #tpu.dot_dimension_numbers<[1], [0], [0], [1], [0, 0, 1, 1], [], []>} : vector<2x64xf32>, vector<64x64xf32>, vector<2x64xf32> -> vector<2x64xf32>
    %c4_123 = arith.constant 4 : index
    %c0_124 = arith.constant 0 : index
    %c0_125 = arith.constant 0 : index
    %218 = vector.load %arg19[%c4_123, %c0_124, %c0_125] : memref<7x1x64xf32, #tpu.memory_space<vmem>>, vector<1x1x64xf32>
    %219 = vector.shape_cast %218 : vector<1x1x64xf32> to vector<1x64xf32>
    %220 = vector.broadcast %219 : vector<1x64xf32> to vector<2x64xf32>
    %221 = arith.addf %217, %220 : vector<2x64xf32>
    %cst_126 = arith.constant 0.000000e+00 : f32
    %222 = vector.broadcast %cst_126 : f32 to vector<2x64xf32>
    %223 = arith.cmpf oge, %221, %222 : vector<2x64xf32>
    %c6 = arith.constant 6 : index
    %224 = memref.load %arg0[%c6] : memref<8xf32, #tpu.memory_space<smem>>
    %225 = vector.broadcast %224 : f32 to vector<2x64xf32>
    %226 = arith.mulf %221, %225 : vector<2x64xf32>
    %227 = arith.select %223, %221, %226 : vector<2x64xi1>, vector<2x64xf32>
    %c5_127 = arith.constant 5 : index
    %c0_128 = arith.constant 0 : index
    %c0_129 = arith.constant 0 : index
    %228 = vector.load %arg18[%c5_127, %c0_128, %c0_129] : memref<7x64x64xf32, #tpu.memory_space<vmem>>, vector<1x64x64xf32>
    %229 = vector.shape_cast %228 : vector<1x64x64xf32> to vector<64x64xf32>
    %cst_130 = arith.constant dense<0.000000e+00> : vector<2x64xf32>
    %230 = tpu.matmul %227, %229, %cst_130 {dimension_numbers = #tpu.dot_dimension_numbers<[1], [0], [0], [1], [0, 0, 1, 1], [], []>} : vector<2x64xf32>, vector<64x64xf32>, vector<2x64xf32> -> vector<2x64xf32>
    %c5_131 = arith.constant 5 : index
    %c0_132 = arith.constant 0 : index
    %c0_133 = arith.constant 0 : index
    %231 = vector.load %arg19[%c5_131, %c0_132, %c0_133] : memref<7x1x64xf32, #tpu.memory_space<vmem>>, vector<1x1x64xf32>
    %232 = vector.shape_cast %231 : vector<1x1x64xf32> to vector<1x64xf32>
    %233 = vector.broadcast %232 : vector<1x64xf32> to vector<2x64xf32>
    %234 = arith.addf %230, %233 : vector<2x64xf32>
    %cst_134 = arith.constant 0.000000e+00 : f32
    %235 = vector.broadcast %cst_134 : f32 to vector<2x64xf32>
    %236 = arith.cmpf oge, %234, %235 : vector<2x64xf32>
    %c7 = arith.constant 7 : index
    %237 = memref.load %arg0[%c7] : memref<8xf32, #tpu.memory_space<smem>>
    %238 = vector.broadcast %237 : f32 to vector<2x64xf32>
    %239 = arith.mulf %234, %238 : vector<2x64xf32>
    %240 = arith.select %236, %234, %239 : vector<2x64xi1>, vector<2x64xf32>
    %c6_135 = arith.constant 6 : index
    %c0_136 = arith.constant 0 : index
    %c0_137 = arith.constant 0 : index
    %241 = vector.load %arg18[%c6_135, %c0_136, %c0_137] : memref<7x64x64xf32, #tpu.memory_space<vmem>>, vector<1x64x64xf32>
    %242 = vector.shape_cast %241 : vector<1x64x64xf32> to vector<64x64xf32>
    %cst_138 = arith.constant dense<0.000000e+00> : vector<2x64xf32>
    %243 = tpu.matmul %240, %242, %cst_138 {dimension_numbers = #tpu.dot_dimension_numbers<[1], [0], [0], [1], [0, 0, 1, 1], [], []>} : vector<2x64xf32>, vector<64x64xf32>, vector<2x64xf32> -> vector<2x64xf32>
    %c6_139 = arith.constant 6 : index
    %c0_140 = arith.constant 0 : index
    %c0_141 = arith.constant 0 : index
    %244 = vector.load %arg19[%c6_139, %c0_140, %c0_141] : memref<7x1x64xf32, #tpu.memory_space<vmem>>, vector<1x1x64xf32>
    %245 = vector.shape_cast %244 : vector<1x1x64xf32> to vector<1x64xf32>
    %246 = vector.broadcast %245 : vector<1x64xf32> to vector<2x64xf32>
    %247 = arith.addf %243, %246 : vector<2x64xf32>
    %248 = vector.extract_strided_slice %247 {offsets = [0, 0], sizes = [2, 1], strides = [1, 1]} : vector<2x64xf32> to vector<2x1xf32>
    %c0_142 = arith.constant 0 : index
    %c0_143 = arith.constant 0 : index
    %249 = vector.load %arg20[%c0_142, %c0_143] : memref<2x1xf32, #tpu.memory_space<vmem>>, vector<2x1xf32>
    tpu.vector_store %arg20[%c0_142, %c0_143], %248 {strides = array<i32>} : memref<2x1xf32, #tpu.memory_space<vmem>>, vector<2x1xf32>,
    return
  }
}

</mosaic_0001>

<llo_original>
// kernel: tpu_custom_call.1
$region0: #{tpu_custom_call.1}
  #allocation0 [shape = 'u32[]', space=smem, size = 0x4, offset = 0x4, fixed_abs, tag = 'smem constant byte address 0x4 - core index']
  #allocation1 [shape = 'u32[144,128]{1,0:T(1,128)}', space=vmem, size = 0x12000, scoped, tag = 'internal scratch']
  %s0 = inlined_call_operand.vmem [shape: f32[8], index: 0, kind: input, shape index: {}]
  %s1 = inlined_call_operand.vmem [shape: f32[2,16,12], index: 1, kind: input, shape index: {}]
  %s2 = inlined_call_operand.vmem [shape: f32[12,32], index: 2, kind: input, shape index: {}]
  %s3 = inlined_call_operand.vmem [shape: f32[1,32], index: 3, kind: input, shape index: {}]
  %s4 = inlined_call_operand.vmem [shape: f32[1,32], index: 4, kind: input, shape index: {}]
  %s5 = inlined_call_operand.vmem [shape: f32[160,64], index: 5, kind: input, shape index: {}]
  %s6 = inlined_call_operand.vmem [shape: f32[1,64], index: 6, kind: input, shape index: {}]
  %s7 = inlined_call_operand.vmem [shape: f32[1,64], index: 7, kind: input, shape index: {}]
  %s8 = inlined_call_operand.vmem [shape: f32[64,64], index: 8, kind: input, shape index: {}]
  %s9 = inlined_call_operand.vmem [shape: f32[64,64], index: 9, kind: input, shape index: {}]
  %s10 = inlined_call_operand.vmem [shape: f32[64,64], index: 10, kind: input, shape index: {}]
  %s11 = inlined_call_operand.vmem [shape: f32[64,64], index: 11, kind: input, shape index: {}]
  %s12 = inlined_call_operand.vmem [shape: f32[1,64], index: 12, kind: input, shape index: {}]
  %s13 = inlined_call_operand.vmem [shape: f32[1,64], index: 13, kind: input, shape index: {}]
  %s14 = inlined_call_operand.vmem [shape: f32[1,64], index: 14, kind: input, shape index: {}]
  %s15 = inlined_call_operand.vmem [shape: f32[1,64], index: 15, kind: input, shape index: {}]
  %s16 = inlined_call_operand.vmem [shape: f32[64,4], index: 16, kind: input, shape index: {}]
  %s17 = inlined_call_operand.vmem [shape: f32[4,64], index: 17, kind: input, shape index: {}]
  %s18 = inlined_call_operand.hbm [shape: f32[7,64,64], index: 18, kind: input, shape index: {}]
  %s19 = inlined_call_operand.vmem [shape: f32[7,1,64], index: 19, kind: input, shape index: {}]
  %s20 = inlined_call_operand.vmem [shape: f32[2,1], index: 20, kind: output, shape index: {}]
  %s21 = sld [smem:[#allocation0]]
  $region98: #{tpu_custom_call.1} parent=0
    _
  %s23 = ssub.s32 1, %s21
  %s24 = scalar_select 0, %s23, %s21
  $region1: #{tpu_custom_call.1} parent=0
    #allocation2 [shape = 'u8[512]{0}', space=smem, size = 0x200, scoped, tag = 'input window, operand 0, single buffered']
    #allocation3 [shape = 's32[1]{0}', space=sflag, size = 0x4, scoped, tag = 'scoped memory for tpu_custom_call.1']
    #allocation4 [shape = 's32[1]{0}', space=sflag, size = 0x4, scoped, tag = 'scoped memory for tpu_custom_call.1']
    #allocation5 [shape = 'u8[229376]{0}', space=vmem, size = 0x38000, scoped, tag = 'input window, operand 18, single buffered']
    %25 = vsyncpa [#allocation4], 0
    %26 = vsyncpa [#allocation3], 0
    // Predicated region
    $region2: #{tpu_custom_call.1} parent=1 // pred_check
      _
    $region3: #{tpu_custom_call.1} parent=1 // pred_check_branch
      %28 = sbr.rel (0) target = $region5
    $region4: #{tpu_custom_call.1} parent=1 // pred_region
      %s30 = ssub.s32 16, 16
      %31 = vsyncadd [#allocation4], %s30
      %s33 = sshll.u32 %s0, 4
      %s34 = int_to_ptr.vmem [resolvable:$true] %s33
      %36 = dma.vmem_to_smem %s34, 16, [#allocation2], [#allocation4]
    $region5: #{tpu_custom_call.1} parent=1 // pred_fallthru
      _
    // Predicated region
    $region6: #{tpu_custom_call.1} parent=1 // pred_check
      _
    $region7: #{tpu_custom_call.1} parent=1 // pred_check_branch
      %38 = sbr.rel (0) target = $region9
    $region8: #{tpu_custom_call.1} parent=1 // pred_region
      _
    $region9: #{tpu_custom_call.1} parent=1 // pred_fallthru
      _
    // Predicated region
    $region10: #{tpu_custom_call.1} parent=1 // pred_check
      _
    $region11: #{tpu_custom_call.1} parent=1 // pred_check_branch
      %40 = sbr.rel (0) target = $region13
    $region12: #{tpu_custom_call.1} parent=1 // pred_region
      _
    $region13: #{tpu_custom_call.1} parent=1 // pred_fallthru
      _
    // Predicated region
    $region14: #{tpu_custom_call.1} parent=1 // pred_check
      _
    $region15: #{tpu_custom_call.1} parent=1 // pred_check_branch
      %42 = sbr.rel (0) target = $region17
    $region16: #{tpu_custom_call.1} parent=1 // pred_region
      _
    $region17: #{tpu_custom_call.1} parent=1 // pred_fallthru
      _
    // Predicated region
    $region18: #{tpu_custom_call.1} parent=1 // pred_check
      _
    $region19: #{tpu_custom_call.1} parent=1 // pred_check_branch
      %44 = sbr.rel (0) target = $region21
    $region20: #{tpu_custom_call.1} parent=1 // pred_region
      _
    $region21: #{tpu_custom_call.1} parent=1 // pred_fallthru
      _
    // Predicated region
    $region22: #{tpu_custom_call.1} parent=1 // pred_check
      _
    $region23: #{tpu_custom_call.1} parent=1 // pred_check_branch
      %46 = sbr.rel (0) target = $region25
    $region24: #{tpu_custom_call.1} parent=1 // pred_region
      _
    $region25: #{tpu_custom_call.1} parent=1 // pred_fallthru
      _
    // Predicated region
    $region26: #{tpu_custom_call.1} parent=1 // pred_check
      _
    $region27: #{tpu_custom_call.1} parent=1 // pred_check_branch
      %48 = sbr.rel (0) target = $region29
    $region28: #{tpu_custom_call.1} parent=1 // pred_region
      _
    $region29: #{tpu_custom_call.1} parent=1 // pred_fallthru
      _
    // Predicated region
    $region30: #{tpu_custom_call.1} parent=1 // pred_check
      _
    $region31: #{tpu_custom_call.1} parent=1 // pred_check_branch
      %50 = sbr.rel (0) target = $region33
    $region32: #{tpu_custom_call.1} parent=1 // pred_region
      _
    $region33: #{tpu_custom_call.1} parent=1 // pred_fallthru
      _
    // Predicated region
    $region34: #{tpu_custom_call.1} parent=1 // pred_check
      _
    $region35: #{tpu_custom_call.1} parent=1 // pred_check_branch
      %52 = sbr.rel (0) target = $region37
    $region36: #{tpu_custom_call.1} parent=1 // pred_region
      _
    $region37: #{tpu_custom_call.1} parent=1 // pred_fallthru
      _
    // Predicated region
    $region38: #{tpu_custom_call.1} parent=1 // pred_check
      _
    $region39: #{tpu_custom_call.1} parent=1 // pred_check_branch
      %54 = sbr.rel (0) target = $region41
    $region40: #{tpu_custom_call.1} parent=1 // pred_region
      _
    $region41: #{tpu_custom_call.1} parent=1 // pred_fallthru
      _
    // Predicated region
    $region42: #{tpu_custom_call.1} parent=1 // pred_check
      _
    $region43: #{tpu_custom_call.1} parent=1 // pred_check_branch
      %56 = sbr.rel (0) target = $region45
    $region44: #{tpu_custom_call.1} parent=1 // pred_region
      _
    $region45: #{tpu_custom_call.1} parent=1 // pred_fallthru
      _
    // Predicated region
    $region46: #{tpu_custom_call.1} parent=1 // pred_check
      _
    $region47: #{tpu_custom_call.1} parent=1 // pred_check_branch
      %58 = sbr.rel (0) target = $region49
    $region48: #{tpu_custom_call.1} parent=1 // pred_region
      _
    $region49: #{tpu_custom_call.1} parent=1 // pred_fallthru
      _
    // Predicated region
    $region50: #{tpu_custom_call.1} parent=1 // pred_check
      _
    $region51: #{tpu_custom_call.1} parent=1 // pred_check_branch
      %60 = sbr.rel (0) target = $region53
    $region52: #{tpu_custom_call.1} parent=1 // pred_region
      _
    $region53: #{tpu_custom_call.1} parent=1 // pred_fallthru
      _
    // Predicated region
    $region54: #{tpu_custom_call.1} parent=1 // pred_check
      _
    $region55: #{tpu_custom_call.1} parent=1 // pred_check_branch
      %62 = sbr.rel (0) target = $region57
    $region56: #{tpu_custom_call.1} parent=1 // pred_region
      _
    $region57: #{tpu_custom_call.1} parent=1 // pred_fallthru
      _
    // Predicated region
    $region58: #{tpu_custom_call.1} parent=1 // pred_check
      _
    $region59: #{tpu_custom_call.1} parent=1 // pred_check_branch
      %64 = sbr.rel (0) target = $region61
    $region60: #{tpu_custom_call.1} parent=1 // pred_region
      _
    $region61: #{tpu_custom_call.1} parent=1 // pred_fallthru
      _
    // Predicated region
    $region62: #{tpu_custom_call.1} parent=1 // pred_check
      _
    $region63: #{tpu_custom_call.1} parent=1 // pred_check_branch
      %66 = sbr.rel (0) target = $region65
    $region64: #{tpu_custom_call.1} parent=1 // pred_region
      _
    $region65: #{tpu_custom_call.1} parent=1 // pred_fallthru
      _
    // Predicated region
    $region66: #{tpu_custom_call.1} parent=1 // pred_check
      _
    $region67: #{tpu_custom_call.1} parent=1 // pred_check_branch
      %68 = sbr.rel (0) target = $region69
    $region68: #{tpu_custom_call.1} parent=1 // pred_region
      _
    $region69: #{tpu_custom_call.1} parent=1 // pred_fallthru
      _
    // Predicated region
    $region70: #{tpu_custom_call.1} parent=1 // pred_check
      _
    $region71: #{tpu_custom_call.1} parent=1 // pred_check_branch
      %70 = sbr.rel (0) target = $region73
    $region72: #{tpu_custom_call.1} parent=1 // pred_region
      _
    $region73: #{tpu_custom_call.1} parent=1 // pred_fallthru
      _
    // Predicated region
    $region74: #{tpu_custom_call.1} parent=1 // pred_check
      _
    $region75: #{tpu_custom_call.1} parent=1 // pred_check_branch
      %72 = sbr.rel (0) target = $region77
    $region76: #{tpu_custom_call.1} parent=1 // pred_region
      %s74 = ssub.s32 7168, 7168
      %75 = vsyncadd [#allocation3], %s74
      %s76 = sshll.u32 [#allocation5], 4
      %s77 = int_to_ptr.vmem [resolvable:$true] %s76
      %82 = dma.hbm_to_vmem [thread:$0]  %s18, 7168, %s77, [#allocation3], 128, 128, 8
    $region77: #{tpu_custom_call.1} parent=1 // pred_fallthru
      _
    // Predicated region
    $region78: #{tpu_custom_call.1} parent=1 // pred_check
      _
    $region79: #{tpu_custom_call.1} parent=1 // pred_check_branch
      %84 = sbr.rel (0) target = $region81
    $region80: #{tpu_custom_call.1} parent=1 // pred_region
      _
    $region81: #{tpu_custom_call.1} parent=1 // pred_fallthru
      _
    // Predicated region
    $region82: #{tpu_custom_call.1} parent=1 // pred_check
      _
    $region83: #{tpu_custom_call.1} parent=1 // pred_check_branch
      %86 = sbr.rel (0) target = $region85
    $region84: #{tpu_custom_call.1} parent=1 // pred_region
      %87 = dma.done [#allocation4], 16
    $region85: #{tpu_custom_call.1} parent=1 // pred_fallthru
      _
    // Predicated region
    $region86: #{tpu_custom_call.1} parent=1 // pred_check
      _
    $region87: #{tpu_custom_call.1} parent=1 // pred_check_branch
      %89 = sbr.rel (0) target = $region89
    $region88: #{tpu_custom_call.1} parent=1 // pred_region
      %90 = dma.done [#allocation3], 7168
    $region89: #{tpu_custom_call.1} parent=1 // pred_fallthru
      _
    %91 = sfence
    %s92 = sld [smem:[#allocation2]]
    %s93 = sld [smem:[#allocation2 + $0x1]]
    %v94 = vld [vmem:[%s2] sm:$0xff]
    %v95 = vld [vmem:[%s2 + $0x8] sm:$0xf]
    %v96 = vld [vmem:[%s5] sm:$0xff]
    %v97 = vld [vmem:[%s5 + $0x8] sm:$0xff]
    %v98 = vld [vmem:[%s5 + $0x10] sm:$0xff]
    %v99 = vld [vmem:[%s5 + $0x18] sm:$0xff]
    %v100 = vld [vmem:[%s5 + $0x20] sm:$0xff]
    %v101 = vld [vmem:[%s5 + $0x28] sm:$0xff]
    %v102 = vld [vmem:[%s5 + $0x30] sm:$0xff]
    %v103 = vld [vmem:[%s5 + $0x38] sm:$0xff]
    %v104 = vld [vmem:[%s5 + $0x40] sm:$0xff]
    %v105 = vld [vmem:[%s5 + $0x48] sm:$0xff]
    %v106 = vld [vmem:[%s5 + $0x50] sm:$0xff]
    %v107 = vld [vmem:[%s5 + $0x58] sm:$0xff]
    %v108 = vld [vmem:[%s5 + $0x60] sm:$0xff]
    %v109 = vld [vmem:[%s5 + $0x68] sm:$0xff]
    %v110 = vld [vmem:[%s5 + $0x70] sm:$0xff]
    %v111 = vld [vmem:[%s5 + $0x78] sm:$0xff]
    %v112 = vld [vmem:[%s5 + $0x80] sm:$0xff]
    %v113 = vld [vmem:[%s5 + $0x88] sm:$0xff]
    %v114 = vld [vmem:[%s5 + $0x90] sm:$0xff]
    %v115 = vld [vmem:[%s5 + $0x98] sm:$0xff]
    %v116 = vld [vmem:[%s8] sm:$0xff]
    %v117 = vld [vmem:[%s8 + $0x8] sm:$0xff]
    %v118 = vld [vmem:[%s8 + $0x10] sm:$0xff]
    %v119 = vld [vmem:[%s8 + $0x18] sm:$0xff]
    %v120 = vld [vmem:[%s8 + $0x20] sm:$0xff]
    %v121 = vld [vmem:[%s8 + $0x28] sm:$0xff]
    %v122 = vld [vmem:[%s8 + $0x30] sm:$0xff]
    %v123 = vld [vmem:[%s8 + $0x38] sm:$0xff]
    %v124 = vld [vmem:[%s9] sm:$0xff]
    %v125 = vld [vmem:[%s9 + $0x8] sm:$0xff]
    %v126 = vld [vmem:[%s9 + $0x10] sm:$0xff]
    %v127 = vld [vmem:[%s9 + $0x18] sm:$0xff]
    %v128 = vld [vmem:[%s9 + $0x20] sm:$0xff]
    %v129 = vld [vmem:[%s9 + $0x28] sm:$0xff]
    %v130 = vld [vmem:[%s9 + $0x30] sm:$0xff]
    %v131 = vld [vmem:[%s9 + $0x38] sm:$0xff]
    %v132 = vld [vmem:[%s10] sm:$0xff]
    %v133 = vld [vmem:[%s10 + $0x8] sm:$0xff]
    %v134 = vld [vmem:[%s10 + $0x10] sm:$0xff]
    %v135 = vld [vmem:[%s10 + $0x18] sm:$0xff]
    %v136 = vld [vmem:[%s10 + $0x20] sm:$0xff]
    %v137 = vld [vmem:[%s10 + $0x28] sm:$0xff]
    %v138 = vld [vmem:[%s10 + $0x30] sm:$0xff]
    %v139 = vld [vmem:[%s10 + $0x38] sm:$0xff]
    %v140 = vld [vmem:[%s11] sm:$0xff]
    %v141 = vld [vmem:[%s11 + $0x8] sm:$0xff]
    %v142 = vld [vmem:[%s11 + $0x10] sm:$0xff]
    %v143 = vld [vmem:[%s11 + $0x18] sm:$0xff]
    %v144 = vld [vmem:[%s11 + $0x20] sm:$0xff]
    %v145 = vld [vmem:[%s11 + $0x28] sm:$0xff]
    %v146 = vld [vmem:[%s11 + $0x30] sm:$0xff]
    %v147 = vld [vmem:[%s11 + $0x38] sm:$0xff]
    %v148 = vld [vmem:[%s16] sm:$0xff]
    %v149 = vld [vmem:[%s16 + $0x8] sm:$0xff]
    %v150 = vld [vmem:[%s16 + $0x10] sm:$0xff]
    %v151 = vld [vmem:[%s16 + $0x18] sm:$0xff]
    %v152 = vld [vmem:[%s16 + $0x20] sm:$0xff]
    %v153 = vld [vmem:[%s16 + $0x28] sm:$0xff]
    %v154 = vld [vmem:[%s16 + $0x30] sm:$0xff]
    %v155 = vld [vmem:[%s16 + $0x38] sm:$0xff]
    %v156 = vld [vmem:[%s17] sm:$0xf]
    %v157 = vld [vmem:[%s1] sm:$0xff]
    %v158 = vld [vmem:[%s1 + $0x8] sm:$0xff]
    %vm159 = vcmask 97280
    %v161 = vsel %vm159, %v157, 0
    %v164 = vsel %vm159, %v158, 0
    %vm166 = vcmask 1043456
    %v168 = vsel %vm166, %v95, 0
    %170 = vmatprep.subr.mxu0 0.0
    %171 = vmatpush1.msra.mxu0 0.0
    %172 = vmatprep.subr.mxu0 0.0
    %173 = vmatpush1.msra.mxu0 0.0
    %174 = vmatprep.subr.mxu0 0.0
    %175 = vmatpush1.msra.mxu0 0.0
    %176 = vmatprep.subr.mxu0 0.0
    %177 = vmatpush1.msra.mxu0 0.0
    %178 = vmatprep.subr.mxu0 0.0
    %179 = vmatpush1.msra.mxu0 0.0
    %180 = vmatprep.subr.mxu0 0.0
    %181 = vmatpush1.msra.mxu0 0.0
    %182 = vmatprep.subr.mxu0 0.0
    %183 = vmatpush1.msra.mxu0 0.0
    %184 = vmatprep.subr.mxu0 0.0
    %185 = vmatpush1.msra.mxu0 0.0
    %186 = vmatprep.subr.mxu0 0.0
    %187 = vmatpush1.msra.mxu0 0.0
    %188 = vmatprep.subr.mxu0 0.0
    %189 = vmatpush1.msra.mxu0 0.0
    %190 = vmatprep.subr.mxu0 0.0
    %191 = vmatpush1.msra.mxu0 0.0
    %192 = vmatprep.subr.mxu0 0.0
    %193 = vmatpush1.msra.mxu0 0.0
    %194 = vmatprep.subr.mxu0 0.0
    %195 = vmatpush1.msra.mxu0 0.0
    %196 = vmatprep.subr.mxu0 0.0
    %197 = vmatpush1.msra.mxu0 0.0
    %198 = vmatprep.subr.mxu0 0.0
    %199 = vmatpush1.msra.mxu0 %v168
    %200 = vmatprep.subr.mxu0 0.0
    %201 = vmatpush1.msra.mxu0 %v94
    %202 = vmatprep.subr.mxu0 0.0
    %203 = vmatpush2.msra.mxu0 0.0
    %204 = vmatprep.subr.mxu0 0.0
    %205 = vmatpush2.msra.mxu0 0.0
    %206 = vmatprep.subr.mxu0 0.0
    %207 = vmatpush2.msra.mxu0 0.0
    %208 = vmatprep.subr.mxu0 0.0
    %209 = vmatpush2.msra.mxu0 0.0
    %210 = vmatprep.subr.mxu0 0.0
    %211 = vmatpush2.msra.mxu0 0.0
    %212 = vmatprep.subr.mxu0 0.0
    %213 = vmatpush2.msra.mxu0 0.0
    %214 = vmatprep.subr.mxu0 0.0
    %215 = vmatpush2.msra.mxu0 0.0
    %216 = vmatprep.subr.mxu0 0.0
    %217 = vmatpush2.msra.mxu0 0.0
    %218 = vmatprep.subr.mxu0 0.0
    %219 = vmatpush2.msra.mxu0 0.0
    %220 = vmatprep.subr.mxu0 0.0
    %221 = vmatpush2.msra.mxu0 0.0
    %222 = vmatprep.subr.mxu0 0.0
    %223 = vmatpush2.msra.mxu0 0.0
    %224 = vmatprep.subr.mxu0 0.0
    %225 = vmatpush2.msra.mxu0 0.0
    %226 = vmatprep.subr.mxu0 0.0
    %227 = vmatpush2.msra.mxu0 0.0
    %228 = vmatprep.subr.mxu0 0.0
    %229 = vmatpush2.msra.mxu0 0.0
    %230 = vmatprep.subr.mxu0 0.0
    %231 = vmatpush2.msra.mxu0 0.0
    %232 = vmatprep.subr.mxu0 0.0
    %233 = vmatpush2.msra.mxu0 0.0
    %234 = vmatprep.mubr.f32.mxu0 0.0
    %235 = vmatmul.mubr.f32.gmra.mxu0 %v161
    %v236 = vpop.f32.mrf.mxu0
    %v237 = vadd.f32 0.0, %v236
    %v238 = vpop.f32.mrf.mxu0
    %239 = vmatprep.mubr.f32.mxu0 0.0
    %240 = vmatmul.mubr.f32.gmra.mxu0 %v164
    %v241 = vpop.f32.mrf.mxu0
    %v242 = vadd.f32 0.0, %v241
    %v243 = vpop.f32.mrf.mxu0
    %244 = vdwg.mxu0
    %v245 = vld [vmem:[%s3] sm:$0x1]
    %v247 = vlaneseq
    %v248 = vshrl.u32 %v247, 7
    %v249 = vsub.s32 0, %v248
    %v250 = vrot.slane %v245, %v249
    %v252 = vmul.f32 %v237, %v250
    %v253 = vmul.f32 %v242, %v250
    %v254 = vld [vmem:[%s4] sm:$0x1]
    %v256 = vlaneseq
    %v257 = vshrl.u32 %v256, 7
    %v258 = vsub.s32 0, %v257
    %v259 = vrot.slane %v254, %v258
    %v261 = vadd.f32 %v252, %v259
    %v262 = vadd.f32 %v253, %v259
    %vm263 = vcmp.ge.f32.partialorder %v261, 0.0
    %vm264 = vcmp.ge.f32.partialorder %v262, 0.0
    %v265 = vstv %s92
    %v266 = vmul.f32 %v261, %v265
    %v267 = vmul.f32 %v262, %v265
    %v268 = vsel %vm263, %v261, %v266
    %v269 = vsel %vm264, %v262, %v267
    %vm272 = vcmask 1041408
    %v273 = vrot.slane %v268, 6
    %v274 = vrot.slane %v269, 6
    %v275 = vsel %vm272, %v273, %v274
    %v279 = vsel %vm272, 0.0, %v273
    %v280 = vsel %vm272, %v274, 0.0
    %vm283 = vcmask 1046528
    %v284 = vrot.slane %v279, 1
    %v285 = vrot.slane %v275, 1
    %v286 = vsel %vm283, %v284, %v285
    %v287 = vrot.slane %v280, 1
    %v288 = vsel %vm283, %v285, %v287
    %289 = vrot.lane.b32.xlu0 %v286, 32
    %v290 = vpop.permute.xlu0 %289
    %291 = vrot.lane.b32.xlu0 %v288, 32
    %v292 = vpop.permute.xlu0 %291
    %vm295 = vcmask 1045504
    %v296 = vrot.slane %v279, 2
    %v297 = vrot.slane %v275, 2
    %v298 = vsel %vm295, %v296, %v297
    %v299 = vrot.slane %v280, 2
    %v300 = vsel %vm295, %v297, %v299
    %301 = vrot.lane.b32.xlu0 %v298, 64
    %v302 = vpop.permute.xlu0 %301
    %303 = vrot.lane.b32.xlu0 %v300, 64
    %v304 = vpop.permute.xlu0 %303
    %vm307 = vcmask 1044480
    %v308 = vrot.slane %v279, 3
    %v309 = vrot.slane %v275, 3
    %v310 = vsel %vm307, %v308, %v309
    %v311 = vrot.slane %v280, 3
    %v312 = vsel %vm307, %v309, %v311
    %313 = vrot.lane.b32.xlu0 %v310, 96
    %v314 = vpop.permute.xlu0 %313
    %315 = vrot.lane.b32.xlu0 %v312, 96
    %v316 = vpop.permute.xlu0 %315
    %v319 = vrot.slane %v279, 4
    %v320 = vrot.slane %v275, 4
    %v321 = vsel %vm166, %v319, %v320
    %v322 = vrot.slane %v280, 4
    %v323 = vsel %vm166, %v320, %v322
    %vm324 = vcmask 261120
    %v325 = vsel %vm324, %v279, %v290
    %v326 = vsel %vm324, %v275, %v292
    %vm327 = vcmask 523264
    %v328 = vsel %vm327, %v325, %v302
    %v329 = vsel %vm327, %v326, %v304
    %vm330 = vcmask 785408
    %v331 = vsel %vm330, %v328, %v314
    %v332 = vsel %vm330, %v329, %v316
    %v333 = vsel %vm324, %v321, 0
    %v335 = vsel %vm324, %v323, 0
    %337 = vmatprep.subr.mxu0 0.0
    %338 = vmatpush1.msra.mxu0 %v111
    %339 = vmatprep.subr.mxu0 0.0
    %340 = vmatpush1.msra.mxu0 %v110
    %341 = vmatprep.subr.mxu0 0.0
    %342 = vmatpush1.msra.mxu0 %v109
    %343 = vmatprep.subr.mxu0 0.0
    %344 = vmatpush1.msra.mxu0 %v108
    %345 = vmatprep.subr.mxu0 0.0
    %346 = vmatpush1.msra.mxu0 %v107
    %347 = vmatprep.subr.mxu0 0.0
    %348 = vmatpush1.msra.mxu0 %v106
    %349 = vmatprep.subr.mxu0 0.0
    %350 = vmatpush1.msra.mxu0 %v105
    %351 = vmatprep.subr.mxu0 0.0
    %352 = vmatpush1.msra.mxu0 %v104
    %353 = vmatprep.subr.mxu0 0.0
    %354 = vmatpush1.msra.mxu0 %v103
    %355 = vmatprep.subr.mxu0 0.0
    %356 = vmatpush1.msra.mxu0 %v102
    %357 = vmatprep.subr.mxu0 0.0
    %358 = vmatpush1.msra.mxu0 %v101
    %359 = vmatprep.subr.mxu0 0.0
    %360 = vmatpush1.msra.mxu0 %v100
    %361 = vmatprep.subr.mxu0 0.0
    %362 = vmatpush1.msra.mxu0 %v99
    %363 = vmatprep.subr.mxu0 0.0
    %364 = vmatpush1.msra.mxu0 %v98
    %365 = vmatprep.subr.mxu0 0.0
    %366 = vmatpush1.msra.mxu0 %v97
    %367 = vmatprep.subr.mxu0 0.0
    %368 = vmatpush1.msra.mxu0 %v96
    %369 = vmatprep.subr.mxu0 0.0
    %370 = vmatpush2.msra.mxu0 0.0
    %371 = vmatprep.subr.mxu0 0.0
    %372 = vmatpush2.msra.mxu0 0.0
    %373 = vmatprep.subr.mxu0 0.0
    %374 = vmatpush2.msra.mxu0 0.0
    %375 = vmatprep.subr.mxu0 0.0
    %376 = vmatpush2.msra.mxu0 0.0
    %377 = vmatprep.subr.mxu0 0.0
    %378 = vmatpush2.msra.mxu0 0.0
    %379 = vmatprep.subr.mxu0 0.0
    %380 = vmatpush2.msra.mxu0 0.0
    %381 = vmatprep.subr.mxu0 0.0
    %382 = vmatpush2.msra.mxu0 0.0
    %383 = vmatprep.subr.mxu0 0.0
    %384 = vmatpush2.msra.mxu0 0.0
    %385 = vmatprep.subr.mxu0 0.0
    %386 = vmatpush2.msra.mxu0 0.0
    %387 = vmatprep.subr.mxu0 0.0
    %388 = vmatpush2.msra.mxu0 0.0
    %389 = vmatprep.subr.mxu0 0.0
    %390 = vmatpush2.msra.mxu0 0.0
    %391 = vmatprep.subr.mxu0 0.0
    %392 = vmatpush2.msra.mxu0 0.0
    %393 = vmatprep.subr.mxu0 0.0
    %394 = vmatpush2.msra.mxu0 %v115
    %395 = vmatprep.subr.mxu0 0.0
    %396 = vmatpush2.msra.mxu0 %v114
    %397 = vmatprep.subr.mxu0 0.0
    %398 = vmatpush2.msra.mxu0 %v113
    %399 = vmatprep.subr.mxu0 0.0
    %400 = vmatpush2.msra.mxu0 %v112
    %401 = vmatprep.mubr.f32.mxu0 %v333
    %402 = vmatmul.mubr.f32.gmra.mxu0 %v331
    %v403 = vpop.f32.mrf.mxu0
    %v404 = vadd.f32 0.0, %v403
    %v405 = vpop.f32.mrf.mxu0
    %406 = vmatprep.mubr.f32.mxu0 %v335
    %407 = vmatmul.mubr.f32.gmra.mxu0 %v332
    %v408 = vpop.f32.mrf.mxu0
    %v409 = vadd.f32 0.0, %v408
    %v410 = vpop.f32.mrf.mxu0
    %411 = vdwg.mxu0
    %v412 = vld [vmem:[%s6] sm:$0x1]
    %v414 = vlaneseq
    %v415 = vshrl.u32 %v414, 7
    %v416 = vsub.s32 0, %v415
    %v417 = vrot.slane %v412, %v416
    %v419 = vmul.f32 %v404, %v417
    %v420 = vmul.f32 %v409, %v417
    %v421 = vld [vmem:[%s7] sm:$0x1]
    %v423 = vlaneseq
    %v424 = vshrl.u32 %v423, 7
    %v425 = vsub.s32 0, %v424
    %v426 = vrot.slane %v421, %v425
    %v428 = vadd.f32 %v419, %v426
    %v429 = vadd.f32 %v420, %v426
    %vm430 = vcmp.ge.f32.partialorder %v428, 0.0
    %vm431 = vcmp.ge.f32.partialorder %v429, 0.0
    %v432 = vstv %s93
    %v433 = vmul.f32 %v428, %v432
    %v434 = vmul.f32 %v429, %v432
    %v435 = vsel %vm430, %v428, %v433
    %v436 = vsel %vm431, %v429, %v434
    %v437 = vld [vmem:[%s12] sm:$0x1]
    %v439 = vlaneseq
    %v440 = vshrl.u32 %v439, 7
    %v441 = vsub.s32 0, %v440
    %v442 = vrot.slane %v437, %v441
    %v445 = vsel %vm327, %v435, 0
    %v448 = vsel %vm327, %v436, 0
    %450 = vmatprep.subr.mxu0 0.0
    %451 = vmatpush1.msra.mxu0 0.0
    %452 = vmatprep.subr.mxu0 0.0
    %453 = vmatpush1.msra.mxu0 0.0
    %454 = vmatprep.subr.mxu0 0.0
    %455 = vmatpush1.msra.mxu0 0.0
    %456 = vmatprep.subr.mxu0 0.0
    %457 = vmatpush1.msra.mxu0 0.0
    %458 = vmatprep.subr.mxu0 0.0
    %459 = vmatpush1.msra.mxu0 0.0
    %460 = vmatprep.subr.mxu0 0.0
    %461 = vmatpush1.msra.mxu0 0.0
    %462 = vmatprep.subr.mxu0 0.0
    %463 = vmatpush1.msra.mxu0 0.0
    %464 = vmatprep.subr.mxu0 0.0
    %465 = vmatpush1.msra.mxu0 0.0
    %466 = vmatprep.subr.mxu0 0.0
    %467 = vmatpush1.msra.mxu0 %v123
    %468 = vmatprep.subr.mxu0 0.0
    %469 = vmatpush1.msra.mxu0 %v122
    %470 = vmatprep.subr.mxu0 0.0
    %471 = vmatpush1.msra.mxu0 %v121
    %472 = vmatprep.subr.mxu0 0.0
    %473 = vmatpush1.msra.mxu0 %v120
    %474 = vmatprep.subr.mxu0 0.0
    %475 = vmatpush1.msra.mxu0 %v119
    %476 = vmatprep.subr.mxu0 0.0
    %477 = vmatpush1.msra.mxu0 %v118
    %478 = vmatprep.subr.mxu0 0.0
    %479 = vmatpush1.msra.mxu0 %v117
    %480 = vmatprep.subr.mxu0 0.0
    %481 = vmatpush1.msra.mxu0 %v116
    %482 = vmatprep.subr.mxu0 0.0
    %483 = vmatpush2.msra.mxu0 0.0
    %484 = vmatprep.subr.mxu0 0.0
    %485 = vmatpush2.msra.mxu0 0.0
    %486 = vmatprep.subr.mxu0 0.0
    %487 = vmatpush2.msra.mxu0 0.0
    %488 = vmatprep.subr.mxu0 0.0
    %489 = vmatpush2.msra.mxu0 0.0
    %490 = vmatprep.subr.mxu0 0.0
    %491 = vmatpush2.msra.mxu0 0.0
    %492 = vmatprep.subr.mxu0 0.0
    %493 = vmatpush2.msra.mxu0 0.0
    %494 = vmatprep.subr.mxu0 0.0
    %495 = vmatpush2.msra.mxu0 0.0
    %496 = vmatprep.subr.mxu0 0.0
    %497 = vmatpush2.msra.mxu0 0.0
    %498 = vmatprep.subr.mxu0 0.0
    %499 = vmatpush2.msra.mxu0 0.0
    %500 = vmatprep.subr.mxu0 0.0
    %501 = vmatpush2.msra.mxu0 0.0
    %502 = vmatprep.subr.mxu0 0.0
    %503 = vmatpush2.msra.mxu0 0.0
    %504 = vmatprep.subr.mxu0 0.0
    %505 = vmatpush2.msra.mxu0 0.0
    %506 = vmatprep.subr.mxu0 0.0
    %507 = vmatpush2.msra.mxu0 0.0
    %508 = vmatprep.subr.mxu0 0.0
    %509 = vmatpush2.msra.mxu0 0.0
    %510 = vmatprep.subr.mxu0 0.0
    %511 = vmatpush2.msra.mxu0 0.0
    %512 = vmatprep.subr.mxu0 0.0
    %513 = vmatpush2.msra.mxu0 0.0
    %514 = vmatprep.mubr.f32.mxu0 0.0
    %515 = vmatmul.mubr.f32.gmra.mxu0 %v445
    %v516 = vpop.f32.mrf.mxu0
    %v517 = vadd.f32 %v442, %v516
    %v518 = vpop.f32.mrf.mxu0
    %519 = vmatprep.mubr.f32.mxu0 0.0
    %520 = vmatmul.mubr.f32.gmra.mxu0 %v448
    %v521 = vpop.f32.mrf.mxu0
    %v522 = vadd.f32 %v442, %v521
    %v523 = vpop.f32.mrf.mxu0
    %524 = vdwg.mxu0
    %v525 = vld [vmem:[%s13] sm:$0x1]
    %v527 = vlaneseq
    %v528 = vshrl.u32 %v527, 7
    %v529 = vsub.s32 0, %v528
    %v530 = vrot.slane %v525, %v529
    %532 = vmatprep.subr.mxu0 0.0
    %533 = vmatpush1.msra.mxu0 0.0
    %534 = vmatprep.subr.mxu0 0.0
    %535 = vmatpush1.msra.mxu0 0.0
    %536 = vmatprep.subr.mxu0 0.0
    %537 = vmatpush1.msra.mxu0 0.0
    %538 = vmatprep.subr.mxu0 0.0
    %539 = vmatpush1.msra.mxu0 0.0
    %540 = vmatprep.subr.mxu0 0.0
    %541 = vmatpush1.msra.mxu0 0.0
    %542 = vmatprep.subr.mxu0 0.0
    %543 = vmatpush1.msra.mxu0 0.0
    %544 = vmatprep.subr.mxu0 0.0
    %545 = vmatpush1.msra.mxu0 0.0
    %546 = vmatprep.subr.mxu0 0.0
    %547 = vmatpush1.msra.mxu0 0.0
    %548 = vmatprep.subr.mxu0 0.0
    %549 = vmatpush1.msra.mxu0 %v131
    %550 = vmatprep.subr.mxu0 0.0
    %551 = vmatpush1.msra.mxu0 %v130
    %552 = vmatprep.subr.mxu0 0.0
    %553 = vmatpush1.msra.mxu0 %v129
    %554 = vmatprep.subr.mxu0 0.0
    %555 = vmatpush1.msra.mxu0 %v128
    %556 = vmatprep.subr.mxu0 0.0
    %557 = vmatpush1.msra.mxu0 %v127
    %558 = vmatprep.subr.mxu0 0.0
    %559 = vmatpush1.msra.mxu0 %v126
    %560 = vmatprep.subr.mxu0 0.0
    %561 = vmatpush1.msra.mxu0 %v125
    %562 = vmatprep.subr.mxu0 0.0
    %563 = vmatpush1.msra.mxu0 %v124
    %564 = vmatprep.subr.mxu0 0.0
    %565 = vmatpush2.msra.mxu0 0.0
    %566 = vmatprep.subr.mxu0 0.0
    %567 = vmatpush2.msra.mxu0 0.0
    %568 = vmatprep.subr.mxu0 0.0
    %569 = vmatpush2.msra.mxu0 0.0
    %570 = vmatprep.subr.mxu0 0.0
    %571 = vmatpush2.msra.mxu0 0.0
    %572 = vmatprep.subr.mxu0 0.0
    %573 = vmatpush2.msra.mxu0 0.0
    %574 = vmatprep.subr.mxu0 0.0
    %575 = vmatpush2.msra.mxu0 0.0
    %576 = vmatprep.subr.mxu0 0.0
    %577 = vmatpush2.msra.mxu0 0.0
    %578 = vmatprep.subr.mxu0 0.0
    %579 = vmatpush2.msra.mxu0 0.0
    %580 = vmatprep.subr.mxu0 0.0
    %581 = vmatpush2.msra.mxu0 0.0
    %582 = vmatprep.subr.mxu0 0.0
    %583 = vmatpush2.msra.mxu0 0.0
    %584 = vmatprep.subr.mxu0 0.0
    %585 = vmatpush2.msra.mxu0 0.0
    %586 = vmatprep.subr.mxu0 0.0
    %587 = vmatpush2.msra.mxu0 0.0
    %588 = vmatprep.subr.mxu0 0.0
    %589 = vmatpush2.msra.mxu0 0.0
    %590 = vmatprep.subr.mxu0 0.0
    %591 = vmatpush2.msra.mxu0 0.0
    %592 = vmatprep.subr.mxu0 0.0
    %593 = vmatpush2.msra.mxu0 0.0
    %594 = vmatprep.subr.mxu0 0.0
    %595 = vmatpush2.msra.mxu0 0.0
    %596 = vmatprep.mubr.f32.mxu0 0.0
    %597 = vmatmul.mubr.f32.gmra.mxu0 %v445
    %v598 = vpop.f32.mrf.mxu0
    %v599 = vadd.f32 %v530, %v598
    %v600 = vpop.f32.mrf.mxu0
    %601 = vmatprep.mubr.f32.mxu0 0.0
    %602 = vmatmul.mubr.f32.gmra.mxu0 %v448
    %v603 = vpop.f32.mrf.mxu0
    %v604 = vadd.f32 %v530, %v603
    %v605 = vpop.f32.mrf.mxu0
    %606 = vdwg.mxu0
    %v607 = vld [vmem:[%s14] sm:$0x1]
    %v609 = vlaneseq
    %v610 = vshrl.u32 %v609, 7
    %v611 = vsub.s32 0, %v610
    %v612 = vrot.slane %v607, %v611
    %614 = vmatprep.subr.mxu0 0.0
    %615 = vmatpush1.msra.mxu0 0.0
    %616 = vmatprep.subr.mxu0 0.0
    %617 = vmatpush1.msra.mxu0 0.0
    %618 = vmatprep.subr.mxu0 0.0
    %619 = vmatpush1.msra.mxu0 0.0
    %620 = vmatprep.subr.mxu0 0.0
    %621 = vmatpush1.msra.mxu0 0.0
    %622 = vmatprep.subr.mxu0 0.0
    %623 = vmatpush1.msra.mxu0 0.0
    %624 = vmatprep.subr.mxu0 0.0
    %625 = vmatpush1.msra.mxu0 0.0
    %626 = vmatprep.subr.mxu0 0.0
    %627 = vmatpush1.msra.mxu0 0.0
    %628 = vmatprep.subr.mxu0 0.0
    %629 = vmatpush1.msra.mxu0 0.0
    %630 = vmatprep.subr.mxu0 0.0
    %631 = vmatpush1.msra.mxu0 %v139
    %632 = vmatprep.subr.mxu0 0.0
    %633 = vmatpush1.msra.mxu0 %v138
    %634 = vmatprep.subr.mxu0 0.0
    %635 = vmatpush1.msra.mxu0 %v137
    %636 = vmatprep.subr.mxu0 0.0
    %637 = vmatpush1.msra.mxu0 %v136
    %638 = vmatprep.subr.mxu0 0.0
    %639 = vmatpush1.msra.mxu0 %v135
    %640 = vmatprep.subr.mxu0 0.0
    %641 = vmatpush1.msra.mxu0 %v134
    %642 = vmatprep.subr.mxu0 0.0
    %643 = vmatpush1.msra.mxu0 %v133
    %644 = vmatprep.subr.mxu0 0.0
    %645 = vmatpush1.msra.mxu0 %v132
    %646 = vmatprep.subr.mxu0 0.0
    %647 = vmatpush2.msra.mxu0 0.0
    %648 = vmatprep.subr.mxu0 0.0
    %649 = vmatpush2.msra.mxu0 0.0
    %650 = vmatprep.subr.mxu0 0.0
    %651 = vmatpush2.msra.mxu0 0.0
    %652 = vmatprep.subr.mxu0 0.0
    %653 = vmatpush2.msra.mxu0 0.0
    %654 = vmatprep.subr.mxu0 0.0
    %655 = vmatpush2.msra.mxu0 0.0
    %656 = vmatprep.subr.mxu0 0.0
    %657 = vmatpush2.msra.mxu0 0.0
    %658 = vmatprep.subr.mxu0 0.0
    %659 = vmatpush2.msra.mxu0 0.0
    %660 = vmatprep.subr.mxu0 0.0
    %661 = vmatpush2.msra.mxu0 0.0
    %662 = vmatprep.subr.mxu0 0.0
    %663 = vmatpush2.msra.mxu0 0.0
    %664 = vmatprep.subr.mxu0 0.0
    %665 = vmatpush2.msra.mxu0 0.0
    %666 = vmatprep.subr.mxu0 0.0
    %667 = vmatpush2.msra.mxu0 0.0
    %668 = vmatprep.subr.mxu0 0.0
    %669 = vmatpush2.msra.mxu0 0.0
    %670 = vmatprep.subr.mxu0 0.0
    %671 = vmatpush2.msra.mxu0 0.0
    %672 = vmatprep.subr.mxu0 0.0
    %673 = vmatpush2.msra.mxu0 0.0
    %674 = vmatprep.subr.mxu0 0.0
    %675 = vmatpush2.msra.mxu0 0.0
    %676 = vmatprep.subr.mxu0 0.0
    %677 = vmatpush2.msra.mxu0 0.0
    %678 = vmatprep.mubr.f32.mxu0 0.0
    %679 = vmatmul.mubr.f32.gmra.mxu0 %v445
    %v680 = vpop.f32.mrf.mxu0
    %v681 = vadd.f32 %v612, %v680
    %v682 = vpop.f32.mrf.mxu0
    %683 = vmatprep.mubr.f32.mxu0 0.0
    %684 = vmatmul.mubr.f32.gmra.mxu0 %v448
    %v685 = vpop.f32.mrf.mxu0
    %v686 = vadd.f32 %v612, %v685
    %v687 = vpop.f32.mrf.mxu0
    %688 = vdwg.mxu0
    %s689 = scalar_lea.vmem %s1, 16
    %v690 = vld [vmem:[%s689] sm:$0xff]
    %v691 = vld [vmem:[%s689 + $0x8] sm:$0xff]
    %v693 = vsel %vm159, %v690, 0
    %v696 = vsel %vm159, %v691, 0
    %698 = vmatprep.subr.mxu0 0.0
    %699 = vmatpush1.msra.mxu0 0.0
    %700 = vmatprep.subr.mxu0 0.0
    %701 = vmatpush1.msra.mxu0 0.0
    %702 = vmatprep.subr.mxu0 0.0
    %703 = vmatpush1.msra.mxu0 0.0
    %704 = vmatprep.subr.mxu0 0.0
    %705 = vmatpush1.msra.mxu0 0.0
    %706 = vmatprep.subr.mxu0 0.0
    %707 = vmatpush1.msra.mxu0 0.0
    %708 = vmatprep.subr.mxu0 0.0
    %709 = vmatpush1.msra.mxu0 0.0
    %710 = vmatprep.subr.mxu0 0.0
    %711 = vmatpush1.msra.mxu0 0.0
    %712 = vmatprep.subr.mxu0 0.0
    %713 = vmatpush1.msra.mxu0 0.0
    %714 = vmatprep.subr.mxu0 0.0
    %715 = vmatpush1.msra.mxu0 0.0
    %716 = vmatprep.subr.mxu0 0.0
    %717 = vmatpush1.msra.mxu0 0.0
    %718 = vmatprep.subr.mxu0 0.0
    %719 = vmatpush1.msra.mxu0 0.0
    %720 = vmatprep.subr.mxu0 0.0
    %721 = vmatpush1.msra.mxu0 0.0
    %722 = vmatprep.subr.mxu0 0.0
    %723 = vmatpush1.msra.mxu0 0.0
    %724 = vmatprep.subr.mxu0 0.0
    %725 = vmatpush1.msra.mxu0 0.0
    %726 = vmatprep.subr.mxu0 0.0
    %727 = vmatpush1.msra.mxu0 %v168
    %728 = vmatprep.subr.mxu0 0.0
    %729 = vmatpush1.msra.mxu0 %v94
    %730 = vmatprep.subr.mxu0 0.0
    %731 = vmatpush2.msra.mxu0 0.0
    %732 = vmatprep.subr.mxu0 0.0
    %733 = vmatpush2.msra.mxu0 0.0
    %734 = vmatprep.subr.mxu0 0.0
    %735 = vmatpush2.msra.mxu0 0.0
    %736 = vmatprep.subr.mxu0 0.0
    %737 = vmatpush2.msra.mxu0 0.0
    %738 = vmatprep.subr.mxu0 0.0
    %739 = vmatpush2.msra.mxu0 0.0
    %740 = vmatprep.subr.mxu0 0.0
    %741 = vmatpush2.msra.mxu0 0.0
    %742 = vmatprep.subr.mxu0 0.0
    %743 = vmatpush2.msra.mxu0 0.0
    %744 = vmatprep.subr.mxu0 0.0
    %745 = vmatpush2.msra.mxu0 0.0
    %746 = vmatprep.subr.mxu0 0.0
    %747 = vmatpush2.msra.mxu0 0.0
    %748 = vmatprep.subr.mxu0 0.0
    %749 = vmatpush2.msra.mxu0 0.0
    %750 = vmatprep.subr.mxu0 0.0
    %751 = vmatpush2.msra.mxu0 0.0
    %752 = vmatprep.subr.mxu0 0.0
    %753 = vmatpush2.msra.mxu0 0.0
    %754 = vmatprep.subr.mxu0 0.0
    %755 = vmatpush2.msra.mxu0 0.0
    %756 = vmatprep.subr.mxu0 0.0
    %757 = vmatpush2.msra.mxu0 0.0
    %758 = vmatprep.subr.mxu0 0.0
    %759 = vmatpush2.msra.mxu0 0.0
    %760 = vmatprep.subr.mxu0 0.0
    %761 = vmatpush2.msra.mxu0 0.0
    %762 = vmatprep.mubr.f32.mxu0 0.0
    %763 = vmatmul.mubr.f32.gmra.mxu0 %v693
    %v764 = vpop.f32.mrf.mxu0
    %v765 = vadd.f32 0.0, %v764
    %v766 = vpop.f32.mrf.mxu0
    %767 = vmatprep.mubr.f32.mxu0 0.0
    %768 = vmatmul.mubr.f32.gmra.mxu0 %v696
    %v769 = vpop.f32.mrf.mxu0
    %v770 = vadd.f32 0.0, %v769
    %v771 = vpop.f32.mrf.mxu0
    %772 = vdwg.mxu0
    %v773 = vmul.f32 %v765, %v250
    %v774 = vmul.f32 %v770, %v250
    %v775 = vadd.f32 %v773, %v259
    %v776 = vadd.f32 %v774, %v259
    %vm777 = vcmp.ge.f32.partialorder %v775, 0.0
    %vm778 = vcmp.ge.f32.partialorder %v776, 0.0
    %v779 = vmul.f32 %v775, %v265
    %v780 = vmul.f32 %v776, %v265
    %v781 = vsel %vm777, %v775, %v779
    %v782 = vsel %vm778, %v776, %v780
    %v785 = vrot.slane %v781, 6
    %v786 = vrot.slane %v782, 6
    %v787 = vsel %vm272, %v785, %v786
    %v791 = vsel %vm272, 0.0, %v785
    %v792 = vsel %vm272, %v786, 0.0
    %v795 = vrot.slane %v791, 1
    %v796 = vrot.slane %v787, 1
    %v797 = vsel %vm283, %v795, %v796
    %v798 = vrot.slane %v792, 1
    %v799 = vsel %vm283, %v796, %v798
    %800 = vrot.lane.b32.xlu0 %v797, 32
    %v801 = vpop.permute.xlu0 %800
    %802 = vrot.lane.b32.xlu0 %v799, 32
    %v803 = vpop.permute.xlu0 %802
    %v806 = vrot.slane %v791, 2
    %v807 = vrot.slane %v787, 2
    %v808 = vsel %vm295, %v806, %v807
    %v809 = vrot.slane %v792, 2
    %v810 = vsel %vm295, %v807, %v809
    %811 = vrot.lane.b32.xlu0 %v808, 64
    %v812 = vpop.permute.xlu0 %811
    %813 = vrot.lane.b32.xlu0 %v810, 64
    %v814 = vpop.permute.xlu0 %813
    %v817 = vrot.slane %v791, 3
    %v818 = vrot.slane %v787, 3
    %v819 = vsel %vm307, %v817, %v818
    %v820 = vrot.slane %v792, 3
    %v821 = vsel %vm307, %v818, %v820
    %822 = vrot.lane.b32.xlu0 %v819, 96
    %v823 = vpop.permute.xlu0 %822
    %824 = vrot.lane.b32.xlu0 %v821, 96
    %v825 = vpop.permute.xlu0 %824
    %v828 = vrot.slane %v791, 4
    %v829 = vrot.slane %v787, 4
    %v830 = vsel %vm166, %v828, %v829
    %v831 = vrot.slane %v792, 4
    %v832 = vsel %vm166, %v829, %v831
    %v833 = vsel %vm324, %v791, %v801
    %v834 = vsel %vm324, %v787, %v803
    %v835 = vsel %vm327, %v833, %v812
    %v836 = vsel %vm327, %v834, %v814
    %v837 = vsel %vm330, %v835, %v823
    %v838 = vsel %vm330, %v836, %v825
    %v839 = vsel %vm324, %v830, 0
    %v841 = vsel %vm324, %v832, 0
    %843 = vmatprep.subr.mxu0 0.0
    %844 = vmatpush1.msra.mxu0 %v111
    %845 = vmatprep.subr.mxu0 0.0
    %846 = vmatpush1.msra.mxu0 %v110
    %847 = vmatprep.subr.mxu0 0.0
    %848 = vmatpush1.msra.mxu0 %v109
    %849 = vmatprep.subr.mxu0 0.0
    %850 = vmatpush1.msra.mxu0 %v108
    %851 = vmatprep.subr.mxu0 0.0
    %852 = vmatpush1.msra.mxu0 %v107
    %853 = vmatprep.subr.mxu0 0.0
    %854 = vmatpush1.msra.mxu0 %v106
    %855 = vmatprep.subr.mxu0 0.0
    %856 = vmatpush1.msra.mxu0 %v105
    %857 = vmatprep.subr.mxu0 0.0
    %858 = vmatpush1.msra.mxu0 %v104
    %859 = vmatprep.subr.mxu0 0.0
    %860 = vmatpush1.msra.mxu0 %v103
    %861 = vmatprep.subr.mxu0 0.0
    %862 = vmatpush1.msra.mxu0 %v102
    %863 = vmatprep.subr.mxu0 0.0
    %864 = vmatpush1.msra.mxu0 %v101
    %865 = vmatprep.subr.mxu0 0.0
    %866 = vmatpush1.msra.mxu0 %v100
    %867 = vmatprep.subr.mxu0 0.0
    %868 = vmatpush1.msra.mxu0 %v99
    %869 = vmatprep.subr.mxu0 0.0
    %870 = vmatpush1.msra.mxu0 %v98
    %871 = vmatprep.subr.mxu0 0.0
    %872 = vmatpush1.msra.mxu0 %v97
    %873 = vmatprep.subr.mxu0 0.0
    %874 = vmatpush1.msra.mxu0 %v96
    %875 = vmatprep.subr.mxu0 0.0
    %876 = vmatpush2.msra.mxu0 0.0
    %877 = vmatprep.subr.mxu0 0.0
    %878 = vmatpush2.msra.mxu0 0.0
    %879 = vmatprep.subr.mxu0 0.0
    %880 = vmatpush2.msra.mxu0 0.0
    %881 = vmatprep.subr.mxu0 0.0
    %882 = vmatpush2.msra.mxu0 0.0
    %883 = vmatprep.subr.mxu0 0.0
    %884 = vmatpush2.msra.mxu0 0.0
    %885 = vmatprep.subr.mxu0 0.0
    %886 = vmatpush2.msra.mxu0 0.0
    %887 = vmatprep.subr.mxu0 0.0
    %888 = vmatpush2.msra.mxu0 0.0
    %889 = vmatprep.subr.mxu0 0.0
    %890 = vmatpush2.msra.mxu0 0.0
    %891 = vmatprep.subr.mxu0 0.0
    %892 = vmatpush2.msra.mxu0 0.0
    %893 = vmatprep.subr.mxu0 0.0
    %894 = vmatpush2.msra.mxu0 0.0
    %895 = vmatprep.subr.mxu0 0.0
    %896 = vmatpush2.msra.mxu0 0.0
    %897 = vmatprep.subr.mxu0 0.0
    %898 = vmatpush2.msra.mxu0 0.0
    %899 = vmatprep.subr.mxu0 0.0
    %900 = vmatpush2.msra.mxu0 %v115
    %901 = vmatprep.subr.mxu0 0.0
    %902 = vmatpush2.msra.mxu0 %v114
    %903 = vmatprep.subr.mxu0 0.0
    %904 = vmatpush2.msra.mxu0 %v113
    %905 = vmatprep.subr.mxu0 0.0
    %906 = vmatpush2.msra.mxu0 %v112
    %907 = vmatprep.mubr.f32.mxu0 %v839
    %908 = vmatmul.mubr.f32.gmra.mxu0 %v837
    %v909 = vpop.f32.mrf.mxu0
    %v910 = vadd.f32 0.0, %v909
    %v911 = vpop.f32.mrf.mxu0
    %912 = vmatprep.mubr.f32.mxu0 %v841
    %913 = vmatmul.mubr.f32.gmra.mxu0 %v838
    %v914 = vpop.f32.mrf.mxu0
    %v915 = vadd.f32 0.0, %v914
    %v916 = vpop.f32.mrf.mxu0
    %917 = vdwg.mxu0
    %v918 = vmul.f32 %v910, %v417
    %v919 = vmul.f32 %v915, %v417
    %v920 = vadd.f32 %v918, %v426
    %v921 = vadd.f32 %v919, %v426
    %vm922 = vcmp.ge.f32.partialorder %v920, 0.0
    %vm923 = vcmp.ge.f32.partialorder %v921, 0.0
    %v924 = vmul.f32 %v920, %v432
    %v925 = vmul.f32 %v921, %v432
    %v926 = vsel %vm922, %v920, %v924
    %v927 = vsel %vm923, %v921, %v925
    %v929 = vsel %vm327, %v926, 0
    %v932 = vsel %vm327, %v927, 0
    %934 = vmatprep.subr.mxu0 0.0
    %935 = vmatpush1.msra.mxu0 0.0
    %936 = vmatprep.subr.mxu0 0.0
    %937 = vmatpush1.msra.mxu0 0.0
    %938 = vmatprep.subr.mxu0 0.0
    %939 = vmatpush1.msra.mxu0 0.0
    %940 = vmatprep.subr.mxu0 0.0
    %941 = vmatpush1.msra.mxu0 0.0
    %942 = vmatprep.subr.mxu0 0.0
    %943 = vmatpush1.msra.mxu0 0.0
    %944 = vmatprep.subr.mxu0 0.0
    %945 = vmatpush1.msra.mxu0 0.0
    %946 = vmatprep.subr.mxu0 0.0
    %947 = vmatpush1.msra.mxu0 0.0
    %948 = vmatprep.subr.mxu0 0.0
    %949 = vmatpush1.msra.mxu0 0.0
    %950 = vmatprep.subr.mxu0 0.0
    %951 = vmatpush1.msra.mxu0 %v123
    %952 = vmatprep.subr.mxu0 0.0
    %953 = vmatpush1.msra.mxu0 %v122
    %954 = vmatprep.subr.mxu0 0.0
    %955 = vmatpush1.msra.mxu0 %v121
    %956 = vmatprep.subr.mxu0 0.0
    %957 = vmatpush1.msra.mxu0 %v120
    %958 = vmatprep.subr.mxu0 0.0
    %959 = vmatpush1.msra.mxu0 %v119
    %960 = vmatprep.subr.mxu0 0.0
    %961 = vmatpush1.msra.mxu0 %v118
    %962 = vmatprep.subr.mxu0 0.0
    %963 = vmatpush1.msra.mxu0 %v117
    %964 = vmatprep.subr.mxu0 0.0
    %965 = vmatpush1.msra.mxu0 %v116
    %966 = vmatprep.subr.mxu0 0.0
    %967 = vmatpush2.msra.mxu0 0.0
    %968 = vmatprep.subr.mxu0 0.0
    %969 = vmatpush2.msra.mxu0 0.0
    %970 = vmatprep.subr.mxu0 0.0
    %971 = vmatpush2.msra.mxu0 0.0
    %972 = vmatprep.subr.mxu0 0.0
    %973 = vmatpush2.msra.mxu0 0.0
    %974 = vmatprep.subr.mxu0 0.0
    %975 = vmatpush2.msra.mxu0 0.0
    %976 = vmatprep.subr.mxu0 0.0
    %977 = vmatpush2.msra.mxu0 0.0
    %978 = vmatprep.subr.mxu0 0.0
    %979 = vmatpush2.msra.mxu0 0.0
    %980 = vmatprep.subr.mxu0 0.0
    %981 = vmatpush2.msra.mxu0 0.0
    %982 = vmatprep.subr.mxu0 0.0
    %983 = vmatpush2.msra.mxu0 0.0
    %984 = vmatprep.subr.mxu0 0.0
    %985 = vmatpush2.msra.mxu0 0.0
    %986 = vmatprep.subr.mxu0 0.0
    %987 = vmatpush2.msra.mxu0 0.0
    %988 = vmatprep.subr.mxu0 0.0
    %989 = vmatpush2.msra.mxu0 0.0
    %990 = vmatprep.subr.mxu0 0.0
    %991 = vmatpush2.msra.mxu0 0.0
    %992 = vmatprep.subr.mxu0 0.0
    %993 = vmatpush2.msra.mxu0 0.0
    %994 = vmatprep.subr.mxu0 0.0
    %995 = vmatpush2.msra.mxu0 0.0
    %996 = vmatprep.subr.mxu0 0.0
    %997 = vmatpush2.msra.mxu0 0.0
    %998 = vmatprep.mubr.f32.mxu0 0.0
    %999 = vmatmul.mubr.f32.gmra.mxu0 %v929
    %v1000 = vpop.f32.mrf.mxu0
    %v1001 = vadd.f32 %v442, %v1000
    %v1002 = vpop.f32.mrf.mxu0
    %1003 = vmatprep.mubr.f32.mxu0 0.0
    %1004 = vmatmul.mubr.f32.gmra.mxu0 %v932
    %v1005 = vpop.f32.mrf.mxu0
    %v1006 = vadd.f32 %v442, %v1005
    %v1007 = vpop.f32.mrf.mxu0
    %1008 = vdwg.mxu0
    %1009 = vmatprep.subr.mxu0 0.0
    %1010 = vmatpush1.msra.mxu0 0.0
    %1011 = vmatprep.subr.mxu0 0.0
    %1012 = vmatpush1.msra.mxu0 0.0
    %1013 = vmatprep.subr.mxu0 0.0
    %1014 = vmatpush1.msra.mxu0 0.0
    %1015 = vmatprep.subr.mxu0 0.0
    %1016 = vmatpush1.msra.mxu0 0.0
    %1017 = vmatprep.subr.mxu0 0.0
    %1018 = vmatpush1.msra.mxu0 0.0
    %1019 = vmatprep.subr.mxu0 0.0
    %1020 = vmatpush1.msra.mxu0 0.0
    %1021 = vmatprep.subr.mxu0 0.0
    %1022 = vmatpush1.msra.mxu0 0.0
    %1023 = vmatprep.subr.mxu0 0.0
    %1024 = vmatpush1.msra.mxu0 0.0
    %1025 = vmatprep.subr.mxu0 0.0
    %1026 = vmatpush1.msra.mxu0 %v131
    %1027 = vmatprep.subr.mxu0 0.0
    %1028 = vmatpush1.msra.mxu0 %v130
    %1029 = vmatprep.subr.mxu0 0.0
    %1030 = vmatpush1.msra.mxu0 %v129
    %1031 = vmatprep.subr.mxu0 0.0
    %1032 = vmatpush1.msra.mxu0 %v128
    %1033 = vmatprep.subr.mxu0 0.0
    %1034 = vmatpush1.msra.mxu0 %v127
    %1035 = vmatprep.subr.mxu0 0.0
    %1036 = vmatpush1.msra.mxu0 %v126
    %1037 = vmatprep.subr.mxu0 0.0
    %1038 = vmatpush1.msra.mxu0 %v125
    %1039 = vmatprep.subr.mxu0 0.0
    %1040 = vmatpush1.msra.mxu0 %v124
    %1041 = vmatprep.subr.mxu0 0.0
    %1042 = vmatpush2.msra.mxu0 0.0
    %1043 = vmatprep.subr.mxu0 0.0
    %1044 = vmatpush2.msra.mxu0 0.0
    %1045 = vmatprep.subr.mxu0 0.0
    %1046 = vmatpush2.msra.mxu0 0.0
    %1047 = vmatprep.subr.mxu0 0.0
    %1048 = vmatpush2.msra.mxu0 0.0
    %1049 = vmatprep.subr.mxu0 0.0
    %1050 = vmatpush2.msra.mxu0 0.0
    %1051 = vmatprep.subr.mxu0 0.0
    %1052 = vmatpush2.msra.mxu0 0.0
    %1053 = vmatprep.subr.mxu0 0.0
    %1054 = vmatpush2.msra.mxu0 0.0
    %1055 = vmatprep.subr.mxu0 0.0
    %1056 = vmatpush2.msra.mxu0 0.0
    %1057 = vmatprep.subr.mxu0 0.0
    %1058 = vmatpush2.msra.mxu0 0.0
    %1059 = vmatprep.subr.mxu0 0.0
    %1060 = vmatpush2.msra.mxu0 0.0
    %1061 = vmatprep.subr.mxu0 0.0
    %1062 = vmatpush2.msra.mxu0 0.0
    %1063 = vmatprep.subr.mxu0 0.0
    %1064 = vmatpush2.msra.mxu0 0.0
    %1065 = vmatprep.subr.mxu0 0.0
    %1066 = vmatpush2.msra.mxu0 0.0
    %1067 = vmatprep.subr.mxu0 0.0
    %1068 = vmatpush2.msra.mxu0 0.0
    %1069 = vmatprep.subr.mxu0 0.0
    %1070 = vmatpush2.msra.mxu0 0.0
    %1071 = vmatprep.subr.mxu0 0.0
    %1072 = vmatpush2.msra.mxu0 0.0
    %1073 = vmatprep.mubr.f32.mxu0 0.0
    %1074 = vmatmul.mubr.f32.gmra.mxu0 %v929
    %v1075 = vpop.f32.mrf.mxu0
    %v1076 = vadd.f32 %v530, %v1075
    %v1077 = vpop.f32.mrf.mxu0
    %1078 = vmatprep.mubr.f32.mxu0 0.0
    %1079 = vmatmul.mubr.f32.gmra.mxu0 %v932
    %v1080 = vpop.f32.mrf.mxu0
    %v1081 = vadd.f32 %v530, %v1080
    %v1082 = vpop.f32.mrf.mxu0
    %1083 = vdwg.mxu0
    %1084 = vmatprep.subr.mxu0 0.0
    %1085 = vmatpush1.msra.mxu0 0.0
    %1086 = vmatprep.subr.mxu0 0.0
    %1087 = vmatpush1.msra.mxu0 0.0
    %1088 = vmatprep.subr.mxu0 0.0
    %1089 = vmatpush1.msra.mxu0 0.0
    %1090 = vmatprep.subr.mxu0 0.0
    %1091 = vmatpush1.msra.mxu0 0.0
    %1092 = vmatprep.subr.mxu0 0.0
    %1093 = vmatpush1.msra.mxu0 0.0
    %1094 = vmatprep.subr.mxu0 0.0
    %1095 = vmatpush1.msra.mxu0 0.0
    %1096 = vmatprep.subr.mxu0 0.0
    %1097 = vmatpush1.msra.mxu0 0.0
    %1098 = vmatprep.subr.mxu0 0.0
    %1099 = vmatpush1.msra.mxu0 0.0
    %1100 = vmatprep.subr.mxu0 0.0
    %1101 = vmatpush1.msra.mxu0 %v139
    %1102 = vmatprep.subr.mxu0 0.0
    %1103 = vmatpush1.msra.mxu0 %v138
    %1104 = vmatprep.subr.mxu0 0.0
    %1105 = vmatpush1.msra.mxu0 %v137
    %1106 = vmatprep.subr.mxu0 0.0
    %1107 = vmatpush1.msra.mxu0 %v136
    %1108 = vmatprep.subr.mxu0 0.0
    %1109 = vmatpush1.msra.mxu0 %v135
    %1110 = vmatprep.subr.mxu0 0.0
    %1111 = vmatpush1.msra.mxu0 %v134
    %1112 = vmatprep.subr.mxu0 0.0
    %1113 = vmatpush1.msra.mxu0 %v133
    %1114 = vmatprep.subr.mxu0 0.0
    %1115 = vmatpush1.msra.mxu0 %v132
    %1116 = vmatprep.subr.mxu0 0.0
    %1117 = vmatpush2.msra.mxu0 0.0
    %1118 = vmatprep.subr.mxu0 0.0
    %1119 = vmatpush2.msra.mxu0 0.0
    %1120 = vmatprep.subr.mxu0 0.0
    %1121 = vmatpush2.msra.mxu0 0.0
    %1122 = vmatprep.subr.mxu0 0.0
    %1123 = vmatpush2.msra.mxu0 0.0
    %1124 = vmatprep.subr.mxu0 0.0
    %1125 = vmatpush2.msra.mxu0 0.0
    %1126 = vmatprep.subr.mxu0 0.0
    %1127 = vmatpush2.msra.mxu0 0.0
    %1128 = vmatprep.subr.mxu0 0.0
    %1129 = vmatpush2.msra.mxu0 0.0
    %1130 = vmatprep.subr.mxu0 0.0
    %1131 = vmatpush2.msra.mxu0 0.0
    %1132 = vmatprep.subr.mxu0 0.0
    %1133 = vmatpush2.msra.mxu0 0.0
    %1134 = vmatprep.subr.mxu0 0.0
    %1135 = vmatpush2.msra.mxu0 0.0
    %1136 = vmatprep.subr.mxu0 0.0
    %1137 = vmatpush2.msra.mxu0 0.0
    %1138 = vmatprep.subr.mxu0 0.0
    %1139 = vmatpush2.msra.mxu0 0.0
    %1140 = vmatprep.subr.mxu0 0.0
    %1141 = vmatpush2.msra.mxu0 0.0
    %1142 = vmatprep.subr.mxu0 0.0
    %1143 = vmatpush2.msra.mxu0 0.0
    %1144 = vmatprep.subr.mxu0 0.0
    %1145 = vmatpush2.msra.mxu0 0.0
    %1146 = vmatprep.subr.mxu0 0.0
    %1147 = vmatpush2.msra.mxu0 0.0
    %1148 = vmatprep.mubr.f32.mxu0 0.0
    %1149 = vmatmul.mubr.f32.gmra.mxu0 %v929
    %v1150 = vpop.f32.mrf.mxu0
    %v1151 = vadd.f32 %v612, %v1150
    %v1152 = vpop.f32.mrf.mxu0
    %1153 = vmatprep.mubr.f32.mxu0 0.0
    %1154 = vmatmul.mubr.f32.gmra.mxu0 %v932
    %v1155 = vpop.f32.mrf.mxu0
    %v1156 = vadd.f32 %v612, %v1155
    %v1157 = vpop.f32.mrf.mxu0
    %1158 = vdwg.mxu0
    %v1159 = vmul.f32 %v517, %v599
    %v1160 = vmul.f32 %v522, %v604
    %v1162 = vsel %vm327, %v1159, 0
    %v1165 = vsel %vm327, %v1160, 0
    %1167 = vmatprep.subr.mxu0 0.0
    %1168 = vmatpush1.msra.mxu0 0.0
    %1169 = vmatprep.subr.mxu0 0.0
    %1170 = vmatpush1.msra.mxu0 0.0
    %1171 = vmatprep.subr.mxu0 0.0
    %1172 = vmatpush1.msra.mxu0 0.0
    %1173 = vmatprep.subr.mxu0 0.0
    %1174 = vmatpush1.msra.mxu0 0.0
    %1175 = vmatprep.subr.mxu0 0.0
    %1176 = vmatpush1.msra.mxu0 0.0
    %1177 = vmatprep.subr.mxu0 0.0
    %1178 = vmatpush1.msra.mxu0 0.0
    %1179 = vmatprep.subr.mxu0 0.0
    %1180 = vmatpush1.msra.mxu0 0.0
    %1181 = vmatprep.subr.mxu0 0.0
    %1182 = vmatpush1.msra.mxu0 0.0
    %1183 = vmatprep.subr.mxu0 0.0
    %1184 = vmatpush1.msra.mxu0 %v155
    %1185 = vmatprep.subr.mxu0 0.0
    %1186 = vmatpush1.msra.mxu0 %v154
    %1187 = vmatprep.subr.mxu0 0.0
    %1188 = vmatpush1.msra.mxu0 %v153
    %1189 = vmatprep.subr.mxu0 0.0
    %1190 = vmatpush1.msra.mxu0 %v152
    %1191 = vmatprep.subr.mxu0 0.0
    %1192 = vmatpush1.msra.mxu0 %v151
    %1193 = vmatprep.subr.mxu0 0.0
    %1194 = vmatpush1.msra.mxu0 %v150
    %1195 = vmatprep.subr.mxu0 0.0
    %1196 = vmatpush1.msra.mxu0 %v149
    %1197 = vmatprep.subr.mxu0 0.0
    %1198 = vmatpush1.msra.mxu0 %v148
    %1199 = vmatprep.subr.mxu0 0.0
    %1200 = vmatpush2.msra.mxu0 0.0
    %1201 = vmatprep.subr.mxu0 0.0
    %1202 = vmatpush2.msra.mxu0 0.0
    %1203 = vmatprep.subr.mxu0 0.0
    %1204 = vmatpush2.msra.mxu0 0.0
    %1205 = vmatprep.subr.mxu0 0.0
    %1206 = vmatpush2.msra.mxu0 0.0
    %1207 = vmatprep.subr.mxu0 0.0
    %1208 = vmatpush2.msra.mxu0 0.0
    %1209 = vmatprep.subr.mxu0 0.0
    %1210 = vmatpush2.msra.mxu0 0.0
    %1211 = vmatprep.subr.mxu0 0.0
    %1212 = vmatpush2.msra.mxu0 0.0
    %1213 = vmatprep.subr.mxu0 0.0
    %1214 = vmatpush2.msra.mxu0 0.0
    %1215 = vmatprep.subr.mxu0 0.0
    %1216 = vmatpush2.msra.mxu0 0.0
    %1217 = vmatprep.subr.mxu0 0.0
    %1218 = vmatpush2.msra.mxu0 0.0
    %1219 = vmatprep.subr.mxu0 0.0
    %1220 = vmatpush2.msra.mxu0 0.0
    %1221 = vmatprep.subr.mxu0 0.0
    %1222 = vmatpush2.msra.mxu0 0.0
    %1223 = vmatprep.subr.mxu0 0.0
    %1224 = vmatpush2.msra.mxu0 0.0
    %1225 = vmatprep.subr.mxu0 0.0
    %1226 = vmatpush2.msra.mxu0 0.0
    %1227 = vmatprep.subr.mxu0 0.0
    %1228 = vmatpush2.msra.mxu0 0.0
    %1229 = vmatprep.subr.mxu0 0.0
    %1230 = vmatpush2.msra.mxu0 0.0
    %1231 = vmatprep.mubr.f32.mxu0 0.0
    %1232 = vmatmul.mubr.f32.gmra.mxu0 %v1162
    %v1233 = vpop.f32.mrf.mxu0
    %v1234 = vadd.f32 0.0, %v1233
    %v1235 = vpop.f32.mrf.mxu0
    %1236 = vmatprep.mubr.f32.mxu0 0.0
    %1237 = vmatmul.mubr.f32.gmra.mxu0 %v1165
    %v1238 = vpop.f32.mrf.mxu0
    %v1239 = vadd.f32 0.0, %v1238
    %v1240 = vpop.f32.mrf.mxu0
    %1241 = vdwg.mxu0
    %v1242 = vmul.f32 %v517, %v1076
    %v1243 = vmul.f32 %v522, %v1081
    %v1245 = vsel %vm327, %v1242, 0
    %v1248 = vsel %vm327, %v1243, 0
    %1250 = vmatprep.subr.mxu0 0.0
    %1251 = vmatpush1.msra.mxu0 0.0
    %1252 = vmatprep.subr.mxu0 0.0
    %1253 = vmatpush1.msra.mxu0 0.0
    %1254 = vmatprep.subr.mxu0 0.0
    %1255 = vmatpush1.msra.mxu0 0.0
    %1256 = vmatprep.subr.mxu0 0.0
    %1257 = vmatpush1.msra.mxu0 0.0
    %1258 = vmatprep.subr.mxu0 0.0
    %1259 = vmatpush1.msra.mxu0 0.0
    %1260 = vmatprep.subr.mxu0 0.0
    %1261 = vmatpush1.msra.mxu0 0.0
    %1262 = vmatprep.subr.mxu0 0.0
    %1263 = vmatpush1.msra.mxu0 0.0
    %1264 = vmatprep.subr.mxu0 0.0
    %1265 = vmatpush1.msra.mxu0 0.0
    %1266 = vmatprep.subr.mxu0 0.0
    %1267 = vmatpush1.msra.mxu0 %v155
    %1268 = vmatprep.subr.mxu0 0.0
    %1269 = vmatpush1.msra.mxu0 %v154
    %1270 = vmatprep.subr.mxu0 0.0
    %1271 = vmatpush1.msra.mxu0 %v153
    %1272 = vmatprep.subr.mxu0 0.0
    %1273 = vmatpush1.msra.mxu0 %v152
    %1274 = vmatprep.subr.mxu0 0.0
    %1275 = vmatpush1.msra.mxu0 %v151
    %1276 = vmatprep.subr.mxu0 0.0
    %1277 = vmatpush1.msra.mxu0 %v150
    %1278 = vmatprep.subr.mxu0 0.0
    %1279 = vmatpush1.msra.mxu0 %v149
    %1280 = vmatprep.subr.mxu0 0.0
    %1281 = vmatpush1.msra.mxu0 %v148
    %1282 = vmatprep.subr.mxu0 0.0
    %1283 = vmatpush2.msra.mxu0 0.0
    %1284 = vmatprep.subr.mxu0 0.0
    %1285 = vmatpush2.msra.mxu0 0.0
    %1286 = vmatprep.subr.mxu0 0.0
    %1287 = vmatpush2.msra.mxu0 0.0
    %1288 = vmatprep.subr.mxu0 0.0
    %1289 = vmatpush2.msra.mxu0 0.0
    %1290 = vmatprep.subr.mxu0 0.0
    %1291 = vmatpush2.msra.mxu0 0.0
    %1292 = vmatprep.subr.mxu0 0.0
    %1293 = vmatpush2.msra.mxu0 0.0
    %1294 = vmatprep.subr.mxu0 0.0
    %1295 = vmatpush2.msra.mxu0 0.0
    %1296 = vmatprep.subr.mxu0 0.0
    %1297 = vmatpush2.msra.mxu0 0.0
    %1298 = vmatprep.subr.mxu0 0.0
    %1299 = vmatpush2.msra.mxu0 0.0
    %1300 = vmatprep.subr.mxu0 0.0
    %1301 = vmatpush2.msra.mxu0 0.0
    %1302 = vmatprep.subr.mxu0 0.0
    %1303 = vmatpush2.msra.mxu0 0.0
    %1304 = vmatprep.subr.mxu0 0.0
    %1305 = vmatpush2.msra.mxu0 0.0
    %1306 = vmatprep.subr.mxu0 0.0
    %1307 = vmatpush2.msra.mxu0 0.0
    %1308 = vmatprep.subr.mxu0 0.0
    %1309 = vmatpush2.msra.mxu0 0.0
    %1310 = vmatprep.subr.mxu0 0.0
    %1311 = vmatpush2.msra.mxu0 0.0
    %1312 = vmatprep.subr.mxu0 0.0
    %1313 = vmatpush2.msra.mxu0 0.0
    %1314 = vmatprep.mubr.f32.mxu0 0.0
    %1315 = vmatmul.mubr.f32.gmra.mxu0 %v1245
    %v1316 = vpop.f32.mrf.mxu0
    %v1317 = vadd.f32 0.0, %v1316
    %v1318 = vpop.f32.mrf.mxu0
    %1319 = vmatprep.mubr.f32.mxu0 0.0
    %1320 = vmatmul.mubr.f32.gmra.mxu0 %v1248
    %v1321 = vpop.f32.mrf.mxu0
    %v1322 = vadd.f32 0.0, %v1321
    %v1323 = vpop.f32.mrf.mxu0
    %1324 = vdwg.mxu0
    %v1325 = vmul.f32 %v1001, %v599
    %v1326 = vmul.f32 %v1006, %v604
    %v1328 = vsel %vm327, %v1325, 0
    %v1331 = vsel %vm327, %v1326, 0
    %1333 = vmatprep.subr.mxu0 0.0
    %1334 = vmatpush1.msra.mxu0 0.0
    %1335 = vmatprep.subr.mxu0 0.0
    %1336 = vmatpush1.msra.mxu0 0.0
    %1337 = vmatprep.subr.mxu0 0.0
    %1338 = vmatpush1.msra.mxu0 0.0
    %1339 = vmatprep.subr.mxu0 0.0
    %1340 = vmatpush1.msra.mxu0 0.0
    %1341 = vmatprep.subr.mxu0 0.0
    %1342 = vmatpush1.msra.mxu0 0.0
    %1343 = vmatprep.subr.mxu0 0.0
    %1344 = vmatpush1.msra.mxu0 0.0
    %1345 = vmatprep.subr.mxu0 0.0
    %1346 = vmatpush1.msra.mxu0 0.0
    %1347 = vmatprep.subr.mxu0 0.0
    %1348 = vmatpush1.msra.mxu0 0.0
    %1349 = vmatprep.subr.mxu0 0.0
    %1350 = vmatpush1.msra.mxu0 %v155
    %1351 = vmatprep.subr.mxu0 0.0
    %1352 = vmatpush1.msra.mxu0 %v154
    %1353 = vmatprep.subr.mxu0 0.0
    %1354 = vmatpush1.msra.mxu0 %v153
    %1355 = vmatprep.subr.mxu0 0.0
    %1356 = vmatpush1.msra.mxu0 %v152
    %1357 = vmatprep.subr.mxu0 0.0
    %1358 = vmatpush1.msra.mxu0 %v151
    %1359 = vmatprep.subr.mxu0 0.0
    %1360 = vmatpush1.msra.mxu0 %v150
    %1361 = vmatprep.subr.mxu0 0.0
    %1362 = vmatpush1.msra.mxu0 %v149
    %1363 = vmatprep.subr.mxu0 0.0
    %1364 = vmatpush1.msra.mxu0 %v148
    %1365 = vmatprep.subr.mxu0 0.0
    %1366 = vmatpush2.msra.mxu0 0.0
    %1367 = vmatprep.subr.mxu0 0.0
    %1368 = vmatpush2.msra.mxu0 0.0
    %1369 = vmatprep.subr.mxu0 0.0
    %1370 = vmatpush2.msra.mxu0 0.0
    %1371 = vmatprep.subr.mxu0 0.0
    %1372 = vmatpush2.msra.mxu0 0.0
    %1373 = vmatprep.subr.mxu0 0.0
    %1374 = vmatpush2.msra.mxu0 0.0
    %1375 = vmatprep.subr.mxu0 0.0
    %1376 = vmatpush2.msra.mxu0 0.0
    %1377 = vmatprep.subr.mxu0 0.0
    %1378 = vmatpush2.msra.mxu0 0.0
    %1379 = vmatprep.subr.mxu0 0.0
    %1380 = vmatpush2.msra.mxu0 0.0
    %1381 = vmatprep.subr.mxu0 0.0
    %1382 = vmatpush2.msra.mxu0 0.0
    %1383 = vmatprep.subr.mxu0 0.0
    %1384 = vmatpush2.msra.mxu0 0.0
    %1385 = vmatprep.subr.mxu0 0.0
    %1386 = vmatpush2.msra.mxu0 0.0
    %1387 = vmatprep.subr.mxu0 0.0
    %1388 = vmatpush2.msra.mxu0 0.0
    %1389 = vmatprep.subr.mxu0 0.0
    %1390 = vmatpush2.msra.mxu0 0.0
    %1391 = vmatprep.subr.mxu0 0.0
    %1392 = vmatpush2.msra.mxu0 0.0
    %1393 = vmatprep.subr.mxu0 0.0
    %1394 = vmatpush2.msra.mxu0 0.0
    %1395 = vmatprep.subr.mxu0 0.0
    %1396 = vmatpush2.msra.mxu0 0.0
    %1397 = vmatprep.mubr.f32.mxu0 0.0
    %1398 = vmatmul.mubr.f32.gmra.mxu0 %v1328
    %v1399 = vpop.f32.mrf.mxu0
    %v1400 = vadd.f32 0.0, %v1399
    %v1401 = vpop.f32.mrf.mxu0
    %1402 = vmatprep.mubr.f32.mxu0 0.0
    %1403 = vmatmul.mubr.f32.gmra.mxu0 %v1331
    %v1404 = vpop.f32.mrf.mxu0
    %v1405 = vadd.f32 0.0, %v1404
    %v1406 = vpop.f32.mrf.mxu0
    %1407 = vdwg.mxu0
    %v1408 = vmul.f32 %v1001, %v1076
    %v1409 = vmul.f32 %v1006, %v1081
    %v1411 = vsel %vm327, %v1408, 0
    %v1414 = vsel %vm327, %v1409, 0
    %1416 = vmatprep.subr.mxu0 0.0
    %1417 = vmatpush1.msra.mxu0 0.0
    %1418 = vmatprep.subr.mxu0 0.0
    %1419 = vmatpush1.msra.mxu0 0.0
    %1420 = vmatprep.subr.mxu0 0.0
    %1421 = vmatpush1.msra.mxu0 0.0
    %1422 = vmatprep.subr.mxu0 0.0
    %1423 = vmatpush1.msra.mxu0 0.0
    %1424 = vmatprep.subr.mxu0 0.0
    %1425 = vmatpush1.msra.mxu0 0.0
    %1426 = vmatprep.subr.mxu0 0.0
    %1427 = vmatpush1.msra.mxu0 0.0
    %1428 = vmatprep.subr.mxu0 0.0
    %1429 = vmatpush1.msra.mxu0 0.0
    %1430 = vmatprep.subr.mxu0 0.0
    %1431 = vmatpush1.msra.mxu0 0.0
    %1432 = vmatprep.subr.mxu0 0.0
    %1433 = vmatpush1.msra.mxu0 %v155
    %1434 = vmatprep.subr.mxu0 0.0
    %1435 = vmatpush1.msra.mxu0 %v154
    %1436 = vmatprep.subr.mxu0 0.0
    %1437 = vmatpush1.msra.mxu0 %v153
    %1438 = vmatprep.subr.mxu0 0.0
    %1439 = vmatpush1.msra.mxu0 %v152
    %1440 = vmatprep.subr.mxu0 0.0
    %1441 = vmatpush1.msra.mxu0 %v151
    %1442 = vmatprep.subr.mxu0 0.0
    %1443 = vmatpush1.msra.mxu0 %v150
    %1444 = vmatprep.subr.mxu0 0.0
    %1445 = vmatpush1.msra.mxu0 %v149
    %1446 = vmatprep.subr.mxu0 0.0
    %1447 = vmatpush1.msra.mxu0 %v148
    %1448 = vmatprep.subr.mxu0 0.0
    %1449 = vmatpush2.msra.mxu0 0.0
    %1450 = vmatprep.subr.mxu0 0.0
    %1451 = vmatpush2.msra.mxu0 0.0
    %1452 = vmatprep.subr.mxu0 0.0
    %1453 = vmatpush2.msra.mxu0 0.0
    %1454 = vmatprep.subr.mxu0 0.0
    %1455 = vmatpush2.msra.mxu0 0.0
    %1456 = vmatprep.subr.mxu0 0.0
    %1457 = vmatpush2.msra.mxu0 0.0
    %1458 = vmatprep.subr.mxu0 0.0
    %1459 = vmatpush2.msra.mxu0 0.0
    %1460 = vmatprep.subr.mxu0 0.0
    %1461 = vmatpush2.msra.mxu0 0.0
    %1462 = vmatprep.subr.mxu0 0.0
    %1463 = vmatpush2.msra.mxu0 0.0
    %1464 = vmatprep.subr.mxu0 0.0
    %1465 = vmatpush2.msra.mxu0 0.0
    %1466 = vmatprep.subr.mxu0 0.0
    %1467 = vmatpush2.msra.mxu0 0.0
    %1468 = vmatprep.subr.mxu0 0.0
    %1469 = vmatpush2.msra.mxu0 0.0
    %1470 = vmatprep.subr.mxu0 0.0
    %1471 = vmatpush2.msra.mxu0 0.0
    %1472 = vmatprep.subr.mxu0 0.0
    %1473 = vmatpush2.msra.mxu0 0.0
    %1474 = vmatprep.subr.mxu0 0.0
    %1475 = vmatpush2.msra.mxu0 0.0
    %1476 = vmatprep.subr.mxu0 0.0
    %1477 = vmatpush2.msra.mxu0 0.0
    %1478 = vmatprep.subr.mxu0 0.0
    %1479 = vmatpush2.msra.mxu0 0.0
    %1480 = vmatprep.mubr.f32.mxu0 0.0
    %1481 = vmatmul.mubr.f32.gmra.mxu0 %v1411
    %v1482 = vpop.f32.mrf.mxu0
    %v1483 = vadd.f32 0.0, %v1482
    %v1484 = vpop.f32.mrf.mxu0
    %1485 = vmatprep.mubr.f32.mxu0 0.0
    %1486 = vmatmul.mubr.f32.gmra.mxu0 %v1414
    %v1487 = vpop.f32.mrf.mxu0
    %v1488 = vadd.f32 0.0, %v1487
    %v1489 = vpop.f32.mrf.mxu0
    %1490 = vdwg.mxu0
    %v1491 = vmax.f32 %v1234, %v1317
    %v1492 = vmax.f32 %v1239, %v1322
    %v1493 = vsub.f32 %v1234, %v1491
    %v1494 = vsub.f32 %v1239, %v1492
    %v1495 = vmul.f32 %v1493, 1.442695
    %v1496 = vpow.pop %v1495
    %v1497 = vmul.f32 %v1494, 1.442695
    %v1498 = vpow.pop %v1497
    %v1499 = vsub.f32 %v1317, %v1491
    %v1500 = vsub.f32 %v1322, %v1492
    %v1501 = vmul.f32 %v1499, 1.442695
    %v1502 = vpow.pop %v1501
    %v1503 = vmul.f32 %v1500, 1.442695
    %v1504 = vpow.pop %v1503
    %v1505 = vadd.f32 %v1496, %v1502
    %v1506 = vadd.f32 %v1498, %v1504
    %v1507 = vrcp.pop %v1505
    %v1508 = vmul.f32 1.0, %v1507
    %v1509 = vrcp.pop %v1506
    %v1510 = vmul.f32 1.0, %v1509
    %v1511 = vmul.f32 %v1496, %v1508
    %v1512 = vmul.f32 %v1498, %v1510
    %vm1513 = vcmask 31744
    %v1515 = vsel %vm1513, %v1511, 0
    %v1518 = vsel %vm1513, %v1512, 0
    %v1521 = vsel %vm166, %v156, 0
    %1523 = vmatprep.subr.mxu0 0.0
    %1524 = vmatpush1.msra.mxu0 0.0
    %1525 = vmatprep.subr.mxu0 0.0
    %1526 = vmatpush1.msra.mxu0 0.0
    %1527 = vmatprep.subr.mxu0 0.0
    %1528 = vmatpush1.msra.mxu0 0.0
    %1529 = vmatprep.subr.mxu0 0.0
    %1530 = vmatpush1.msra.mxu0 0.0
    %1531 = vmatprep.subr.mxu0 0.0
    %1532 = vmatpush1.msra.mxu0 0.0
    %1533 = vmatprep.subr.mxu0 0.0
    %1534 = vmatpush1.msra.mxu0 0.0
    %1535 = vmatprep.subr.mxu0 0.0
    %1536 = vmatpush1.msra.mxu0 0.0
    %1537 = vmatprep.subr.mxu0 0.0
    %1538 = vmatpush1.msra.mxu0 0.0
    %1539 = vmatprep.subr.mxu0 0.0
    %1540 = vmatpush1.msra.mxu0 0.0
    %1541 = vmatprep.subr.mxu0 0.0
    %1542 = vmatpush1.msra.mxu0 0.0
    %1543 = vmatprep.subr.mxu0 0.0
    %1544 = vmatpush1.msra.mxu0 0.0
    %1545 = vmatprep.subr.mxu0 0.0
    %1546 = vmatpush1.msra.mxu0 0.0
    %1547 = vmatprep.subr.mxu0 0.0
    %1548 = vmatpush1.msra.mxu0 0.0
    %1549 = vmatprep.subr.mxu0 0.0
    %1550 = vmatpush1.msra.mxu0 0.0
    %1551 = vmatprep.subr.mxu0 0.0
    %1552 = vmatpush1.msra.mxu0 0.0
    %1553 = vmatprep.subr.mxu0 0.0
    %1554 = vmatpush1.msra.mxu0 %v1521
    %1555 = vmatprep.subr.mxu0 0.0
    %1556 = vmatpush2.msra.mxu0 0.0
    %1557 = vmatprep.subr.mxu0 0.0
    %1558 = vmatpush2.msra.mxu0 0.0
    %1559 = vmatprep.subr.mxu0 0.0
    %1560 = vmatpush2.msra.mxu0 0.0
    %1561 = vmatprep.subr.mxu0 0.0
    %1562 = vmatpush2.msra.mxu0 0.0
    %1563 = vmatprep.subr.mxu0 0.0
    %1564 = vmatpush2.msra.mxu0 0.0
    %1565 = vmatprep.subr.mxu0 0.0
    %1566 = vmatpush2.msra.mxu0 0.0
    %1567 = vmatprep.subr.mxu0 0.0
    %1568 = vmatpush2.msra.mxu0 0.0
    %1569 = vmatprep.subr.mxu0 0.0
    %1570 = vmatpush2.msra.mxu0 0.0
    %1571 = vmatprep.subr.mxu0 0.0
    %1572 = vmatpush2.msra.mxu0 0.0
    %1573 = vmatprep.subr.mxu0 0.0
    %1574 = vmatpush2.msra.mxu0 0.0
    %1575 = vmatprep.subr.mxu0 0.0
    %1576 = vmatpush2.msra.mxu0 0.0
    %1577 = vmatprep.subr.mxu0 0.0
    %1578 = vmatpush2.msra.mxu0 0.0
    %1579 = vmatprep.subr.mxu0 0.0
    %1580 = vmatpush2.msra.mxu0 0.0
    %1581 = vmatprep.subr.mxu0 0.0
    %1582 = vmatpush2.msra.mxu0 0.0
    %1583 = vmatprep.subr.mxu0 0.0
    %1584 = vmatpush2.msra.mxu0 0.0
    %1585 = vmatprep.subr.mxu0 0.0
    %1586 = vmatpush2.msra.mxu0 0.0
    %1587 = vmatprep.mubr.f32.mxu0 0.0
    %1588 = vmatmul.mubr.f32.gmra.mxu0 %v1515
    %v1589 = vpop.f32.mrf.mxu0
    %v1590 = vadd.f32 0.0, %v1589
    %v1591 = vpop.f32.mrf.mxu0
    %1592 = vmatprep.mubr.f32.mxu0 0.0
    %1593 = vmatmul.mubr.f32.gmra.mxu0 %v1518
    %v1594 = vpop.f32.mrf.mxu0
    %v1595 = vadd.f32 0.0, %v1594
    %v1596 = vpop.f32.mrf.mxu0
    %1597 = vdwg.mxu0
    %v1598 = vmul.f32 %v1590, %v681
    %v1599 = vmul.f32 %v1595, %v686
    %v1600 = vadd.f32 %v1598, 0.0
    %v1601 = vadd.f32 %v1599, 0.0
    %v1602 = vmul.f32 %v1502, %v1508
    %v1603 = vmul.f32 %v1504, %v1510
    %v1605 = vsel %vm1513, %v1602, 0
    %v1608 = vsel %vm1513, %v1603, 0
    %1610 = vmatprep.subr.mxu0 0.0
    %1611 = vmatpush1.msra.mxu0 0.0
    %1612 = vmatprep.subr.mxu0 0.0
    %1613 = vmatpush1.msra.mxu0 0.0
    %1614 = vmatprep.subr.mxu0 0.0
    %1615 = vmatpush1.msra.mxu0 0.0
    %1616 = vmatprep.subr.mxu0 0.0
    %1617 = vmatpush1.msra.mxu0 0.0
    %1618 = vmatprep.subr.mxu0 0.0
    %1619 = vmatpush1.msra.mxu0 0.0
    %1620 = vmatprep.subr.mxu0 0.0
    %1621 = vmatpush1.msra.mxu0 0.0
    %1622 = vmatprep.subr.mxu0 0.0
    %1623 = vmatpush1.msra.mxu0 0.0
    %1624 = vmatprep.subr.mxu0 0.0
    %1625 = vmatpush1.msra.mxu0 0.0
    %1626 = vmatprep.subr.mxu0 0.0
    %1627 = vmatpush1.msra.mxu0 0.0
    %1628 = vmatprep.subr.mxu0 0.0
    %1629 = vmatpush1.msra.mxu0 0.0
    %1630 = vmatprep.subr.mxu0 0.0
    %1631 = vmatpush1.msra.mxu0 0.0
    %1632 = vmatprep.subr.mxu0 0.0
    %1633 = vmatpush1.msra.mxu0 0.0
    %1634 = vmatprep.subr.mxu0 0.0
    %1635 = vmatpush1.msra.mxu0 0.0
    %1636 = vmatprep.subr.mxu0 0.0
    %1637 = vmatpush1.msra.mxu0 0.0
    %1638 = vmatprep.subr.mxu0 0.0
    %1639 = vmatpush1.msra.mxu0 0.0
    %1640 = vmatprep.subr.mxu0 0.0
    %1641 = vmatpush1.msra.mxu0 %v1521
    %1642 = vmatprep.subr.mxu0 0.0
    %1643 = vmatpush2.msra.mxu0 0.0
    %1644 = vmatprep.subr.mxu0 0.0
    %1645 = vmatpush2.msra.mxu0 0.0
    %1646 = vmatprep.subr.mxu0 0.0
    %1647 = vmatpush2.msra.mxu0 0.0
    %1648 = vmatprep.subr.mxu0 0.0
    %1649 = vmatpush2.msra.mxu0 0.0
    %1650 = vmatprep.subr.mxu0 0.0
    %1651 = vmatpush2.msra.mxu0 0.0
    %1652 = vmatprep.subr.mxu0 0.0
    %1653 = vmatpush2.msra.mxu0 0.0
    %1654 = vmatprep.subr.mxu0 0.0
    %1655 = vmatpush2.msra.mxu0 0.0
    %1656 = vmatprep.subr.mxu0 0.0
    %1657 = vmatpush2.msra.mxu0 0.0
    %1658 = vmatprep.subr.mxu0 0.0
    %1659 = vmatpush2.msra.mxu0 0.0
    %1660 = vmatprep.subr.mxu0 0.0
    %1661 = vmatpush2.msra.mxu0 0.0
    %1662 = vmatprep.subr.mxu0 0.0
    %1663 = vmatpush2.msra.mxu0 0.0
    %1664 = vmatprep.subr.mxu0 0.0
    %1665 = vmatpush2.msra.mxu0 0.0
    %1666 = vmatprep.subr.mxu0 0.0
    %1667 = vmatpush2.msra.mxu0 0.0
    %1668 = vmatprep.subr.mxu0 0.0
    %1669 = vmatpush2.msra.mxu0 0.0
    %1670 = vmatprep.subr.mxu0 0.0
    %1671 = vmatpush2.msra.mxu0 0.0
    %1672 = vmatprep.subr.mxu0 0.0
    %1673 = vmatpush2.msra.mxu0 0.0
    %1674 = vmatprep.mubr.f32.mxu0 0.0
    %1675 = vmatmul.mubr.f32.gmra.mxu0 %v1605
    %v1676 = vpop.f32.mrf.mxu0
    %v1677 = vadd.f32 0.0, %v1676
    %v1678 = vpop.f32.mrf.mxu0
    %1679 = vmatprep.mubr.f32.mxu0 0.0
    %1680 = vmatmul.mubr.f32.gmra.mxu0 %v1608
    %v1681 = vpop.f32.mrf.mxu0
    %v1682 = vadd.f32 0.0, %v1681
    %v1683 = vpop.f32.mrf.mxu0
    %1684 = vdwg.mxu0
    %v1685 = vmul.f32 %v1677, %v1151
    %v1686 = vmul.f32 %v1682, %v1156
    %v1687 = vadd.f32 %v1600, %v1685
    %v1688 = vadd.f32 %v1601, %v1686
    %v1689 = vld [vmem:[%s15] sm:$0x1]
    %v1691 = vlaneseq
    %v1692 = vshrl.u32 %v1691, 7
    %v1693 = vsub.s32 0, %v1692
    %v1694 = vrot.slane %v1689, %v1693
    %v1697 = vsel %vm327, %v1687, 0
    %v1700 = vsel %vm327, %v1688, 0
    %1702 = vmatprep.subr.mxu0 0.0
    %1703 = vmatpush1.msra.mxu0 0.0
    %1704 = vmatprep.subr.mxu0 0.0
    %1705 = vmatpush1.msra.mxu0 0.0
    %1706 = vmatprep.subr.mxu0 0.0
    %1707 = vmatpush1.msra.mxu0 0.0
    %1708 = vmatprep.subr.mxu0 0.0
    %1709 = vmatpush1.msra.mxu0 0.0
    %1710 = vmatprep.subr.mxu0 0.0
    %1711 = vmatpush1.msra.mxu0 0.0
    %1712 = vmatprep.subr.mxu0 0.0
    %1713 = vmatpush1.msra.mxu0 0.0
    %1714 = vmatprep.subr.mxu0 0.0
    %1715 = vmatpush1.msra.mxu0 0.0
    %1716 = vmatprep.subr.mxu0 0.0
    %1717 = vmatpush1.msra.mxu0 0.0
    %1718 = vmatprep.subr.mxu0 0.0
    %1719 = vmatpush1.msra.mxu0 %v147
    %1720 = vmatprep.subr.mxu0 0.0
    %1721 = vmatpush1.msra.mxu0 %v146
    %1722 = vmatprep.subr.mxu0 0.0
    %1723 = vmatpush1.msra.mxu0 %v145
    %1724 = vmatprep.subr.mxu0 0.0
    %1725 = vmatpush1.msra.mxu0 %v144
    %1726 = vmatprep.subr.mxu0 0.0
    %1727 = vmatpush1.msra.mxu0 %v143
    %1728 = vmatprep.subr.mxu0 0.0
    %1729 = vmatpush1.msra.mxu0 %v142
    %1730 = vmatprep.subr.mxu0 0.0
    %1731 = vmatpush1.msra.mxu0 %v141
    %1732 = vmatprep.subr.mxu0 0.0
    %1733 = vmatpush1.msra.mxu0 %v140
    %1734 = vmatprep.subr.mxu0 0.0
    %1735 = vmatpush2.msra.mxu0 0.0
    %1736 = vmatprep.subr.mxu0 0.0
    %1737 = vmatpush2.msra.mxu0 0.0
    %1738 = vmatprep.subr.mxu0 0.0
    %1739 = vmatpush2.msra.mxu0 0.0
    %1740 = vmatprep.subr.mxu0 0.0
    %1741 = vmatpush2.msra.mxu0 0.0
    %1742 = vmatprep.subr.mxu0 0.0
    %1743 = vmatpush2.msra.mxu0 0.0
    %1744 = vmatprep.subr.mxu0 0.0
    %1745 = vmatpush2.msra.mxu0 0.0
    %1746 = vmatprep.subr.mxu0 0.0
    %1747 = vmatpush2.msra.mxu0 0.0
    %1748 = vmatprep.subr.mxu0 0.0
    %1749 = vmatpush2.msra.mxu0 0.0
    %1750 = vmatprep.subr.mxu0 0.0
    %1751 = vmatpush2.msra.mxu0 0.0
    %1752 = vmatprep.subr.mxu0 0.0
    %1753 = vmatpush2.msra.mxu0 0.0
    %1754 = vmatprep.subr.mxu0 0.0
    %1755 = vmatpush2.msra.mxu0 0.0
    %1756 = vmatprep.subr.mxu0 0.0
    %1757 = vmatpush2.msra.mxu0 0.0
    %1758 = vmatprep.subr.mxu0 0.0
    %1759 = vmatpush2.msra.mxu0 0.0
    %1760 = vmatprep.subr.mxu0 0.0
    %1761 = vmatpush2.msra.mxu0 0.0
    %1762 = vmatprep.subr.mxu0 0.0
    %1763 = vmatpush2.msra.mxu0 0.0
    %1764 = vmatprep.subr.mxu0 0.0
    %1765 = vmatpush2.msra.mxu0 0.0
    %1766 = vmatprep.mubr.f32.mxu0 0.0
    %1767 = vmatmul.mubr.f32.gmra.mxu0 %v1697
    %v1768 = vpop.f32.mrf.mxu0
    %v1769 = vadd.f32 %v1694, %v1768
    %v1770 = vpop.f32.mrf.mxu0
    %1771 = vmatprep.mubr.f32.mxu0 0.0
    %1772 = vmatmul.mubr.f32.gmra.mxu0 %v1700
    %v1773 = vpop.f32.mrf.mxu0
    %v1774 = vadd.f32 %v1694, %v1773
    %v1775 = vpop.f32.mrf.mxu0
    %1776 = vdwg.mxu0
    %v1777 = vadd.f32 %v1769, %v435
    %v1778 = vadd.f32 %v1774, %v436
    %v1779 = vsel %vm327, %v1777, 0.0
    %v1780 = vsel %vm327, %v1778, 0.0
    %v1781 = vadd.f32 %v1779, %v1780
    %v1782 = vrot.slane %v1781, 4
    %v1783 = vadd.f32 %v1781, %v1782
    %v1784 = vrot.slane %v1783, 2
    %v1785 = vadd.f32 %v1783, %v1784
    %v1786 = vrot.slane %v1785, 1
    %v1787 = vadd.f32 %v1785, %v1786
    %v1788 = vmul.f32 %v1787, 0.0625
    %v1789 = vmax.f32 %v1400, %v1483
    %v1790 = vmax.f32 %v1405, %v1488
    %v1791 = vsub.f32 %v1400, %v1789
    %v1792 = vsub.f32 %v1405, %v1790
    %v1793 = vmul.f32 %v1791, 1.442695
    %v1794 = vpow.pop %v1793
    %v1795 = vmul.f32 %v1792, 1.442695
    %v1796 = vpow.pop %v1795
    %v1797 = vsub.f32 %v1483, %v1789
    %v1798 = vsub.f32 %v1488, %v1790
    %v1799 = vmul.f32 %v1797, 1.442695
    %v1800 = vpow.pop %v1799
    %v1801 = vmul.f32 %v1798, 1.442695
    %v1802 = vpow.pop %v1801
    %v1803 = vadd.f32 %v1794, %v1800
    %v1804 = vadd.f32 %v1796, %v1802
    %v1805 = vrcp.pop %v1803
    %v1806 = vmul.f32 1.0, %v1805
    %v1807 = vrcp.pop %v1804
    %v1808 = vmul.f32 1.0, %v1807
    %v1809 = vmul.f32 %v1794, %v1806
    %v1810 = vmul.f32 %v1796, %v1808
    %v1812 = vsel %vm1513, %v1809, 0
    %v1815 = vsel %vm1513, %v1810, 0
    %1817 = vmatprep.subr.mxu0 0.0
    %1818 = vmatpush1.msra.mxu0 0.0
    %1819 = vmatprep.subr.mxu0 0.0
    %1820 = vmatpush1.msra.mxu0 0.0
    %1821 = vmatprep.subr.mxu0 0.0
    %1822 = vmatpush1.msra.mxu0 0.0
    %1823 = vmatprep.subr.mxu0 0.0
    %1824 = vmatpush1.msra.mxu0 0.0
    %1825 = vmatprep.subr.mxu0 0.0
    %1826 = vmatpush1.msra.mxu0 0.0
    %1827 = vmatprep.subr.mxu0 0.0
    %1828 = vmatpush1.msra.mxu0 0.0
    %1829 = vmatprep.subr.mxu0 0.0
    %1830 = vmatpush1.msra.mxu0 0.0
    %1831 = vmatprep.subr.mxu0 0.0
    %1832 = vmatpush1.msra.mxu0 0.0
    %1833 = vmatprep.subr.mxu0 0.0
    %1834 = vmatpush1.msra.mxu0 0.0
    %1835 = vmatprep.subr.mxu0 0.0
    %1836 = vmatpush1.msra.mxu0 0.0
    %1837 = vmatprep.subr.mxu0 0.0
    %1838 = vmatpush1.msra.mxu0 0.0
    %1839 = vmatprep.subr.mxu0 0.0
    %1840 = vmatpush1.msra.mxu0 0.0
    %1841 = vmatprep.subr.mxu0 0.0
    %1842 = vmatpush1.msra.mxu0 0.0
    %1843 = vmatprep.subr.mxu0 0.0
    %1844 = vmatpush1.msra.mxu0 0.0
    %1845 = vmatprep.subr.mxu0 0.0
    %1846 = vmatpush1.msra.mxu0 0.0
    %1847 = vmatprep.subr.mxu0 0.0
    %1848 = vmatpush1.msra.mxu0 %v1521
    %1849 = vmatprep.subr.mxu0 0.0
    %1850 = vmatpush2.msra.mxu0 0.0
    %1851 = vmatprep.subr.mxu0 0.0
    %1852 = vmatpush2.msra.mxu0 0.0
    %1853 = vmatprep.subr.mxu0 0.0
    %1854 = vmatpush2.msra.mxu0 0.0
    %1855 = vmatprep.subr.mxu0 0.0
    %1856 = vmatpush2.msra.mxu0 0.0
    %1857 = vmatprep.subr.mxu0 0.0
    %1858 = vmatpush2.msra.mxu0 0.0
    %1859 = vmatprep.subr.mxu0 0.0
    %1860 = vmatpush2.msra.mxu0 0.0
    %1861 = vmatprep.subr.mxu0 0.0
    %1862 = vmatpush2.msra.mxu0 0.0
    %1863 = vmatprep.subr.mxu0 0.0
    %1864 = vmatpush2.msra.mxu0 0.0
    %1865 = vmatprep.subr.mxu0 0.0
    %1866 = vmatpush2.msra.mxu0 0.0
    %1867 = vmatprep.subr.mxu0 0.0
    %1868 = vmatpush2.msra.mxu0 0.0
    %1869 = vmatprep.subr.mxu0 0.0
    %1870 = vmatpush2.msra.mxu0 0.0
    %1871 = vmatprep.subr.mxu0 0.0
    %1872 = vmatpush2.msra.mxu0 0.0
    %1873 = vmatprep.subr.mxu0 0.0
    %1874 = vmatpush2.msra.mxu0 0.0
    %1875 = vmatprep.subr.mxu0 0.0
    %1876 = vmatpush2.msra.mxu0 0.0
    %1877 = vmatprep.subr.mxu0 0.0
    %1878 = vmatpush2.msra.mxu0 0.0
    %1879 = vmatprep.subr.mxu0 0.0
    %1880 = vmatpush2.msra.mxu0 0.0
    %1881 = vmatprep.mubr.f32.mxu0 0.0
    %1882 = vmatmul.mubr.f32.gmra.mxu0 %v1812
    %v1883 = vpop.f32.mrf.mxu0
    %v1884 = vadd.f32 0.0, %v1883
    %v1885 = vpop.f32.mrf.mxu0
    %1886 = vmatprep.mubr.f32.mxu0 0.0
    %1887 = vmatmul.mubr.f32.gmra.mxu0 %v1815
    %v1888 = vpop.f32.mrf.mxu0
    %v1889 = vadd.f32 0.0, %v1888
    %v1890 = vpop.f32.mrf.mxu0
    %1891 = vdwg.mxu0
    %v1892 = vmul.f32 %v1884, %v681
    %v1893 = vmul.f32 %v1889, %v686
    %v1894 = vadd.f32 %v1892, 0.0
    %v1895 = vadd.f32 %v1893, 0.0
    %v1896 = vmul.f32 %v1800, %v1806
    %v1897 = vmul.f32 %v1802, %v1808
    %v1899 = vsel %vm1513, %v1896, 0
    %v1902 = vsel %vm1513, %v1897, 0
    %1904 = vmatprep.subr.mxu0 0.0
    %1905 = vmatpush1.msra.mxu0 0.0
    %1906 = vmatprep.subr.mxu0 0.0
    %1907 = vmatpush1.msra.mxu0 0.0
    %1908 = vmatprep.subr.mxu0 0.0
    %1909 = vmatpush1.msra.mxu0 0.0
    %1910 = vmatprep.subr.mxu0 0.0
    %1911 = vmatpush1.msra.mxu0 0.0
    %1912 = vmatprep.subr.mxu0 0.0
    %1913 = vmatpush1.msra.mxu0 0.0
    %1914 = vmatprep.subr.mxu0 0.0
    %1915 = vmatpush1.msra.mxu0 0.0
    %1916 = vmatprep.subr.mxu0 0.0
    %1917 = vmatpush1.msra.mxu0 0.0
    %1918 = vmatprep.subr.mxu0 0.0
    %1919 = vmatpush1.msra.mxu0 0.0
    %1920 = vmatprep.subr.mxu0 0.0
    %1921 = vmatpush1.msra.mxu0 0.0
    %1922 = vmatprep.subr.mxu0 0.0
    %1923 = vmatpush1.msra.mxu0 0.0
    %1924 = vmatprep.subr.mxu0 0.0
    %1925 = vmatpush1.msra.mxu0 0.0
    %1926 = vmatprep.subr.mxu0 0.0
    %1927 = vmatpush1.msra.mxu0 0.0
    %1928 = vmatprep.subr.mxu0 0.0
    %1929 = vmatpush1.msra.mxu0 0.0
    %1930 = vmatprep.subr.mxu0 0.0
    %1931 = vmatpush1.msra.mxu0 0.0
    %1932 = vmatprep.subr.mxu0 0.0
    %1933 = vmatpush1.msra.mxu0 0.0
    %1934 = vmatprep.subr.mxu0 0.0
    %1935 = vmatpush1.msra.mxu0 %v1521
    %1936 = vmatprep.subr.mxu0 0.0
    %1937 = vmatpush2.msra.mxu0 0.0
    %1938 = vmatprep.subr.mxu0 0.0
    %1939 = vmatpush2.msra.mxu0 0.0
    %1940 = vmatprep.subr.mxu0 0.0
    %1941 = vmatpush2.msra.mxu0 0.0
    %1942 = vmatprep.subr.mxu0 0.0
    %1943 = vmatpush2.msra.mxu0 0.0
    %1944 = vmatprep.subr.mxu0 0.0
    %1945 = vmatpush2.msra.mxu0 0.0
    %1946 = vmatprep.subr.mxu0 0.0
    %1947 = vmatpush2.msra.mxu0 0.0
    %1948 = vmatprep.subr.mxu0 0.0
    %1949 = vmatpush2.msra.mxu0 0.0
    %1950 = vmatprep.subr.mxu0 0.0
    %1951 = vmatpush2.msra.mxu0 0.0
    %1952 = vmatprep.subr.mxu0 0.0
    %1953 = vmatpush2.msra.mxu0 0.0
    %1954 = vmatprep.subr.mxu0 0.0
    %1955 = vmatpush2.msra.mxu0 0.0
    %1956 = vmatprep.subr.mxu0 0.0
    %1957 = vmatpush2.msra.mxu0 0.0
    %1958 = vmatprep.subr.mxu0 0.0
    %1959 = vmatpush2.msra.mxu0 0.0
    %1960 = vmatprep.subr.mxu0 0.0
    %1961 = vmatpush2.msra.mxu0 0.0
    %1962 = vmatprep.subr.mxu0 0.0
    %1963 = vmatpush2.msra.mxu0 0.0
    %1964 = vmatprep.subr.mxu0 0.0
    %1965 = vmatpush2.msra.mxu0 0.0
    %1966 = vmatprep.subr.mxu0 0.0
    %1967 = vmatpush2.msra.mxu0 0.0
    %1968 = vmatprep.mubr.f32.mxu0 0.0
    %1969 = vmatmul.mubr.f32.gmra.mxu0 %v1899
    %v1970 = vpop.f32.mrf.mxu0
    %v1971 = vadd.f32 0.0, %v1970
    %v1972 = vpop.f32.mrf.mxu0
    %1973 = vmatprep.mubr.f32.mxu0 0.0
    %1974 = vmatmul.mubr.f32.gmra.mxu0 %v1902
    %v1975 = vpop.f32.mrf.mxu0
    %v1976 = vadd.f32 0.0, %v1975
    %v1977 = vpop.f32.mrf.mxu0
    %1978 = vdwg.mxu0
    %v1979 = vmul.f32 %v1971, %v1151
    %v1980 = vmul.f32 %v1976, %v1156
    %v1981 = vadd.f32 %v1894, %v1979
    %v1982 = vadd.f32 %v1895, %v1980
    %v1984 = vsel %vm327, %v1981, 0
    %v1987 = vsel %vm327, %v1982, 0
    %1989 = vmatprep.subr.mxu0 0.0
    %1990 = vmatpush1.msra.mxu0 0.0
    %1991 = vmatprep.subr.mxu0 0.0
    %1992 = vmatpush1.msra.mxu0 0.0
    %1993 = vmatprep.subr.mxu0 0.0
    %1994 = vmatpush1.msra.mxu0 0.0
    %1995 = vmatprep.subr.mxu0 0.0
    %1996 = vmatpush1.msra.mxu0 0.0
    %1997 = vmatprep.subr.mxu0 0.0
    %1998 = vmatpush1.msra.mxu0 0.0
    %1999 = vmatprep.subr.mxu0 0.0
    %2000 = vmatpush1.msra.mxu0 0.0
    %2001 = vmatprep.subr.mxu0 0.0
    %2002 = vmatpush1.msra.mxu0 0.0
    %2003 = vmatprep.subr.mxu0 0.0
    %2004 = vmatpush1.msra.mxu0 0.0
    %2005 = vmatprep.subr.mxu0 0.0
    %2006 = vmatpush1.msra.mxu0 %v147
    %2007 = vmatprep.subr.mxu0 0.0
    %2008 = vmatpush1.msra.mxu0 %v146
    %2009 = vmatprep.subr.mxu0 0.0
    %2010 = vmatpush1.msra.mxu0 %v145
    %2011 = vmatprep.subr.mxu0 0.0
    %2012 = vmatpush1.msra.mxu0 %v144
    %2013 = vmatprep.subr.mxu0 0.0
    %2014 = vmatpush1.msra.mxu0 %v143
    %2015 = vmatprep.subr.mxu0 0.0
    %2016 = vmatpush1.msra.mxu0 %v142
    %2017 = vmatprep.subr.mxu0 0.0
    %2018 = vmatpush1.msra.mxu0 %v141
    %2019 = vmatprep.subr.mxu0 0.0
    %2020 = vmatpush1.msra.mxu0 %v140
    %2021 = vmatprep.subr.mxu0 0.0
    %2022 = vmatpush2.msra.mxu0 0.0
    %2023 = vmatprep.subr.mxu0 0.0
    %2024 = vmatpush2.msra.mxu0 0.0
    %2025 = vmatprep.subr.mxu0 0.0
    %2026 = vmatpush2.msra.mxu0 0.0
    %2027 = vmatprep.subr.mxu0 0.0
    %2028 = vmatpush2.msra.mxu0 0.0
    %2029 = vmatprep.subr.mxu0 0.0
    %2030 = vmatpush2.msra.mxu0 0.0
    %2031 = vmatprep.subr.mxu0 0.0
    %2032 = vmatpush2.msra.mxu0 0.0
    %2033 = vmatprep.subr.mxu0 0.0
    %2034 = vmatpush2.msra.mxu0 0.0
    %2035 = vmatprep.subr.mxu0 0.0
    %2036 = vmatpush2.msra.mxu0 0.0
    %2037 = vmatprep.subr.mxu0 0.0
    %2038 = vmatpush2.msra.mxu0 0.0
    %2039 = vmatprep.subr.mxu0 0.0
    %2040 = vmatpush2.msra.mxu0 0.0
    %2041 = vmatprep.subr.mxu0 0.0
    %2042 = vmatpush2.msra.mxu0 0.0
    %2043 = vmatprep.subr.mxu0 0.0
    %2044 = vmatpush2.msra.mxu0 0.0
    %2045 = vmatprep.subr.mxu0 0.0
    %2046 = vmatpush2.msra.mxu0 0.0
    %2047 = vmatprep.subr.mxu0 0.0
    %2048 = vmatpush2.msra.mxu0 0.0
    %2049 = vmatprep.subr.mxu0 0.0
    %2050 = vmatpush2.msra.mxu0 0.0
    %2051 = vmatprep.subr.mxu0 0.0
    %2052 = vmatpush2.msra.mxu0 0.0
    %2053 = vmatprep.mubr.f32.mxu0 0.0
    %2054 = vmatmul.mubr.f32.gmra.mxu0 %v1984
    %v2055 = vpop.f32.mrf.mxu0
    %v2056 = vadd.f32 %v1694, %v2055
    %v2057 = vpop.f32.mrf.mxu0
    %2058 = vmatprep.mubr.f32.mxu0 0.0
    %2059 = vmatmul.mubr.f32.gmra.mxu0 %v1987
    %v2060 = vpop.f32.mrf.mxu0
    %v2061 = vadd.f32 %v1694, %v2060
    %v2062 = vpop.f32.mrf.mxu0
    %2063 = vdwg.mxu0
    %v2064 = vadd.f32 %v2056, %v926
    %v2065 = vadd.f32 %v2061, %v927
    %v2066 = vsel %vm327, %v2064, 0.0
    %v2067 = vsel %vm327, %v2065, 0.0
    %v2068 = vadd.f32 %v2066, %v2067
    %v2069 = vrot.slane %v2068, 4
    %v2070 = vadd.f32 %v2068, %v2069
    %v2071 = vrot.slane %v2070, 2
    %v2072 = vadd.f32 %v2070, %v2071
    %v2073 = vrot.slane %v2072, 1
    %v2074 = vadd.f32 %v2072, %v2073
    %v2075 = vmul.f32 %v2074, 0.0625
    %vm2076 = vcmask 1040384
    %v2077 = vsel %vm2076, %v1788, %v2075
    %v2078 = vld [vmem:[#allocation5] sm:$0xff]
    %v2079 = vld [vmem:[#allocation5 + $0x8] sm:$0xff]
    %v2080 = vld [vmem:[#allocation5 + $0x10] sm:$0xff]
    %v2081 = vld [vmem:[#allocation5 + $0x18] sm:$0xff]
    %v2082 = vld [vmem:[#allocation5 + $0x20] sm:$0xff]
    %v2083 = vld [vmem:[#allocation5 + $0x28] sm:$0xff]
    %v2084 = vld [vmem:[#allocation5 + $0x30] sm:$0xff]
    %v2085 = vld [vmem:[#allocation5 + $0x38] sm:$0xff]
    %v2086 = vld [vmem:[%s19] sm:$0x1]
    %v2088 = vlaneseq
    %v2089 = vshrl.u32 %v2088, 7
    %v2090 = vsub.s32 0, %v2089
    %v2091 = vrot.slane %v2086, %v2090
    %v2094 = vsel %vm327, %v2077, 0
    %2096 = vmatprep.subr.mxu0 0.0
    %2097 = vmatpush1.msra.mxu0 0.0
    %2098 = vmatprep.subr.mxu0 0.0
    %2099 = vmatpush1.msra.mxu0 0.0
    %2100 = vmatprep.subr.mxu0 0.0
    %2101 = vmatpush1.msra.mxu0 0.0
    %2102 = vmatprep.subr.mxu0 0.0
    %2103 = vmatpush1.msra.mxu0 0.0
    %2104 = vmatprep.subr.mxu0 0.0
    %2105 = vmatpush1.msra.mxu0 0.0
    %2106 = vmatprep.subr.mxu0 0.0
    %2107 = vmatpush1.msra.mxu0 0.0
    %2108 = vmatprep.subr.mxu0 0.0
    %2109 = vmatpush1.msra.mxu0 0.0
    %2110 = vmatprep.subr.mxu0 0.0
    %2111 = vmatpush1.msra.mxu0 0.0
    %2112 = vmatprep.subr.mxu0 0.0
    %2113 = vmatpush1.msra.mxu0 %v2085
    %2114 = vmatprep.subr.mxu0 0.0
    %2115 = vmatpush1.msra.mxu0 %v2084
    %2116 = vmatprep.subr.mxu0 0.0
    %2117 = vmatpush1.msra.mxu0 %v2083
    %2118 = vmatprep.subr.mxu0 0.0
    %2119 = vmatpush1.msra.mxu0 %v2082
    %2120 = vmatprep.subr.mxu0 0.0
    %2121 = vmatpush1.msra.mxu0 %v2081
    %2122 = vmatprep.subr.mxu0 0.0
    %2123 = vmatpush1.msra.mxu0 %v2080
    %2124 = vmatprep.subr.mxu0 0.0
    %2125 = vmatpush1.msra.mxu0 %v2079
    %2126 = vmatprep.subr.mxu0 0.0
    %2127 = vmatpush1.msra.mxu0 %v2078
    %2128 = vmatprep.subr.mxu0 0.0
    %2129 = vmatpush2.msra.mxu0 0.0
    %2130 = vmatprep.subr.mxu0 0.0
    %2131 = vmatpush2.msra.mxu0 0.0
    %2132 = vmatprep.subr.mxu0 0.0
    %2133 = vmatpush2.msra.mxu0 0.0
    %2134 = vmatprep.subr.mxu0 0.0
    %2135 = vmatpush2.msra.mxu0 0.0
    %2136 = vmatprep.subr.mxu0 0.0
    %2137 = vmatpush2.msra.mxu0 0.0
    %2138 = vmatprep.subr.mxu0 0.0
    %2139 = vmatpush2.msra.mxu0 0.0
    %2140 = vmatprep.subr.mxu0 0.0
    %2141 = vmatpush2.msra.mxu0 0.0
    %2142 = vmatprep.subr.mxu0 0.0
    %2143 = vmatpush2.msra.mxu0 0.0
    %2144 = vmatprep.subr.mxu0 0.0
    %2145 = vmatpush2.msra.mxu0 0.0
    %2146 = vmatprep.subr.mxu0 0.0
    %2147 = vmatpush2.msra.mxu0 0.0
    %2148 = vmatprep.subr.mxu0 0.0
    %2149 = vmatpush2.msra.mxu0 0.0
    %2150 = vmatprep.subr.mxu0 0.0
    %2151 = vmatpush2.msra.mxu0 0.0
    %2152 = vmatprep.subr.mxu0 0.0
    %2153 = vmatpush2.msra.mxu0 0.0
    %2154 = vmatprep.subr.mxu0 0.0
    %2155 = vmatpush2.msra.mxu0 0.0
    %2156 = vmatprep.subr.mxu0 0.0
    %2157 = vmatpush2.msra.mxu0 0.0
    %2158 = vmatprep.subr.mxu0 0.0
    %2159 = vmatpush2.msra.mxu0 0.0
    %2160 = vmatprep.mubr.f32.mxu0 0.0
    %2161 = vmatmul.mubr.f32.gmra.mxu0 %v2094
    %v2162 = vpop.f32.mrf.mxu0
    %v2163 = vadd.f32 %v2091, %v2162
    %v2164 = vpop.f32.mrf.mxu0
    %2165 = vdwg.mxu0
    %vm2166 = vcmp.ge.f32.partialorder %v2163, 0.0
    %s2167 = sld [smem:[#allocation2 + $0x2]]
    %v2168 = vstv %s2167
    %v2169 = vmul.f32 %v2163, %v2168
    %v2170 = vsel %vm2166, %v2163, %v2169
    %s2171 = scalar_lea.vmem [#allocation5], 64
    %v2172 = vld [vmem:[%s2171] sm:$0xff]
    %v2173 = vld [vmem:[%s2171 + $0x8] sm:$0xff]
    %v2174 = vld [vmem:[%s2171 + $0x10] sm:$0xff]
    %v2175 = vld [vmem:[%s2171 + $0x18] sm:$0xff]
    %v2176 = vld [vmem:[%s2171 + $0x20] sm:$0xff]
    %v2177 = vld [vmem:[%s2171 + $0x28] sm:$0xff]
    %v2178 = vld [vmem:[%s2171 + $0x30] sm:$0xff]
    %v2179 = vld [vmem:[%s2171 + $0x38] sm:$0xff]
    %s2180 = scalar_lea.vmem %s19, 1
    %v2181 = vld [vmem:[%s2180] sm:$0x1]
    %v2183 = vlaneseq
    %v2184 = vshrl.u32 %v2183, 7
    %v2185 = vsub.s32 0, %v2184
    %v2186 = vrot.slane %v2181, %v2185
    %v2189 = vsel %vm327, %v2170, 0
    %2191 = vmatprep.subr.mxu0 0.0
    %2192 = vmatpush1.msra.mxu0 0.0
    %2193 = vmatprep.subr.mxu0 0.0
    %2194 = vmatpush1.msra.mxu0 0.0
    %2195 = vmatprep.subr.mxu0 0.0
    %2196 = vmatpush1.msra.mxu0 0.0
    %2197 = vmatprep.subr.mxu0 0.0
    %2198 = vmatpush1.msra.mxu0 0.0
    %2199 = vmatprep.subr.mxu0 0.0
    %2200 = vmatpush1.msra.mxu0 0.0
    %2201 = vmatprep.subr.mxu0 0.0
    %2202 = vmatpush1.msra.mxu0 0.0
    %2203 = vmatprep.subr.mxu0 0.0
    %2204 = vmatpush1.msra.mxu0 0.0
    %2205 = vmatprep.subr.mxu0 0.0
    %2206 = vmatpush1.msra.mxu0 0.0
    %2207 = vmatprep.subr.mxu0 0.0
    %2208 = vmatpush1.msra.mxu0 %v2179
    %2209 = vmatprep.subr.mxu0 0.0
    %2210 = vmatpush1.msra.mxu0 %v2178
    %2211 = vmatprep.subr.mxu0 0.0
    %2212 = vmatpush1.msra.mxu0 %v2177
    %2213 = vmatprep.subr.mxu0 0.0
    %2214 = vmatpush1.msra.mxu0 %v2176
    %2215 = vmatprep.subr.mxu0 0.0
    %2216 = vmatpush1.msra.mxu0 %v2175
    %2217 = vmatprep.subr.mxu0 0.0
    %2218 = vmatpush1.msra.mxu0 %v2174
    %2219 = vmatprep.subr.mxu0 0.0
    %2220 = vmatpush1.msra.mxu0 %v2173
    %2221 = vmatprep.subr.mxu0 0.0
    %2222 = vmatpush1.msra.mxu0 %v2172
    %2223 = vmatprep.subr.mxu0 0.0
    %2224 = vmatpush2.msra.mxu0 0.0
    %2225 = vmatprep.subr.mxu0 0.0
    %2226 = vmatpush2.msra.mxu0 0.0
    %2227 = vmatprep.subr.mxu0 0.0
    %2228 = vmatpush2.msra.mxu0 0.0
    %2229 = vmatprep.subr.mxu0 0.0
    %2230 = vmatpush2.msra.mxu0 0.0
    %2231 = vmatprep.subr.mxu0 0.0
    %2232 = vmatpush2.msra.mxu0 0.0
    %2233 = vmatprep.subr.mxu0 0.0
    %2234 = vmatpush2.msra.mxu0 0.0
    %2235 = vmatprep.subr.mxu0 0.0
    %2236 = vmatpush2.msra.mxu0 0.0
    %2237 = vmatprep.subr.mxu0 0.0
    %2238 = vmatpush2.msra.mxu0 0.0
    %2239 = vmatprep.subr.mxu0 0.0
    %2240 = vmatpush2.msra.mxu0 0.0
    %2241 = vmatprep.subr.mxu0 0.0
    %2242 = vmatpush2.msra.mxu0 0.0
    %2243 = vmatprep.subr.mxu0 0.0
    %2244 = vmatpush2.msra.mxu0 0.0
    %2245 = vmatprep.subr.mxu0 0.0
    %2246 = vmatpush2.msra.mxu0 0.0
    %2247 = vmatprep.subr.mxu0 0.0
    %2248 = vmatpush2.msra.mxu0 0.0
    %2249 = vmatprep.subr.mxu0 0.0
    %2250 = vmatpush2.msra.mxu0 0.0
    %2251 = vmatprep.subr.mxu0 0.0
    %2252 = vmatpush2.msra.mxu0 0.0
    %2253 = vmatprep.subr.mxu0 0.0
    %2254 = vmatpush2.msra.mxu0 0.0
    %2255 = vmatprep.mubr.f32.mxu0 0.0
    %2256 = vmatmul.mubr.f32.gmra.mxu0 %v2189
    %v2257 = vpop.f32.mrf.mxu0
    %v2258 = vadd.f32 %v2186, %v2257
    %v2259 = vpop.f32.mrf.mxu0
    %2260 = vdwg.mxu0
    %vm2261 = vcmp.ge.f32.partialorder %v2258, 0.0
    %s2262 = sld [smem:[#allocation2 + $0x3]]
    %v2263 = vstv %s2262
    %v2264 = vmul.f32 %v2258, %v2263
    %v2265 = vsel %vm2261, %v2258, %v2264
    %s2266 = scalar_lea.vmem [#allocation5], 128
    %v2267 = vld [vmem:[%s2266] sm:$0xff]
    %v2268 = vld [vmem:[%s2266 + $0x8] sm:$0xff]
    %v2269 = vld [vmem:[%s2266 + $0x10] sm:$0xff]
    %v2270 = vld [vmem:[%s2266 + $0x18] sm:$0xff]
    %v2271 = vld [vmem:[%s2266 + $0x20] sm:$0xff]
    %v2272 = vld [vmem:[%s2266 + $0x28] sm:$0xff]
    %v2273 = vld [vmem:[%s2266 + $0x30] sm:$0xff]
    %v2274 = vld [vmem:[%s2266 + $0x38] sm:$0xff]
    %s2275 = scalar_lea.vmem %s19, 2
    %v2276 = vld [vmem:[%s2275] sm:$0x1]
    %v2278 = vlaneseq
    %v2279 = vshrl.u32 %v2278, 7
    %v2280 = vsub.s32 0, %v2279
    %v2281 = vrot.slane %v2276, %v2280
    %v2284 = vsel %vm327, %v2265, 0
    %2286 = vmatprep.subr.mxu0 0.0
    %2287 = vmatpush1.msra.mxu0 0.0
    %2288 = vmatprep.subr.mxu0 0.0
    %2289 = vmatpush1.msra.mxu0 0.0
    %2290 = vmatprep.subr.mxu0 0.0
    %2291 = vmatpush1.msra.mxu0 0.0
    %2292 = vmatprep.subr.mxu0 0.0
    %2293 = vmatpush1.msra.mxu0 0.0
    %2294 = vmatprep.subr.mxu0 0.0
    %2295 = vmatpush1.msra.mxu0 0.0
    %2296 = vmatprep.subr.mxu0 0.0
    %2297 = vmatpush1.msra.mxu0 0.0
    %2298 = vmatprep.subr.mxu0 0.0
    %2299 = vmatpush1.msra.mxu0 0.0
    %2300 = vmatprep.subr.mxu0 0.0
    %2301 = vmatpush1.msra.mxu0 0.0
    %2302 = vmatprep.subr.mxu0 0.0
    %2303 = vmatpush1.msra.mxu0 %v2274
    %2304 = vmatprep.subr.mxu0 0.0
    %2305 = vmatpush1.msra.mxu0 %v2273
    %2306 = vmatprep.subr.mxu0 0.0
    %2307 = vmatpush1.msra.mxu0 %v2272
    %2308 = vmatprep.subr.mxu0 0.0
    %2309 = vmatpush1.msra.mxu0 %v2271
    %2310 = vmatprep.subr.mxu0 0.0
    %2311 = vmatpush1.msra.mxu0 %v2270
    %2312 = vmatprep.subr.mxu0 0.0
    %2313 = vmatpush1.msra.mxu0 %v2269
    %2314 = vmatprep.subr.mxu0 0.0
    %2315 = vmatpush1.msra.mxu0 %v2268
    %2316 = vmatprep.subr.mxu0 0.0
    %2317 = vmatpush1.msra.mxu0 %v2267
    %2318 = vmatprep.subr.mxu0 0.0
    %2319 = vmatpush2.msra.mxu0 0.0
    %2320 = vmatprep.subr.mxu0 0.0
    %2321 = vmatpush2.msra.mxu0 0.0
    %2322 = vmatprep.subr.mxu0 0.0
    %2323 = vmatpush2.msra.mxu0 0.0
    %2324 = vmatprep.subr.mxu0 0.0
    %2325 = vmatpush2.msra.mxu0 0.0
    %2326 = vmatprep.subr.mxu0 0.0
    %2327 = vmatpush2.msra.mxu0 0.0
    %2328 = vmatprep.subr.mxu0 0.0
    %2329 = vmatpush2.msra.mxu0 0.0
    %2330 = vmatprep.subr.mxu0 0.0
    %2331 = vmatpush2.msra.mxu0 0.0
    %2332 = vmatprep.subr.mxu0 0.0
    %2333 = vmatpush2.msra.mxu0 0.0
    %2334 = vmatprep.subr.mxu0 0.0
    %2335 = vmatpush2.msra.mxu0 0.0
    %2336 = vmatprep.subr.mxu0 0.0
    %2337 = vmatpush2.msra.mxu0 0.0
    %2338 = vmatprep.subr.mxu0 0.0
    %2339 = vmatpush2.msra.mxu0 0.0
    %2340 = vmatprep.subr.mxu0 0.0
    %2341 = vmatpush2.msra.mxu0 0.0
    %2342 = vmatprep.subr.mxu0 0.0
    %2343 = vmatpush2.msra.mxu0 0.0
    %2344 = vmatprep.subr.mxu0 0.0
    %2345 = vmatpush2.msra.mxu0 0.0
    %2346 = vmatprep.subr.mxu0 0.0
    %2347 = vmatpush2.msra.mxu0 0.0
    %2348 = vmatprep.subr.mxu0 0.0
    %2349 = vmatpush2.msra.mxu0 0.0
    %2350 = vmatprep.mubr.f32.mxu0 0.0
    %2351 = vmatmul.mubr.f32.gmra.mxu0 %v2284
    %v2352 = vpop.f32.mrf.mxu0
    %v2353 = vadd.f32 %v2281, %v2352
    %v2354 = vpop.f32.mrf.mxu0
    %2355 = vdwg.mxu0
    %vm2356 = vcmp.ge.f32.partialorder %v2353, 0.0
    %s2357 = sld [smem:[#allocation2 + $0x4]]
    %v2358 = vstv %s2357
    %v2359 = vmul.f32 %v2353, %v2358
    %v2360 = vsel %vm2356, %v2353, %v2359
    %s2361 = scalar_lea.vmem [#allocation5], 192
    %v2362 = vld [vmem:[%s2361] sm:$0xff]
    %v2363 = vld [vmem:[%s2361 + $0x8] sm:$0xff]
    %v2364 = vld [vmem:[%s2361 + $0x10] sm:$0xff]
    %v2365 = vld [vmem:[%s2361 + $0x18] sm:$0xff]
    %v2366 = vld [vmem:[%s2361 + $0x20] sm:$0xff]
    %v2367 = vld [vmem:[%s2361 + $0x28] sm:$0xff]
    %v2368 = vld [vmem:[%s2361 + $0x30] sm:$0xff]
    %v2369 = vld [vmem:[%s2361 + $0x38] sm:$0xff]
    %s2370 = scalar_lea.vmem %s19, 3
    %v2371 = vld [vmem:[%s2370] sm:$0x1]
    %v2373 = vlaneseq
    %v2374 = vshrl.u32 %v2373, 7
    %v2375 = vsub.s32 0, %v2374
    %v2376 = vrot.slane %v2371, %v2375
    %v2379 = vsel %vm327, %v2360, 0
    %2381 = vmatprep.subr.mxu0 0.0
    %2382 = vmatpush1.msra.mxu0 0.0
    %2383 = vmatprep.subr.mxu0 0.0
    %2384 = vmatpush1.msra.mxu0 0.0
    %2385 = vmatprep.subr.mxu0 0.0
    %2386 = vmatpush1.msra.mxu0 0.0
    %2387 = vmatprep.subr.mxu0 0.0
    %2388 = vmatpush1.msra.mxu0 0.0
    %2389 = vmatprep.subr.mxu0 0.0
    %2390 = vmatpush1.msra.mxu0 0.0
    %2391 = vmatprep.subr.mxu0 0.0
    %2392 = vmatpush1.msra.mxu0 0.0
    %2393 = vmatprep.subr.mxu0 0.0
    %2394 = vmatpush1.msra.mxu0 0.0
    %2395 = vmatprep.subr.mxu0 0.0
    %2396 = vmatpush1.msra.mxu0 0.0
    %2397 = vmatprep.subr.mxu0 0.0
    %2398 = vmatpush1.msra.mxu0 %v2369
    %2399 = vmatprep.subr.mxu0 0.0
    %2400 = vmatpush1.msra.mxu0 %v2368
    %2401 = vmatprep.subr.mxu0 0.0
    %2402 = vmatpush1.msra.mxu0 %v2367
    %2403 = vmatprep.subr.mxu0 0.0
    %2404 = vmatpush1.msra.mxu0 %v2366
    %2405 = vmatprep.subr.mxu0 0.0
    %2406 = vmatpush1.msra.mxu0 %v2365
    %2407 = vmatprep.subr.mxu0 0.0
    %2408 = vmatpush1.msra.mxu0 %v2364
    %2409 = vmatprep.subr.mxu0 0.0
    %2410 = vmatpush1.msra.mxu0 %v2363
    %2411 = vmatprep.subr.mxu0 0.0
    %2412 = vmatpush1.msra.mxu0 %v2362
    %2413 = vmatprep.subr.mxu0 0.0
    %2414 = vmatpush2.msra.mxu0 0.0
    %2415 = vmatprep.subr.mxu0 0.0
    %2416 = vmatpush2.msra.mxu0 0.0
    %2417 = vmatprep.subr.mxu0 0.0
    %2418 = vmatpush2.msra.mxu0 0.0
    %2419 = vmatprep.subr.mxu0 0.0
    %2420 = vmatpush2.msra.mxu0 0.0
    %2421 = vmatprep.subr.mxu0 0.0
    %2422 = vmatpush2.msra.mxu0 0.0
    %2423 = vmatprep.subr.mxu0 0.0
    %2424 = vmatpush2.msra.mxu0 0.0
    %2425 = vmatprep.subr.mxu0 0.0
    %2426 = vmatpush2.msra.mxu0 0.0
    %2427 = vmatprep.subr.mxu0 0.0
    %2428 = vmatpush2.msra.mxu0 0.0
    %2429 = vmatprep.subr.mxu0 0.0
    %2430 = vmatpush2.msra.mxu0 0.0
    %2431 = vmatprep.subr.mxu0 0.0
    %2432 = vmatpush2.msra.mxu0 0.0
    %2433 = vmatprep.subr.mxu0 0.0
    %2434 = vmatpush2.msra.mxu0 0.0
    %2435 = vmatprep.subr.mxu0 0.0
    %2436 = vmatpush2.msra.mxu0 0.0
    %2437 = vmatprep.subr.mxu0 0.0
    %2438 = vmatpush2.msra.mxu0 0.0
    %2439 = vmatprep.subr.mxu0 0.0
    %2440 = vmatpush2.msra.mxu0 0.0
    %2441 = vmatprep.subr.mxu0 0.0
    %2442 = vmatpush2.msra.mxu0 0.0
    %2443 = vmatprep.subr.mxu0 0.0
    %2444 = vmatpush2.msra.mxu0 0.0
    %2445 = vmatprep.mubr.f32.mxu0 0.0
    %2446 = vmatmul.mubr.f32.gmra.mxu0 %v2379
    %v2447 = vpop.f32.mrf.mxu0
    %v2448 = vadd.f32 %v2376, %v2447
    %v2449 = vpop.f32.mrf.mxu0
    %2450 = vdwg.mxu0
    %vm2451 = vcmp.ge.f32.partialorder %v2448, 0.0
    %s2452 = sld [smem:[#allocation2 + $0x5]]
    %v2453 = vstv %s2452
    %v2454 = vmul.f32 %v2448, %v2453
    %v2455 = vsel %vm2451, %v2448, %v2454
    %s2456 = scalar_lea.vmem [#allocation5], 256
    %v2457 = vld [vmem:[%s2456] sm:$0xff]
    %v2458 = vld [vmem:[%s2456 + $0x8] sm:$0xff]
    %v2459 = vld [vmem:[%s2456 + $0x10] sm:$0xff]
    %v2460 = vld [vmem:[%s2456 + $0x18] sm:$0xff]
    %v2461 = vld [vmem:[%s2456 + $0x20] sm:$0xff]
    %v2462 = vld [vmem:[%s2456 + $0x28] sm:$0xff]
    %v2463 = vld [vmem:[%s2456 + $0x30] sm:$0xff]
    %v2464 = vld [vmem:[%s2456 + $0x38] sm:$0xff]
    %s2465 = scalar_lea.vmem %s19, 4
    %v2466 = vld [vmem:[%s2465] sm:$0x1]
    %v2468 = vlaneseq
    %v2469 = vshrl.u32 %v2468, 7
    %v2470 = vsub.s32 0, %v2469
    %v2471 = vrot.slane %v2466, %v2470
    %v2474 = vsel %vm327, %v2455, 0
    %2476 = vmatprep.subr.mxu0 0.0
    %2477 = vmatpush1.msra.mxu0 0.0
    %2478 = vmatprep.subr.mxu0 0.0
    %2479 = vmatpush1.msra.mxu0 0.0
    %2480 = vmatprep.subr.mxu0 0.0
    %2481 = vmatpush1.msra.mxu0 0.0
    %2482 = vmatprep.subr.mxu0 0.0
    %2483 = vmatpush1.msra.mxu0 0.0
    %2484 = vmatprep.subr.mxu0 0.0
    %2485 = vmatpush1.msra.mxu0 0.0
    %2486 = vmatprep.subr.mxu0 0.0
    %2487 = vmatpush1.msra.mxu0 0.0
    %2488 = vmatprep.subr.mxu0 0.0
    %2489 = vmatpush1.msra.mxu0 0.0
    %2490 = vmatprep.subr.mxu0 0.0
    %2491 = vmatpush1.msra.mxu0 0.0
    %2492 = vmatprep.subr.mxu0 0.0
    %2493 = vmatpush1.msra.mxu0 %v2464
    %2494 = vmatprep.subr.mxu0 0.0
    %2495 = vmatpush1.msra.mxu0 %v2463
    %2496 = vmatprep.subr.mxu0 0.0
    %2497 = vmatpush1.msra.mxu0 %v2462
    %2498 = vmatprep.subr.mxu0 0.0
    %2499 = vmatpush1.msra.mxu0 %v2461
    %2500 = vmatprep.subr.mxu0 0.0
    %2501 = vmatpush1.msra.mxu0 %v2460
    %2502 = vmatprep.subr.mxu0 0.0
    %2503 = vmatpush1.msra.mxu0 %v2459
    %2504 = vmatprep.subr.mxu0 0.0
    %2505 = vmatpush1.msra.mxu0 %v2458
    %2506 = vmatprep.subr.mxu0 0.0
    %2507 = vmatpush1.msra.mxu0 %v2457
    %2508 = vmatprep.subr.mxu0 0.0
    %2509 = vmatpush2.msra.mxu0 0.0
    %2510 = vmatprep.subr.mxu0 0.0
    %2511 = vmatpush2.msra.mxu0 0.0
    %2512 = vmatprep.subr.mxu0 0.0
    %2513 = vmatpush2.msra.mxu0 0.0
    %2514 = vmatprep.subr.mxu0 0.0
    %2515 = vmatpush2.msra.mxu0 0.0
    %2516 = vmatprep.subr.mxu0 0.0
    %2517 = vmatpush2.msra.mxu0 0.0
    %2518 = vmatprep.subr.mxu0 0.0
    %2519 = vmatpush2.msra.mxu0 0.0
    %2520 = vmatprep.subr.mxu0 0.0
    %2521 = vmatpush2.msra.mxu0 0.0
    %2522 = vmatprep.subr.mxu0 0.0
    %2523 = vmatpush2.msra.mxu0 0.0
    %2524 = vmatprep.subr.mxu0 0.0
    %2525 = vmatpush2.msra.mxu0 0.0
    %2526 = vmatprep.subr.mxu0 0.0
    %2527 = vmatpush2.msra.mxu0 0.0
    %2528 = vmatprep.subr.mxu0 0.0
    %2529 = vmatpush2.msra.mxu0 0.0
    %2530 = vmatprep.subr.mxu0 0.0
    %2531 = vmatpush2.msra.mxu0 0.0
    %2532 = vmatprep.subr.mxu0 0.0
    %2533 = vmatpush2.msra.mxu0 0.0
    %2534 = vmatprep.subr.mxu0 0.0
    %2535 = vmatpush2.msra.mxu0 0.0
    %2536 = vmatprep.subr.mxu0 0.0
    %2537 = vmatpush2.msra.mxu0 0.0
    %2538 = vmatprep.subr.mxu0 0.0
    %2539 = vmatpush2.msra.mxu0 0.0
    %2540 = vmatprep.mubr.f32.mxu0 0.0
    %2541 = vmatmul.mubr.f32.gmra.mxu0 %v2474
    %v2542 = vpop.f32.mrf.mxu0
    %v2543 = vadd.f32 %v2471, %v2542
    %v2544 = vpop.f32.mrf.mxu0
    %2545 = vdwg.mxu0
    %vm2546 = vcmp.ge.f32.partialorder %v2543, 0.0
    %s2547 = sld [smem:[#allocation2 + $0x6]]
    %v2548 = vstv %s2547
    %v2549 = vmul.f32 %v2543, %v2548
    %v2550 = vsel %vm2546, %v2543, %v2549
    %s2551 = scalar_lea.vmem [#allocation5], 320
    %v2552 = vld [vmem:[%s2551] sm:$0xff]
    %v2553 = vld [vmem:[%s2551 + $0x8] sm:$0xff]
    %v2554 = vld [vmem:[%s2551 + $0x10] sm:$0xff]
    %v2555 = vld [vmem:[%s2551 + $0x18] sm:$0xff]
    %v2556 = vld [vmem:[%s2551 + $0x20] sm:$0xff]
    %v2557 = vld [vmem:[%s2551 + $0x28] sm:$0xff]
    %v2558 = vld [vmem:[%s2551 + $0x30] sm:$0xff]
    %v2559 = vld [vmem:[%s2551 + $0x38] sm:$0xff]
    %s2560 = scalar_lea.vmem %s19, 5
    %v2561 = vld [vmem:[%s2560] sm:$0x1]
    %v2563 = vlaneseq
    %v2564 = vshrl.u32 %v2563, 7
    %v2565 = vsub.s32 0, %v2564
    %v2566 = vrot.slane %v2561, %v2565
    %v2569 = vsel %vm327, %v2550, 0
    %2571 = vmatprep.subr.mxu0 0.0
    %2572 = vmatpush1.msra.mxu0 0.0
    %2573 = vmatprep.subr.mxu0 0.0
    %2574 = vmatpush1.msra.mxu0 0.0
    %2575 = vmatprep.subr.mxu0 0.0
    %2576 = vmatpush1.msra.mxu0 0.0
    %2577 = vmatprep.subr.mxu0 0.0
    %2578 = vmatpush1.msra.mxu0 0.0
    %2579 = vmatprep.subr.mxu0 0.0
    %2580 = vmatpush1.msra.mxu0 0.0
    %2581 = vmatprep.subr.mxu0 0.0
    %2582 = vmatpush1.msra.mxu0 0.0
    %2583 = vmatprep.subr.mxu0 0.0
    %2584 = vmatpush1.msra.mxu0 0.0
    %2585 = vmatprep.subr.mxu0 0.0
    %2586 = vmatpush1.msra.mxu0 0.0
    %2587 = vmatprep.subr.mxu0 0.0
    %2588 = vmatpush1.msra.mxu0 %v2559
    %2589 = vmatprep.subr.mxu0 0.0
    %2590 = vmatpush1.msra.mxu0 %v2558
    %2591 = vmatprep.subr.mxu0 0.0
    %2592 = vmatpush1.msra.mxu0 %v2557
    %2593 = vmatprep.subr.mxu0 0.0
    %2594 = vmatpush1.msra.mxu0 %v2556
    %2595 = vmatprep.subr.mxu0 0.0
    %2596 = vmatpush1.msra.mxu0 %v2555
    %2597 = vmatprep.subr.mxu0 0.0
    %2598 = vmatpush1.msra.mxu0 %v2554
    %2599 = vmatprep.subr.mxu0 0.0
    %2600 = vmatpush1.msra.mxu0 %v2553
    %2601 = vmatprep.subr.mxu0 0.0
    %2602 = vmatpush1.msra.mxu0 %v2552
    %2603 = vmatprep.subr.mxu0 0.0
    %2604 = vmatpush2.msra.mxu0 0.0
    %2605 = vmatprep.subr.mxu0 0.0
    %2606 = vmatpush2.msra.mxu0 0.0
    %2607 = vmatprep.subr.mxu0 0.0
    %2608 = vmatpush2.msra.mxu0 0.0
    %2609 = vmatprep.subr.mxu0 0.0
    %2610 = vmatpush2.msra.mxu0 0.0
    %2611 = vmatprep.subr.mxu0 0.0
    %2612 = vmatpush2.msra.mxu0 0.0
    %2613 = vmatprep.subr.mxu0 0.0
    %2614 = vmatpush2.msra.mxu0 0.0
    %2615 = vmatprep.subr.mxu0 0.0
    %2616 = vmatpush2.msra.mxu0 0.0
    %2617 = vmatprep.subr.mxu0 0.0
    %2618 = vmatpush2.msra.mxu0 0.0
    %2619 = vmatprep.subr.mxu0 0.0
    %2620 = vmatpush2.msra.mxu0 0.0
    %2621 = vmatprep.subr.mxu0 0.0
    %2622 = vmatpush2.msra.mxu0 0.0
    %2623 = vmatprep.subr.mxu0 0.0
    %2624 = vmatpush2.msra.mxu0 0.0
    %2625 = vmatprep.subr.mxu0 0.0
    %2626 = vmatpush2.msra.mxu0 0.0
    %2627 = vmatprep.subr.mxu0 0.0
    %2628 = vmatpush2.msra.mxu0 0.0
    %2629 = vmatprep.subr.mxu0 0.0
    %2630 = vmatpush2.msra.mxu0 0.0
    %2631 = vmatprep.subr.mxu0 0.0
    %2632 = vmatpush2.msra.mxu0 0.0
    %2633 = vmatprep.subr.mxu0 0.0
    %2634 = vmatpush2.msra.mxu0 0.0
    %2635 = vmatprep.mubr.f32.mxu0 0.0
    %2636 = vmatmul.mubr.f32.gmra.mxu0 %v2569
    %v2637 = vpop.f32.mrf.mxu0
    %v2638 = vadd.f32 %v2566, %v2637
    %v2639 = vpop.f32.mrf.mxu0
    %2640 = vdwg.mxu0
    %vm2641 = vcmp.ge.f32.partialorder %v2638, 0.0
    %s2642 = sld [smem:[#allocation2 + $0x7]]
    %v2643 = vstv %s2642
    %v2644 = vmul.f32 %v2638, %v2643
    %v2645 = vsel %vm2641, %v2638, %v2644
    %s2646 = scalar_lea.vmem [#allocation5], 384
    %v2647 = vld [vmem:[%s2646] sm:$0xff]
    %v2648 = vld [vmem:[%s2646 + $0x8] sm:$0xff]
    %v2649 = vld [vmem:[%s2646 + $0x10] sm:$0xff]
    %v2650 = vld [vmem:[%s2646 + $0x18] sm:$0xff]
    %v2651 = vld [vmem:[%s2646 + $0x20] sm:$0xff]
    %v2652 = vld [vmem:[%s2646 + $0x28] sm:$0xff]
    %v2653 = vld [vmem:[%s2646 + $0x30] sm:$0xff]
    %v2654 = vld [vmem:[%s2646 + $0x38] sm:$0xff]
    %s2655 = scalar_lea.vmem %s19, 6
    %v2656 = vld [vmem:[%s2655] sm:$0x1]
    %v2658 = vlaneseq
    %v2659 = vshrl.u32 %v2658, 7
    %v2660 = vsub.s32 0, %v2659
    %v2661 = vrot.slane %v2656, %v2660
    %v2664 = vsel %vm327, %v2645, 0
    %2666 = vmatprep.subr.mxu0 0.0
    %2667 = vmatpush1.msra.mxu0 0.0
    %2668 = vmatprep.subr.mxu0 0.0
    %2669 = vmatpush1.msra.mxu0 0.0
    %2670 = vmatprep.subr.mxu0 0.0
    %2671 = vmatpush1.msra.mxu0 0.0
    %2672 = vmatprep.subr.mxu0 0.0
    %2673 = vmatpush1.msra.mxu0 0.0
    %2674 = vmatprep.subr.mxu0 0.0
    %2675 = vmatpush1.msra.mxu0 0.0
    %2676 = vmatprep.subr.mxu0 0.0
    %2677 = vmatpush1.msra.mxu0 0.0
    %2678 = vmatprep.subr.mxu0 0.0
    %2679 = vmatpush1.msra.mxu0 0.0
    %2680 = vmatprep.subr.mxu0 0.0
    %2681 = vmatpush1.msra.mxu0 0.0
    %2682 = vmatprep.subr.mxu0 0.0
    %2683 = vmatpush1.msra.mxu0 %v2654
    %2684 = vmatprep.subr.mxu0 0.0
    %2685 = vmatpush1.msra.mxu0 %v2653
    %2686 = vmatprep.subr.mxu0 0.0
    %2687 = vmatpush1.msra.mxu0 %v2652
    %2688 = vmatprep.subr.mxu0 0.0
    %2689 = vmatpush1.msra.mxu0 %v2651
    %2690 = vmatprep.subr.mxu0 0.0
    %2691 = vmatpush1.msra.mxu0 %v2650
    %2692 = vmatprep.subr.mxu0 0.0
    %2693 = vmatpush1.msra.mxu0 %v2649
    %2694 = vmatprep.subr.mxu0 0.0
    %2695 = vmatpush1.msra.mxu0 %v2648
    %2696 = vmatprep.subr.mxu0 0.0
    %2697 = vmatpush1.msra.mxu0 %v2647
    %2698 = vmatprep.subr.mxu0 0.0
    %2699 = vmatpush2.msra.mxu0 0.0
    %2700 = vmatprep.subr.mxu0 0.0
    %2701 = vmatpush2.msra.mxu0 0.0
    %2702 = vmatprep.subr.mxu0 0.0
    %2703 = vmatpush2.msra.mxu0 0.0
    %2704 = vmatprep.subr.mxu0 0.0
    %2705 = vmatpush2.msra.mxu0 0.0
    %2706 = vmatprep.subr.mxu0 0.0
    %2707 = vmatpush2.msra.mxu0 0.0
    %2708 = vmatprep.subr.mxu0 0.0
    %2709 = vmatpush2.msra.mxu0 0.0
    %2710 = vmatprep.subr.mxu0 0.0
    %2711 = vmatpush2.msra.mxu0 0.0
    %2712 = vmatprep.subr.mxu0 0.0
    %2713 = vmatpush2.msra.mxu0 0.0
    %2714 = vmatprep.subr.mxu0 0.0
    %2715 = vmatpush2.msra.mxu0 0.0
    %2716 = vmatprep.subr.mxu0 0.0
    %2717 = vmatpush2.msra.mxu0 0.0
    %2718 = vmatprep.subr.mxu0 0.0
    %2719 = vmatpush2.msra.mxu0 0.0
    %2720 = vmatprep.subr.mxu0 0.0
    %2721 = vmatpush2.msra.mxu0 0.0
    %2722 = vmatprep.subr.mxu0 0.0
    %2723 = vmatpush2.msra.mxu0 0.0
    %2724 = vmatprep.subr.mxu0 0.0
    %2725 = vmatpush2.msra.mxu0 0.0
    %2726 = vmatprep.subr.mxu0 0.0
    %2727 = vmatpush2.msra.mxu0 0.0
    %2728 = vmatprep.subr.mxu0 0.0
    %2729 = vmatpush2.msra.mxu0 0.0
    %2730 = vmatprep.mubr.f32.mxu0 0.0
    %2731 = vmatmul.mubr.f32.gmra.mxu0 %v2664
    %v2732 = vpop.f32.mrf.mxu0
    %v2733 = vadd.f32 %v2661, %v2732
    %v2734 = vpop.f32.mrf.mxu0
    %2735 = vdwg.mxu0
    %vm2736 = vcmask 1024
    %2737 = vst.msk [vmem:[%s20] sm:$0x3] %vm2736, %v2733
    // Predicated region
    $region90: #{tpu_custom_call.1} parent=1 // pred_check
      _
    $region91: #{tpu_custom_call.1} parent=1 // pred_check_branch
      %2739 = sbr.rel (0) target = $region93
    $region92: #{tpu_custom_call.1} parent=1 // pred_region
      _
    $region93: #{tpu_custom_call.1} parent=1 // pred_fallthru
      _
    // Predicated region
    $region94: #{tpu_custom_call.1} parent=1 // pred_check
      _
    $region95: #{tpu_custom_call.1} parent=1 // pred_check_branch
      %2741 = sbr.rel (0) target = $region97
    $region96: #{tpu_custom_call.1} parent=1 // pred_region
      _
    $region97: #{tpu_custom_call.1} parent=1 // pred_fallthru
      _
    %2742 = vsyncpa [#allocation3], 1
    %2743 = vsyncpa [#allocation4], 1

</llo_original>
